<compile_context>
chip_gen: v5e
topology: v5e:2x2
jax: 0.10.0
libtpu: 0.0.40
codegen_flags: <defaults>
</compile_context>

<pallas_src>
import functools

import jax
import jax.numpy as jnp
from jax.experimental import pallas as pl
from jax.experimental.pallas import tpu as pltpu

_VMEM_LIMIT = 32 * 1024 * 1024


# =============================================================================
# In-kernel helpers shared by all conv-style kernels (flat NHWC layout).
# =============================================================================
def _zero_halo(bufs, W, HW):
    """Zero only the top / bottom halo rows; the interior is always rewritten."""
    for buf in bufs:
        c = buf.shape[-1]
        z = jnp.zeros((W, c), buf.dtype)
        buf[0:W, :] = z
        buf[W + HW:2 * W + HW, :] = z


def _store_shifted(bufs, val, m0, m2, off, W, HW):
    """Store a (HW, C) f32 activation into the three column-shifted buffers.

    bufs[1] is the plain zero-row-padded image; bufs[0] / bufs[2] hold the same
    image shifted by -1 / +1 flattened rows with the wrap-around column masked
    to zero, so later every conv tap reads a fully aligned (HW, K) window.
    """
    p0, p1, p2 = bufs
    c = val.shape[-1]
    zrow = jnp.zeros((1, c), jnp.float32)
    v0 = jnp.concatenate([zrow, (val * m0)[0:HW - 1, :]], axis=0)
    v2 = jnp.concatenate([(val * m2)[1:HW, :], zrow], axis=0)
    p1[W:W + HW, off:off + c] = val.astype(p1.dtype)
    p0[W:W + HW, off:off + c] = v0.astype(p0.dtype)
    p2[W:W + HW, off:off + c] = v2.astype(p2.dtype)


def _conv9(bufs, wsel, K, cout, W, HW):
    """3x3 conv as 9 aligned (HW,K)x(K,cout) bf16 MXU matmuls, f32 accumulate."""
    acc = jnp.zeros((HW, cout), jnp.float32)
    for t in range(9):
        dy, dx = t // 3, t % 3
        lhs = bufs[dx][dy * W:dy * W + HW, 0:K]
        acc = acc + jnp.dot(lhs, wsel(t), preferred_element_type=jnp.float32)
    return acc


def make_shift_masks(H, W):
    """(HW, 2) f32: col 0 zeroes the last image column, col 1 the first."""
    col = jnp.arange(H * W, dtype=jnp.int32) % W
    m0 = (col != (W - 1)).astype(jnp.float32)
    m2 = (col != 0).astype(jnp.float32)
    return jnp.stack([m0, m2], axis=1)


# =============================================================================
# Fused chain of all RRDB blocks + AffineModulate.  grid = (B, num_block):
# the feature map is carried in the VMEM concat buffers across blocks and the
# next block's weight pack is prefetched by the BlockSpec pipeline.
# =============================================================================
def _rrdb_chain_kernel(x_ref, w_ref, b_ref, gb_ref, m_ref, o_ref,
                       p0, p1, p2, xs_ref, *, H, W, nf, ngc):
    HW = H * W
    bufs = (p0, p1, p2)
    j = pl.program_id(1)
    m0 = m_ref[:, 0:1]
    m2 = m_ref[:, 1:2]

    @pl.when(j == 0)
    def _():
        _zero_halo(bufs, W, HW)
        _store_shifted(bufs, x_ref[0].astype(jnp.float32), m0, m2, 0, W, HW)

    # Save the block input for the outer RRDB residual.
    xs_ref[...] = p1[W:W + HW, 0:nf]

    for r in range(3):                     # rdb1 / rdb2 / rdb3
        for k in range(5):                 # conv1 .. conv5
            K = nf + k * ngc               # true K for this conv
            cout = nf if k == 4 else ngc   # true Cout for this conv
            ci = r * 5 + k
            acc = _conv9(
                bufs,
                lambda t, ci=ci, K=K, cout=cout:
                    w_ref[0, ci * 9 + t, 0:K, 0:cout],
                K, cout, W, HW)
            acc = acc + b_ref[0, ci, :, 0:cout]
            if k < 4:
                act = jnp.where(acc >= 0.0, acc, 0.2 * acc)        # lrelu
                _store_shifted(bufs, act, m0, m2, nf + k * ngc, W, HW)
            else:
                # x5 * 0.2 + x  (RDB residual) -> next RDB's input (slot 0).
                x_cur = p1[W:W + HW, 0:nf].astype(jnp.float32)
                _store_shifted(bufs, acc * 0.2 + x_cur, m0, m2, 0, W, HW)

    out = (p1[W:W + HW, 0:nf].astype(jnp.float32) * 0.2
           + xs_ref[...].astype(jnp.float32))                      # RRDB resid
    gam = gb_ref[0, 0, :, 0:nf]
    bet = gb_ref[0, 0, :, nf:2 * nf]
    mod = (1.0 + gam) * out + bet                                  # AffineMod

    # Feed modulated features back as the next block's input (slot 0).
    _store_shifted(bufs, mod, m0, m2, 0, W, HW)

    @pl.when(j == pl.num_programs(1) - 1)
    def _():
        o_ref[0] = mod.astype(o_ref.dtype)


def rrdb_chain(x, wpack, bpack, gb, mask, H, W, nf, ngc):
    B, HW, _ = x.shape
    nb, nconv, Ktot, _ = wpack.shape
    gb4 = gb.reshape(nb, B, 1, 2 * nf)
    return pl.pallas_call(
        functools.partial(_rrdb_chain_kernel, H=H, W=W, nf=nf, ngc=ngc),
        out_shape=jax.ShapeDtypeStruct((B, HW, nf), jnp.bfloat16),
        grid=(B, nb),
        in_specs=[
            pl.BlockSpec((1, HW, nf), lambda b, j: (b, 0, 0)),
            pl.BlockSpec((1, nconv, Ktot, nf), lambda b, j: (j, 0, 0, 0)),
            pl.BlockSpec((1, 15, 1, nf), lambda b, j: (j, 0, 0, 0)),
            pl.BlockSpec((1, 1, 1, 2 * nf), lambda b, j: (j, b, 0, 0)),
            pl.BlockSpec((HW, 2), lambda b, j: (0, 0)),
        ],
        out_specs=pl.BlockSpec((1, HW, nf), lambda b, j: (b, 0, 0)),
        scratch_shapes=[pltpu.VMEM(((H + 2) * W, Ktot), jnp.bfloat16)
                        for _ in range(3)]
                       + [pltpu.VMEM((HW, nf), jnp.bfloat16)],
        compiler_params=pltpu.CompilerParams(
            dimension_semantics=("parallel", "arbitrary"),
            vmem_limit_bytes=_VMEM_LIMIT),
    )(x, wpack, bpack, gb4, mask)


# =============================================================================
# 3x3 conv (stride 1, pad 1) + bias + optional activation + optional residual.
# =============================================================================
def _conv3x3_kernel(*refs, H, W, act, has_res):
    if has_res:
        x_ref, w_ref, b_ref, m_ref, res_ref, o_ref, p0, p1, p2 = refs
    else:
        x_ref, w_ref, b_ref, m_ref, o_ref, p0, p1, p2 = refs
        res_ref = None
    HW = H * W
    bufs = (p0, p1, p2)
    Cin = x_ref.shape[-1]
    Cout = w_ref.shape[-1]
    m0 = m_ref[:, 0:1]
    m2 = m_ref[:, 1:2]

    _zero_halo(bufs, W, HW)
    _store_shifted(bufs, x_ref[0].astype(jnp.float32), m0, m2, 0, W, HW)

    acc = _conv9(bufs, lambda t: w_ref[t], Cin, Cout, W, HW) + b_ref[...]
    if act == "lrelu":
        acc = jnp.where(acc >= 0.0, acc, 0.2 * acc)
    elif act == "relu":
        acc = jnp.maximum(acc, 0.0)
    if has_res:
        acc = acc + res_ref[0].astype(jnp.float32)
    o_ref[0] = acc.astype(o_ref.dtype)


def conv3x3(x, w, b, mask, H, W, act="none", res=None):
    """x: (B,HW,Cin) bf16; w: (9,Cin,Cout) bf16; b: (1,Cout) f32 -> bf16 out."""
    B, HW, Cin = x.shape
    Cout = w.shape[-1]
    inputs = [x, w, b, mask]
    in_specs = [
        pl.BlockSpec((1, HW, Cin), lambda bi: (bi, 0, 0)),
        pl.BlockSpec((9, Cin, Cout), lambda bi: (0, 0, 0)),
        pl.BlockSpec((1, Cout), lambda bi: (0, 0)),
        pl.BlockSpec((HW, 2), lambda bi: (0, 0)),
    ]
    if res is not None:
        inputs.append(res)
        in_specs.append(pl.BlockSpec((1, HW, Cout), lambda bi: (bi, 0, 0)))
    return pl.pallas_call(
        functools.partial(_conv3x3_kernel, H=H, W=W, act=act,
                          has_res=res is not None),
        out_shape=jax.ShapeDtypeStruct((B, HW, Cout), jnp.bfloat16),
        grid=(B,),
        in_specs=in_specs,
        out_specs=pl.BlockSpec((1, HW, Cout), lambda bi: (bi, 0, 0)),
        scratch_shapes=[pltpu.VMEM(((H + 2) * W, Cin), jnp.bfloat16)
                        for _ in range(3)],
        compiler_params=pltpu.CompilerParams(
            dimension_semantics=("parallel",),
            vmem_limit_bytes=_VMEM_LIMIT),
    )(*inputs)


# =============================================================================
# Fused 3x3 conv + FReLU:  y = conv(x);  out = max(y, dwconv3x3(y) + fb).
# TODO(synk): FReLU's BatchNorm is assumed folded into fw / fb.
# =============================================================================
def _conv_frelu_kernel(x_ref, w_ref, b_ref, fw_ref, fb_ref, m_ref, o_ref,
                       x0b, x1b, x2b, y0b, y1b, y2b, *, H, W):
    HW = H * W
    xbufs = (x0b, x1b, x2b)
    ybufs = (y0b, y1b, y2b)
    Cin = x_ref.shape[-1]
    Cout = w_ref.shape[-1]
    m0 = m_ref[:, 0:1]
    m2 = m_ref[:, 1:2]

    _zero_halo(xbufs, W, HW)
    _store_shifted(xbufs, x_ref[0].astype(jnp.float32), m0, m2, 0, W, HW)
    y = _conv9(xbufs, lambda t: w_ref[t], Cin, Cout, W, HW) + b_ref[...]

    _zero_halo(ybufs, W, HW)
    _store_shifted(ybufs, y, m0, m2, 0, W, HW)
    dw = jnp.zeros((HW, Cout), jnp.float32)
    for t in range(9):
        dy, dx = t // 3, t % 3
        dw = dw + (ybufs[dx][dy * W:dy * W + HW, :].astype(jnp.float32)
                   * fw_ref[t])
    dw = dw + fb_ref[...]
    o_ref[0] = jnp.maximum(y, dw).astype(o_ref.dtype)


def conv3x3_frelu(x, w, b, fw, fb, mask, H, W):
    B, HW, Cin = x.shape
    Cout = w.shape[-1]
    return pl.pallas_call(
        functools.partial(_conv_frelu_kernel, H=H, W=W),
        out_shape=jax.ShapeDtypeStruct((B, HW, Cout), jnp.bfloat16),
        grid=(B,),
        in_specs=[
            pl.BlockSpec((1, HW, Cin), lambda bi: (bi, 0, 0)),
            pl.BlockSpec((9, Cin, Cout), lambda bi: (0, 0, 0)),
            pl.BlockSpec((1, Cout), lambda bi: (0, 0)),
            pl.BlockSpec((9, 1, Cout), lambda bi: (0, 0, 0)),
            pl.BlockSpec((1, Cout), lambda bi: (0, 0)),
            pl.BlockSpec((HW, 2), lambda bi: (0, 0)),
        ],
        out_specs=pl.BlockSpec((1, HW, Cout), lambda bi: (bi, 0, 0)),
        scratch_shapes=[pltpu.VMEM(((H + 2) * W, Cin), jnp.bfloat16)
                        for _ in range(3)]
                       + [pltpu.VMEM(((H + 2) * W, Cout), jnp.bfloat16)
                          for _ in range(3)],
        compiler_params=pltpu.CompilerParams(
            dimension_semantics=("parallel",),
            vmem_limit_bytes=_VMEM_LIMIT),
    )(x, w, b, fw, fb, mask)


# =============================================================================
# DE-net residual block (conv-relu-conv + identity add), fully fused.
# =============================================================================
def _resblock_kernel(x_ref, w1_ref, b1_ref, w2_ref, b2_ref, m_ref, o_ref,
                     p0, p1, p2, *, H, W):
    HW = H * W
    bufs = (p0, p1, p2)
    C = x_ref.shape[-1]
    m0 = m_ref[:, 0:1]
    m2 = m_ref[:, 1:2]

    _zero_halo(bufs, W, HW)
    x0 = x_ref[0].astype(jnp.float32)
    _store_shifted(bufs, x0, m0, m2, 0, W, HW)
    h = _conv9(bufs, lambda t: w1_ref[t], C, C, W, HW) + b1_ref[...]
    h = jnp.maximum(h, 0.0)
    _store_shifted(bufs, h, m0, m2, 0, W, HW)       # halos stay zero
    h2 = _conv9(bufs, lambda t: w2_ref[t], C, C, W, HW) + b2_ref[...]
    o_ref[0] = (x0 + h2).astype(o_ref.dtype)


def resblock(x, w1, b1, w2, b2, mask, H, W):
    B, HW, C = x.shape
    return pl.pallas_call(
        functools.partial(_resblock_kernel, H=H, W=W),
        out_shape=jax.ShapeDtypeStruct((B, HW, C), jnp.bfloat16),
        grid=(B,),
        in_specs=[
            pl.BlockSpec((1, HW, C), lambda bi: (bi, 0, 0)),
            pl.BlockSpec((9, C, C), lambda bi: (0, 0, 0)),
            pl.BlockSpec((1, C), lambda bi: (0, 0)),
            pl.BlockSpec((9, C, C), lambda bi: (0, 0, 0)),
            pl.BlockSpec((1, C), lambda bi: (0, 0)),
            pl.BlockSpec((HW, 2), lambda bi: (0, 0)),
        ],
        out_specs=pl.BlockSpec((1, HW, C), lambda bi: (bi, 0, 0)),
        scratch_shapes=[pltpu.VMEM(((H + 2) * W, C), jnp.bfloat16)
                        for _ in range(3)],
        compiler_params=pltpu.CompilerParams(
            dimension_semantics=("parallel",),
            vmem_limit_bytes=_VMEM_LIMIT),
    )(x, w1, b1, w2, b2, mask)


# =============================================================================
# Fused global-avg-pool + fc(relu) + fc(sigmoid) head of the DE estimator.
# =============================================================================
def _gap_head_kernel(x_ref, w1_ref, b1_ref, w2_ref, b2_ref, o_ref, *, HW):
    g = jnp.sum(x_ref[0].astype(jnp.float32), axis=0, keepdims=True) * (1.0 / HW)
    h = jnp.dot(g.astype(jnp.bfloat16), w1_ref[...],
                preferred_element_type=jnp.float32) + b1_ref[...]
    h = jnp.maximum(h, 0.0)
    y = jnp.dot(h.astype(jnp.bfloat16), w2_ref[...],
                preferred_element_type=jnp.float32) + b2_ref[...]
    o_ref[...] = 1.0 / (1.0 + jnp.exp(-y))


def gap_head(f, w1, b1, w2, b2):
    B, HW, C = f.shape
    return pl.pallas_call(
        functools.partial(_gap_head_kernel, HW=HW),
        out_shape=jax.ShapeDtypeStruct((B, 1), jnp.float32),
        grid=(B,),
        in_specs=[
            pl.BlockSpec((1, HW, C), lambda bi: (bi, 0, 0)),
            pl.BlockSpec(tuple(w1.shape), lambda bi: (0, 0)),
            pl.BlockSpec(tuple(b1.shape), lambda bi: (0, 0)),
            pl.BlockSpec(tuple(w2.shape), lambda bi: (0, 0)),
            pl.BlockSpec(tuple(b2.shape), lambda bi: (0, 0)),
        ],
        out_specs=pl.BlockSpec((1, 1), lambda bi: (bi, 0)),
        compiler_params=pltpu.CompilerParams(dimension_semantics=("parallel",)),
    )(f, w1, b1, w2, b2)


# =============================================================================
# Linear (+ReLU)  and batched 3-layer AffineModulate MLP (grid over blocks).
# =============================================================================
def _linear_kernel(x_ref, w_ref, b_ref, o_ref, *, act):
    y = jnp.dot(x_ref[...].astype(jnp.bfloat16), w_ref[...],
                preferred_element_type=jnp.float32) + b_ref[...]
    if act == "relu":
        y = jnp.maximum(y, 0.0)
    o_ref[...] = y


def linear(x, w, b, act="none"):
    B, Din = x.shape
    Dout = w.shape[1]
    return pl.pallas_call(
        functools.partial(_linear_kernel, act=act),
        out_shape=jax.ShapeDtypeStruct((B, Dout), jnp.float32),
        grid=(1,),
        in_specs=[pl.BlockSpec((B, Din), lambda i: (0, 0)),
                  pl.BlockSpec((Din, Dout), lambda i: (0, 0)),
                  pl.BlockSpec((1, Dout), lambda i: (0, 0))],
        out_specs=pl.BlockSpec((B, Dout), lambda i: (0, 0)),
    )(x, w, b)


def _am_mlp_kernel(d_ref, w1_ref, b1_ref, w2_ref, b2_ref, w3_ref, b3_ref, o_ref):
    d = d_ref[...].astype(jnp.bfloat16)
    h = jnp.dot(d, w1_ref[0], preferred_element_type=jnp.float32) + b1_ref[0]
    h = jnp.maximum(h, 0.0)
    h = jnp.dot(h.astype(jnp.bfloat16), w2_ref[0],
                preferred_element_type=jnp.float32) + b2_ref[0]
    h = jnp.maximum(h, 0.0)
    h = jnp.dot(h.astype(jnp.bfloat16), w3_ref[0],
                preferred_element_type=jnp.float32) + b3_ref[0]
    o_ref[0] = h


def am_mlp_all(d, w1, b1, w2, b2, w3, b3):
    """d: (B,512).  Stacked per-block MLPs -> (num_block, B, 2*nf)."""
    nb, D, hid = w1.shape
    B = d.shape[0]
    two_nf = w3.shape[-1]
    return pl.pallas_call(
        _am_mlp_kernel,
        out_shape=jax.ShapeDtypeStruct((nb, B, two_nf), jnp.float32),
        grid=(nb,),
        in_specs=[
            pl.BlockSpec((B, D), lambda i: (0, 0)),
            pl.BlockSpec((1, D, hid), lambda i: (i, 0, 0)),
            pl.BlockSpec((1, 1, hid), lambda i: (i, 0, 0)),
            pl.BlockSpec((1, hid, hid), lambda i: (i, 0, 0)),
            pl.BlockSpec((1, 1, hid), lambda i: (i, 0, 0)),
            pl.BlockSpec((1, hid, two_nf), lambda i: (i, 0, 0)),
            pl.BlockSpec((1, 1, two_nf), lambda i: (i, 0, 0)),
        ],
        out_specs=pl.BlockSpec((1, B, two_nf), lambda i: (i, 0, 0)),
        compiler_params=pltpu.CompilerParams(dimension_semantics=("parallel",)),
    )(d, w1, b1, w2, b2, w3, b3)


# =============================================================================
# JAX glue (layout plumbing only)
# =============================================================================
def _flatten(x):
    B, H, W, C = x.shape
    return x.reshape(B, H * W, C)


def _unflatten(x, H, W):
    B, HW, C = x.shape
    return x.reshape(B, H, W, C)


def upsample_nearest_x2(x):  # NHWC, F.interpolate(scale_factor=2, 'nearest')
    x = jnp.repeat(x, 2, axis=1)
    return jnp.repeat(x, 2, axis=2)


def pixel_unshuffle_nhwc(x, s):
    # matches basicsr pixel_unshuffle channel ordering (c*s*s + sy*s + sx)
    B, H, W, C = x.shape
    x = x.reshape(B, H // s, s, W // s, s, C)
    x = jnp.transpose(x, (0, 1, 3, 5, 2, 4))
    return x.reshape(B, H // s, W // s, C * s * s)


# =============================================================================
# Parameters (deterministic synthetic init, mimicking default_init_weights(0.1))
# Conv / linear weights are bf16 (MXU operands); biases / FReLU weights f32.
# =============================================================================
class ParamInit:
    def __init__(self, seed=0):
        self._key = jax.random.PRNGKey(seed)
        self._n = 0

    def normal(self, shape, scale=0.1):
        k = jax.random.fold_in(self._key, self._n)
        self._n += 1
        return scale * jax.random.normal(k, shape, dtype=jnp.float32)

    def conv(self, cin, cout, scale=0.1):
        return {"w": self.normal((9, cin, cout), scale).astype(jnp.bfloat16),
                "b": jnp.zeros((1, cout), jnp.float32)}

    def fc(self, din, dout, scale=0.1):
        return {"w": self.normal((din, dout), scale).astype(jnp.bfloat16),
                "b": jnp.zeros((1, dout), jnp.float32)}


def pack_rrdb_params(rrdb, nf, ngc):
    """Pack one RRDB's 15 conv weights at their TRUE channel widths.

    Concat-buffer channel layout: [x (nf) | x1..x4 (ngc each)] -> Ktot = nf+4*ngc.
    Each conv's (K_k, cout_k) weight sits in the top-left of a (Ktot, nf) tile;
    the kernel slices to the true sizes so the padding is never multiplied.
    """
    Ktot = nf + 4 * ngc
    w_convs, b_convs = [], []
    for r in ("rdb1", "rdb2", "rdb3"):
        for k, name in enumerate(("c1", "c2", "c3", "c4", "c5")):
            w = rrdb[r][name]["w"]            # (9, nf + k*ngc, cout) bf16
            b = rrdb[r][name]["b"]            # (1, cout) f32
            K = nf + k * ngc
            cout = w.shape[-1]
            wpad = jnp.zeros((9, Ktot, nf), jnp.bfloat16).at[:, 0:K, 0:cout].set(w)
            bpad = jnp.zeros((1, nf), jnp.float32).at[:, 0:cout].set(b)
            w_convs.append(wpad)
            b_convs.append(bpad)
    wp = jnp.concatenate(w_convs, axis=0)      # (135, Ktot, nf)
    bp = jnp.stack(b_convs, axis=0)            # (15, 1, nf)
    return wp, bp


def build_params(cfg):
    init = ParamInit(0)
    nf, ngc = cfg["num_feat"], cfg["num_grow_ch"]
    scale = cfg["scale"]
    eff_in = cfg["num_in_ch"] * (4 if scale == 2 else (16 if scale == 1 else 1))
    hid = (512 + nf * 2) // 2

    p = {"conv_first": init.conv(eff_in, nf)}

    rrdb_w, rrdb_b, am_raw = [], [], []
    for _ in range(cfg["num_block"]):
        rrdb = {}
        for r in ("rdb1", "rdb2", "rdb3"):
            rrdb[r] = {
                "c1": init.conv(nf, ngc),
                "c2": init.conv(nf + ngc, ngc),
                "c3": init.conv(nf + 2 * ngc, ngc),
                "c4": init.conv(nf + 3 * ngc, ngc),
                "c5": init.conv(nf + 4 * ngc, nf),
            }
        wp, bp = pack_rrdb_params(rrdb, nf, ngc)
        rrdb_w.append(wp)
        rrdb_b.append(bp)
        am_raw.append({"fc1": init.fc(512, hid),
                       "fc2": init.fc(hid, hid),
                       "fc3": init.fc(hid, nf * 2)})
    p["rrdb_w"] = jnp.stack(rrdb_w)            # (nb, 135, Ktot, nf) bf16
    p["rrdb_b"] = jnp.stack(rrdb_b)            # (nb, 15, 1, nf) f32
    p["am_w1"] = jnp.stack([a["fc1"]["w"] for a in am_raw])
    p["am_b1"] = jnp.stack([a["fc1"]["b"] for a in am_raw])
    p["am_w2"] = jnp.stack([a["fc2"]["w"] for a in am_raw])
    p["am_b2"] = jnp.stack([a["fc2"]["b"] for a in am_raw])
    p["am_w3"] = jnp.stack([a["fc3"]["w"] for a in am_raw])
    p["am_b3"] = jnp.stack([a["fc3"]["b"] for a in am_raw])

    p["conv_body"] = init.conv(nf, nf)
    p["conv_up1"] = init.conv(nf, nf)
    p["conv_up2"] = init.conv(nf, nf)
    p["conv_hr"] = init.conv(nf, nf)
    p["conv_last"] = init.conv(nf, cfg["num_out_ch"])
    p["frelu"] = {"w": init.normal((9, 1, nf), 0.1),
                  "b": jnp.zeros((1, nf), jnp.float32)}
    p["dd_embed"] = init.fc(cfg["num_degradation"], 512)

    # TODO(synk): DEResNet source not supplied; re-implemented from the
    # MM-RealSR reference (ResidualBlockNoBN stages + avgpool + sigmoid heads)
    # with reduced widths for this synthetic test.
    feats, blocks, downs = cfg["de_feats"], cfg["de_blocks"], cfg["de_down"]
    nstage = len(feats)
    de = {"first": [], "body": [], "fc": []}
    for _ in range(cfg["num_degradation"]):
        de["first"].append(init.conv(cfg["num_in_ch"], feats[0]))
        body = []
        for s in range(nstage):
            for _ in range(blocks[s]):
                body.append(("res", {"c1": init.conv(feats[s], feats[s]),
                                     "c2": init.conv(feats[s], feats[s])}))
            if downs[s] == 2:
                body.append(("down",
                             init.conv(feats[s], feats[min(s + 1, nstage - 1)])))
            elif s < nstage - 1 and feats[s] != feats[s + 1]:
                body.append(("conv", init.conv(feats[s], feats[s + 1])))
        de["body"].append(body)
        de["fc"].append({"fc1": init.fc(feats[-1], 512),
                         "fc2": init.fc(512, 1)})
    p["de_net"] = de
    return p


# =============================================================================
# Module forward (composition of fused Pallas kernels)
# =============================================================================
def deresnet_forward(de, cfg, x_nhwc, mask_for):
    B, H0, W0, _ = x_nhwc.shape
    x_flat = _flatten(x_nhwc).astype(jnp.bfloat16)
    degrees = []
    for i in range(cfg["num_degradation"]):
        h, w = H0, W0
        f = conv3x3(x_flat, de["first"][i]["w"], de["first"][i]["b"],
                    mask_for(h, w), h, w)
        for kind, pp in de["body"][i]:
            if kind == "res":
                f = resblock(f, pp["c1"]["w"], pp["c1"]["b"],
                             pp["c2"]["w"], pp["c2"]["b"], mask_for(h, w), h, w)
            elif kind == "down":
                # TODO(synk): true stride-2 tap schedule in-kernel; currently
                # stride-1 conv followed by an even-index subsample (H, W even).
                f = conv3x3(f, pp["w"], pp["b"], mask_for(h, w), h, w)
                f = _flatten(_unflatten(f, h, w)[:, ::2, ::2, :])
                h, w = h // 2, w // 2
            else:
                f = conv3x3(f, pp["w"], pp["b"], mask_for(h, w), h, w)
        fc = de["fc"][i]
        hv = gap_head(f, fc["fc1"]["w"], fc["fc1"]["b"],
                      fc["fc2"]["w"], fc["fc2"]["b"])          # (B, 1)
        degrees.append(hv[:, 0])                               # (B,)
    return degrees


def mmrrdbnet_forward(params, cfg, x_nchw, custom_degrees=(None, None)):
    scale = cfg["scale"]
    nf, ngc = cfg["num_feat"], cfg["num_grow_ch"]
    x = jnp.transpose(x_nchw, (0, 2, 3, 1)).astype(jnp.float32)   # -> NHWC

    if scale == 2:
        feat_img = pixel_unshuffle_nhwc(x, 2)
    elif scale == 1:
        feat_img = pixel_unshuffle_nhwc(x, 4)
    else:
        feat_img = x
    B, H, W, _ = feat_img.shape

    mask_cache = {}

    def mask_for(h, w):
        if (h, w) not in mask_cache:
            mask_cache[(h, w)] = make_shift_masks(h, w)
        return mask_cache[(h, w)]

    feat = conv3x3(_flatten(feat_img).astype(jnp.bfloat16),
                   params["conv_first"]["w"], params["conv_first"]["b"],
                   mask_for(H, W), H, W)
    feat_res = feat

    degrees = deresnet_forward(params["de_net"], cfg, x, mask_for)

    # TODO(synk): the anchor / view(b,5) min-max degree override path of the
    # reference forward is not implemented (anchor=None only).
    new_degrees = []
    for i in range(cfg["num_degradation"]):
        if custom_degrees[i] is None:
            new_degrees.append(degrees[i])
        else:
            new_degrees.append(jnp.full_like(degrees[i], custom_degrees[i]))
    concat_degrees = jnp.stack(new_degrees, axis=1)               # (B, num_deg)
    d_embedding = linear(concat_degrees, params["dd_embed"]["w"],
                         params["dd_embed"]["b"], act="relu")     # (B, 512)

    # gamma/beta for all blocks in one batched pallas_call (loop-invariant MLP).
    gb = am_mlp_all(d_embedding, params["am_w1"], params["am_b1"],
                    params["am_w2"], params["am_b2"],
                    params["am_w3"], params["am_b3"])             # (nb, B, 2nf)

    # All RRDB blocks + AffineModulate in one call; weights prefetched per block.
    feat = rrdb_chain(feat, params["rrdb_w"], params["rrdb_b"], gb,
                      mask_for(H, W), H, W, nf, ngc)

    # conv_body with the trunk residual add fused into the kernel epilogue.
    feat = conv3x3(feat, params["conv_body"]["w"], params["conv_body"]["b"],
                   mask_for(H, W), H, W, res=feat_res)

    fw, fb = params["frelu"]["w"], params["frelu"]["b"]
    # TODO(synk): fuse the nearest-2x upsample into conv3x3_frelu's buffer fill
    # to avoid the HBM round trip of the 4x-larger (bf16) tensor.
    feat = _flatten(upsample_nearest_x2(_unflatten(feat, H, W)))
    H2, W2 = 2 * H, 2 * W
    feat = conv3x3_frelu(feat, params["conv_up1"]["w"], params["conv_up1"]["b"],
                         fw, fb, mask_for(H2, W2), H2, W2)
    feat = _flatten(upsample_nearest_x2(_unflatten(feat, H2, W2)))
    H4, W4 = 2 * H2, 2 * W2
    feat = conv3x3_frelu(feat, params["conv_up2"]["w"], params["conv_up2"]["b"],
                         fw, fb, mask_for(H4, W4), H4, W4)
    feat = conv3x3_frelu(feat, params["conv_hr"]["w"], params["conv_hr"]["b"],
                         fw, fb, mask_for(H4, W4), H4, W4)
    out = conv3x3(feat, params["conv_last"]["w"], params["conv_last"]["b"],
                  mask_for(H4, W4), H4, W4)

    out_nchw = jnp.transpose(_unflatten(out, H4, W4).astype(jnp.float32),
                             (0, 3, 1, 2))                        # back to NCHW
    return out_nchw, degrees


# =============================================================================
if __name__ == "__main__":
    cfg = dict(
        num_in_ch=3, num_out_ch=3, scale=4,
        num_feat=16, num_block=2, num_grow_ch=8,
        num_degradation=2,
        # reduced DEResNet config (spatial sizes stay multiples of 8)
        de_feats=(8, 8, 8, 8), de_blocks=(1, 1, 1, 1), de_down=(2, 1, 1, 1),
    )
    params = build_params(cfg)

    key = jax.random.PRNGKey(0)
    x = jax.random.normal(key, (2, 3, 16, 16), dtype=jnp.float32)  # NCHW input

    out, degrees = mmrrdbnet_forward(params, cfg, x)
    out = jax.block_until_ready(out)
    degrees = [jax.block_until_ready(d) for d in degrees]

    assert out.shape == (2, 3, 64, 64), out.shape
    assert len(degrees) == cfg["num_degradation"]
    assert all(d.shape == (2,) for d in degrees)
    print("KERNEL_OK")
</pallas_src>

<mosaic_0001>
module attributes {stable_mosaic.version = 11 : i64} {
  func.func @_conv3x3_kernel(%arg0: i32, %arg1: memref<1x256x3xbf16, #tpu.memory_space<vmem>>, %arg2: memref<9x3x16xbf16, #tpu.memory_space<vmem>>, %arg3: memref<1x16xf32, #tpu.memory_space<vmem>>, %arg4: memref<256x2xf32, #tpu.memory_space<vmem>>, %arg5: memref<1x256x16xbf16, #tpu.memory_space<vmem>>, %arg6: memref<288x3xbf16, #tpu.memory_space<vmem>>, %arg7: memref<288x3xbf16, #tpu.memory_space<vmem>>, %arg8: memref<288x3xbf16, #tpu.memory_space<vmem>>) attributes {dimension_semantics = [#tpu.dimension_semantics<parallel>], iteration_bounds = array<i64: 2>, scalar_prefetch = 0 : i64, scratch_operands = 3 : i64, tpu.core_type = #tpu.core_type<tc>, window_params = [{transform_indices = @transform_0, window_bounds = array<i64: 1, 256, 3>}, {pipeline_mode = #tpu.pipeline_mode<synchronous>, transform_indices = @transform_1, window_bounds = array<i64: 9, 3, 16>}, {pipeline_mode = #tpu.pipeline_mode<synchronous>, transform_indices = @transform_2, window_bounds = array<i64: 1, 16>}, {pipeline_mode = #tpu.pipeline_mode<synchronous>, transform_indices = @transform_3, window_bounds = array<i64: 256, 2>}, {transform_indices = @transform_4, window_bounds = array<i64: 1, 256, 16>}]} {
    %c0 = arith.constant 0 : index
    %c0_0 = arith.constant 0 : index
    %0 = vector.load %arg4[%c0, %c0_0] : memref<256x2xf32, #tpu.memory_space<vmem>>, vector<256x1xf32>
    %c0_1 = arith.constant 0 : index
    %c1 = arith.constant 1 : index
    %1 = vector.load %arg4[%c0_1, %c1] : memref<256x2xf32, #tpu.memory_space<vmem>>, vector<256x1xf32>
    %cst = arith.constant 0.000000e+00 : bf16
    %2 = vector.broadcast %cst : bf16 to vector<16x3xbf16>
    %c0_2 = arith.constant 0 : index
    %c0_3 = arith.constant 0 : index
    %3 = vector.load %arg6[%c0_2, %c0_3] : memref<288x3xbf16, #tpu.memory_space<vmem>>, vector<16x3xbf16>
    tpu.vector_store %arg6[%c0_2, %c0_3], %2 {strides = array<i32>} : memref<288x3xbf16, #tpu.memory_space<vmem>>, vector<16x3xbf16>,
    %c272 = arith.constant 272 : index
    %c0_4 = arith.constant 0 : index
    %4 = vector.load %arg6[%c272, %c0_4] : memref<288x3xbf16, #tpu.memory_space<vmem>>, vector<16x3xbf16>
    tpu.vector_store %arg6[%c272, %c0_4], %2 {strides = array<i32>} : memref<288x3xbf16, #tpu.memory_space<vmem>>, vector<16x3xbf16>,
    %cst_5 = arith.constant 0.000000e+00 : bf16
    %5 = vector.broadcast %cst_5 : bf16 to vector<16x3xbf16>
    %c0_6 = arith.constant 0 : index
    %c0_7 = arith.constant 0 : index
    %6 = vector.load %arg7[%c0_6, %c0_7] : memref<288x3xbf16, #tpu.memory_space<vmem>>, vector<16x3xbf16>
    tpu.vector_store %arg7[%c0_6, %c0_7], %5 {strides = array<i32>} : memref<288x3xbf16, #tpu.memory_space<vmem>>, vector<16x3xbf16>,
    %c272_8 = arith.constant 272 : index
    %c0_9 = arith.constant 0 : index
    %7 = vector.load %arg7[%c272_8, %c0_9] : memref<288x3xbf16, #tpu.memory_space<vmem>>, vector<16x3xbf16>
    tpu.vector_store %arg7[%c272_8, %c0_9], %5 {strides = array<i32>} : memref<288x3xbf16, #tpu.memory_space<vmem>>, vector<16x3xbf16>,
    %cst_10 = arith.constant 0.000000e+00 : bf16
    %8 = vector.broadcast %cst_10 : bf16 to vector<16x3xbf16>
    %c0_11 = arith.constant 0 : index
    %c0_12 = arith.constant 0 : index
    %9 = vector.load %arg8[%c0_11, %c0_12] : memref<288x3xbf16, #tpu.memory_space<vmem>>, vector<16x3xbf16>
    tpu.vector_store %arg8[%c0_11, %c0_12], %8 {strides = array<i32>} : memref<288x3xbf16, #tpu.memory_space<vmem>>, vector<16x3xbf16>,
    %c272_13 = arith.constant 272 : index
    %c0_14 = arith.constant 0 : index
    %10 = vector.load %arg8[%c272_13, %c0_14] : memref<288x3xbf16, #tpu.memory_space<vmem>>, vector<16x3xbf16>
    tpu.vector_store %arg8[%c272_13, %c0_14], %8 {strides = array<i32>} : memref<288x3xbf16, #tpu.memory_space<vmem>>, vector<16x3xbf16>,
    %c0_15 = arith.constant 0 : index
    %c0_16 = arith.constant 0 : index
    %c0_17 = arith.constant 0 : index
    %11 = vector.load %arg1[%c0_15, %c0_16, %c0_17] : memref<1x256x3xbf16, #tpu.memory_space<vmem>>, vector<1x256x3xbf16>
    %12 = vector.shape_cast %11 : vector<1x256x3xbf16> to vector<256x3xbf16>
    %13 = arith.extf %12 : vector<256x3xbf16> to vector<256x3xf32>
    %cst_18 = arith.constant 0.000000e+00 : f32
    %14 = vector.broadcast %cst_18 : f32 to vector<1x3xf32>
    %15 = vector.broadcast %0 : vector<256x1xf32> to vector<256x3xf32>
    %16 = arith.mulf %13, %15 : vector<256x3xf32>
    %17 = vector.extract_strided_slice %16 {offsets = [0, 0], sizes = [255, 3], strides = [1, 1]} : vector<256x3xf32> to vector<255x3xf32>
    %18 = tpu.concatenate %14, %17 in 0 : vector<1x3xf32>, vector<255x3xf32> -> vector<256x3xf32>
    %19 = vector.broadcast %1 : vector<256x1xf32> to vector<256x3xf32>
    %20 = arith.mulf %13, %19 : vector<256x3xf32>
    %21 = vector.extract_strided_slice %20 {offsets = [1, 0], sizes = [255, 3], strides = [1, 1]} : vector<256x3xf32> to vector<255x3xf32>
    %22 = tpu.concatenate %21, %14 in 0 : vector<255x3xf32>, vector<1x3xf32> -> vector<256x3xf32>
    %23 = arith.truncf %13 : vector<256x3xf32> to vector<256x3xbf16>
    %c16 = arith.constant 16 : index
    %c0_19 = arith.constant 0 : index
    %24 = vector.load %arg7[%c16, %c0_19] : memref<288x3xbf16, #tpu.memory_space<vmem>>, vector<256x3xbf16>
    tpu.vector_store %arg7[%c16, %c0_19], %23 {strides = array<i32>} : memref<288x3xbf16, #tpu.memory_space<vmem>>, vector<256x3xbf16>,
    %25 = arith.truncf %18 : vector<256x3xf32> to vector<256x3xbf16>
    %c16_20 = arith.constant 16 : index
    %c0_21 = arith.constant 0 : index
    %26 = vector.load %arg6[%c16_20, %c0_21] : memref<288x3xbf16, #tpu.memory_space<vmem>>, vector<256x3xbf16>
    tpu.vector_store %arg6[%c16_20, %c0_21], %25 {strides = array<i32>} : memref<288x3xbf16, #tpu.memory_space<vmem>>, vector<256x3xbf16>,
    %27 = arith.truncf %22 : vector<256x3xf32> to vector<256x3xbf16>
    %c16_22 = arith.constant 16 : index
    %c0_23 = arith.constant 0 : index
    %28 = vector.load %arg8[%c16_22, %c0_23] : memref<288x3xbf16, #tpu.memory_space<vmem>>, vector<256x3xbf16>
    tpu.vector_store %arg8[%c16_22, %c0_23], %27 {strides = array<i32>} : memref<288x3xbf16, #tpu.memory_space<vmem>>, vector<256x3xbf16>,
    %cst_24 = arith.constant 0.000000e+00 : f32
    %29 = vector.broadcast %cst_24 : f32 to vector<256x16xf32>
    %c0_25 = arith.constant 0 : index
    %c0_26 = arith.constant 0 : index
    %30 = vector.load %arg6[%c0_25, %c0_26] : memref<288x3xbf16, #tpu.memory_space<vmem>>, vector<256x3xbf16>
    %c0_27 = arith.constant 0 : index
    %c0_28 = arith.constant 0 : index
    %c0_29 = arith.constant 0 : index
    %31 = vector.load %arg2[%c0_27, %c0_28, %c0_29] : memref<9x3x16xbf16, #tpu.memory_space<vmem>>, vector<1x3x16xbf16>
    %32 = vector.shape_cast %31 : vector<1x3x16xbf16> to vector<3x16xbf16>
    %cst_30 = arith.constant dense<0.000000e+00> : vector<256x16xf32>
    %33 = tpu.matmul %30, %32, %cst_30 {dimension_numbers = #tpu.dot_dimension_numbers<[1], [0], [0], [1], [0, 0, 1, 1], [], []>} : vector<256x3xbf16>, vector<3x16xbf16>, vector<256x16xf32> -> vector<256x16xf32>
    %34 = arith.addf %29, %33 : vector<256x16xf32>
    %c0_31 = arith.constant 0 : index
    %c0_32 = arith.constant 0 : index
    %35 = vector.load %arg7[%c0_31, %c0_32] : memref<288x3xbf16, #tpu.memory_space<vmem>>, vector<256x3xbf16>
    %c1_33 = arith.constant 1 : index
    %c0_34 = arith.constant 0 : index
    %c0_35 = arith.constant 0 : index
    %36 = vector.load %arg2[%c1_33, %c0_34, %c0_35] : memref<9x3x16xbf16, #tpu.memory_space<vmem>>, vector<1x3x16xbf16>
    %37 = vector.shape_cast %36 : vector<1x3x16xbf16> to vector<3x16xbf16>
    %cst_36 = arith.constant dense<0.000000e+00> : vector<256x16xf32>
    %38 = tpu.matmul %35, %37, %cst_36 {dimension_numbers = #tpu.dot_dimension_numbers<[1], [0], [0], [1], [0, 0, 1, 1], [], []>} : vector<256x3xbf16>, vector<3x16xbf16>, vector<256x16xf32> -> vector<256x16xf32>
    %39 = arith.addf %34, %38 : vector<256x16xf32>
    %c0_37 = arith.constant 0 : index
    %c0_38 = arith.constant 0 : index
    %40 = vector.load %arg8[%c0_37, %c0_38] : memref<288x3xbf16, #tpu.memory_space<vmem>>, vector<256x3xbf16>
    %c2 = arith.constant 2 : index
    %c0_39 = arith.constant 0 : index
    %c0_40 = arith.constant 0 : index
    %41 = vector.load %arg2[%c2, %c0_39, %c0_40] : memref<9x3x16xbf16, #tpu.memory_space<vmem>>, vector<1x3x16xbf16>
    %42 = vector.shape_cast %41 : vector<1x3x16xbf16> to vector<3x16xbf16>
    %cst_41 = arith.constant dense<0.000000e+00> : vector<256x16xf32>
    %43 = tpu.matmul %40, %42, %cst_41 {dimension_numbers = #tpu.dot_dimension_numbers<[1], [0], [0], [1], [0, 0, 1, 1], [], []>} : vector<256x3xbf16>, vector<3x16xbf16>, vector<256x16xf32> -> vector<256x16xf32>
    %44 = arith.addf %39, %43 : vector<256x16xf32>
    %c16_42 = arith.constant 16 : index
    %c0_43 = arith.constant 0 : index
    %45 = vector.load %arg6[%c16_42, %c0_43] : memref<288x3xbf16, #tpu.memory_space<vmem>>, vector<256x3xbf16>
    %c3 = arith.constant 3 : index
    %c0_44 = arith.constant 0 : index
    %c0_45 = arith.constant 0 : index
    %46 = vector.load %arg2[%c3, %c0_44, %c0_45] : memref<9x3x16xbf16, #tpu.memory_space<vmem>>, vector<1x3x16xbf16>
    %47 = vector.shape_cast %46 : vector<1x3x16xbf16> to vector<3x16xbf16>
    %cst_46 = arith.constant dense<0.000000e+00> : vector<256x16xf32>
    %48 = tpu.matmul %45, %47, %cst_46 {dimension_numbers = #tpu.dot_dimension_numbers<[1], [0], [0], [1], [0, 0, 1, 1], [], []>} : vector<256x3xbf16>, vector<3x16xbf16>, vector<256x16xf32> -> vector<256x16xf32>
    %49 = arith.addf %44, %48 : vector<256x16xf32>
    %c16_47 = arith.constant 16 : index
    %c0_48 = arith.constant 0 : index
    %50 = vector.load %arg7[%c16_47, %c0_48] : memref<288x3xbf16, #tpu.memory_space<vmem>>, vector<256x3xbf16>
    %c4 = arith.constant 4 : index
    %c0_49 = arith.constant 0 : index
    %c0_50 = arith.constant 0 : index
    %51 = vector.load %arg2[%c4, %c0_49, %c0_50] : memref<9x3x16xbf16, #tpu.memory_space<vmem>>, vector<1x3x16xbf16>
    %52 = vector.shape_cast %51 : vector<1x3x16xbf16> to vector<3x16xbf16>
    %cst_51 = arith.constant dense<0.000000e+00> : vector<256x16xf32>
    %53 = tpu.matmul %50, %52, %cst_51 {dimension_numbers = #tpu.dot_dimension_numbers<[1], [0], [0], [1], [0, 0, 1, 1], [], []>} : vector<256x3xbf16>, vector<3x16xbf16>, vector<256x16xf32> -> vector<256x16xf32>
    %54 = arith.addf %49, %53 : vector<256x16xf32>
    %c16_52 = arith.constant 16 : index
    %c0_53 = arith.constant 0 : index
    %55 = vector.load %arg8[%c16_52, %c0_53] : memref<288x3xbf16, #tpu.memory_space<vmem>>, vector<256x3xbf16>
    %c5 = arith.constant 5 : index
    %c0_54 = arith.constant 0 : index
    %c0_55 = arith.constant 0 : index
    %56 = vector.load %arg2[%c5, %c0_54, %c0_55] : memref<9x3x16xbf16, #tpu.memory_space<vmem>>, vector<1x3x16xbf16>
    %57 = vector.shape_cast %56 : vector<1x3x16xbf16> to vector<3x16xbf16>
    %cst_56 = arith.constant dense<0.000000e+00> : vector<256x16xf32>
    %58 = tpu.matmul %55, %57, %cst_56 {dimension_numbers = #tpu.dot_dimension_numbers<[1], [0], [0], [1], [0, 0, 1, 1], [], []>} : vector<256x3xbf16>, vector<3x16xbf16>, vector<256x16xf32> -> vector<256x16xf32>
    %59 = arith.addf %54, %58 : vector<256x16xf32>
    %c32 = arith.constant 32 : index
    %c0_57 = arith.constant 0 : index
    %60 = vector.load %arg6[%c32, %c0_57] : memref<288x3xbf16, #tpu.memory_space<vmem>>, vector<256x3xbf16>
    %c6 = arith.constant 6 : index
    %c0_58 = arith.constant 0 : index
    %c0_59 = arith.constant 0 : index
    %61 = vector.load %arg2[%c6, %c0_58, %c0_59] : memref<9x3x16xbf16, #tpu.memory_space<vmem>>, vector<1x3x16xbf16>
    %62 = vector.shape_cast %61 : vector<1x3x16xbf16> to vector<3x16xbf16>
    %cst_60 = arith.constant dense<0.000000e+00> : vector<256x16xf32>
    %63 = tpu.matmul %60, %62, %cst_60 {dimension_numbers = #tpu.dot_dimension_numbers<[1], [0], [0], [1], [0, 0, 1, 1], [], []>} : vector<256x3xbf16>, vector<3x16xbf16>, vector<256x16xf32> -> vector<256x16xf32>
    %64 = arith.addf %59, %63 : vector<256x16xf32>
    %c32_61 = arith.constant 32 : index
    %c0_62 = arith.constant 0 : index
    %65 = vector.load %arg7[%c32_61, %c0_62] : memref<288x3xbf16, #tpu.memory_space<vmem>>, vector<256x3xbf16>
    %c7 = arith.constant 7 : index
    %c0_63 = arith.constant 0 : index
    %c0_64 = arith.constant 0 : index
    %66 = vector.load %arg2[%c7, %c0_63, %c0_64] : memref<9x3x16xbf16, #tpu.memory_space<vmem>>, vector<1x3x16xbf16>
    %67 = vector.shape_cast %66 : vector<1x3x16xbf16> to vector<3x16xbf16>
    %cst_65 = arith.constant dense<0.000000e+00> : vector<256x16xf32>
    %68 = tpu.matmul %65, %67, %cst_65 {dimension_numbers = #tpu.dot_dimension_numbers<[1], [0], [0], [1], [0, 0, 1, 1], [], []>} : vector<256x3xbf16>, vector<3x16xbf16>, vector<256x16xf32> -> vector<256x16xf32>
    %69 = arith.addf %64, %68 : vector<256x16xf32>
    %c32_66 = arith.constant 32 : index
    %c0_67 = arith.constant 0 : index
    %70 = vector.load %arg8[%c32_66, %c0_67] : memref<288x3xbf16, #tpu.memory_space<vmem>>, vector<256x3xbf16>
    %c8 = arith.constant 8 : index
    %c0_68 = arith.constant 0 : index
    %c0_69 = arith.constant 0 : index
    %71 = vector.load %arg2[%c8, %c0_68, %c0_69] : memref<9x3x16xbf16, #tpu.memory_space<vmem>>, vector<1x3x16xbf16>
    %72 = vector.shape_cast %71 : vector<1x3x16xbf16> to vector<3x16xbf16>
    %cst_70 = arith.constant dense<0.000000e+00> : vector<256x16xf32>
    %73 = tpu.matmul %70, %72, %cst_70 {dimension_numbers = #tpu.dot_dimension_numbers<[1], [0], [0], [1], [0, 0, 1, 1], [], []>} : vector<256x3xbf16>, vector<3x16xbf16>, vector<256x16xf32> -> vector<256x16xf32>
    %74 = arith.addf %69, %73 : vector<256x16xf32>
    %c0_71 = arith.constant 0 : index
    %c0_72 = arith.constant 0 : index
    %75 = vector.load %arg3[%c0_71, %c0_72] : memref<1x16xf32, #tpu.memory_space<vmem>>, vector<1x16xf32>
    %76 = vector.broadcast %75 : vector<1x16xf32> to vector<256x16xf32>
    %77 = arith.addf %74, %76 : vector<256x16xf32>
    %78 = arith.truncf %77 : vector<256x16xf32> to vector<256x16xbf16>
    %c0_73 = arith.constant 0 : index
    %c0_74 = arith.constant 0 : index
    %c0_75 = arith.constant 0 : index
    %79 = vector.load %arg5[%c0_73, %c0_74, %c0_75] : memref<1x256x16xbf16, #tpu.memory_space<vmem>>, vector<1x256x16xbf16>
    %80 = vector.shape_cast %79 : vector<1x256x16xbf16> to vector<256x16xbf16>
    %81 = vector.shape_cast %78 : vector<256x16xbf16> to vector<1x256x16xbf16>
    tpu.vector_store %arg5[%c0_73, %c0_74, %c0_75], %81 {strides = array<i32>} : memref<1x256x16xbf16, #tpu.memory_space<vmem>>, vector<1x256x16xbf16>,
    return
  }
  func.func @transform_0(%arg0: i32) -> (i32, i32, i32) {
    %c0_i32 = arith.constant 0 : i32
    %c0_i32_0 = arith.constant 0 : i32
    %c0_i32_1 = arith.constant 0 : i32
    return %arg0, %c0_i32, %c0_i32_0 : i32, i32, i32
  }
  func.func @transform_1(%arg0: i32) -> (i32, i32, i32) {
    %c0_i32 = arith.constant 0 : i32
    %c0_i32_0 = arith.constant 0 : i32
    %c0_i32_1 = arith.constant 0 : i32
    %c0_i32_2 = arith.constant 0 : i32
    return %c0_i32, %c0_i32_0, %c0_i32_1 : i32, i32, i32
  }
  func.func @transform_2(%arg0: i32) -> (i32, i32) {
    %c0_i32 = arith.constant 0 : i32
    %c0_i32_0 = arith.constant 0 : i32
    %c0_i32_1 = arith.constant 0 : i32
    return %c0_i32, %c0_i32_0 : i32, i32
  }
  func.func @transform_3(%arg0: i32) -> (i32, i32) {
    %c0_i32 = arith.constant 0 : i32
    %c0_i32_0 = arith.constant 0 : i32
    %c0_i32_1 = arith.constant 0 : i32
    return %c0_i32, %c0_i32_0 : i32, i32
  }
  func.func @transform_4(%arg0: i32) -> (i32, i32, i32) {
    %c0_i32 = arith.constant 0 : i32
    %c0_i32_0 = arith.constant 0 : i32
    %c0_i32_1 = arith.constant 0 : i32
    return %arg0, %c0_i32, %c0_i32_0 : i32, i32, i32
  }
}

</mosaic_0001>

<llo_original>
// kernel: tpu_custom_call.1
$region0: #{tpu_custom_call.1}
  #allocation0 [shape = 'u32[]', space=smem, size = 0x4, offset = 0x4, fixed_abs, tag = 'smem constant byte address 0x4 - core index']
  #allocation1 [shape = 'u32[72,128]{1,0:T(1,128)}', space=vmem, size = 0x9000, scoped, tag = 'internal scratch']
  #allocation2 [shape = 'bf16[288,3]{1,0:T(8,128)(2,1)}', space=vmem, size = 0x12000, scoped, tag = 'scratch operand']
  #allocation3 [shape = 'bf16[288,3]{1,0:T(8,128)(2,1)}', space=vmem, size = 0x12000, scoped, tag = 'scratch operand']
  #allocation4 [shape = 'bf16[288,3]{1,0:T(8,128)(2,1)}', space=vmem, size = 0x12000, scoped, tag = 'scratch operand']
  %s0 = inlined_call_operand.vmem [shape: bf16[2,256,3], index: 0, kind: input, shape index: {}]
  %s1 = inlined_call_operand.vmem [shape: bf16[9,3,16], index: 1, kind: input, shape index: {}]
  %s2 = inlined_call_operand.vmem [shape: f32[1,16], index: 2, kind: input, shape index: {}]
  %s3 = inlined_call_operand.vmem [shape: f32[256,2], index: 3, kind: input, shape index: {}]
  %s4 = inlined_call_operand.vmem [shape: bf16[2,256,16], index: 4, kind: output, shape index: {}]
  %s5 = sld [smem:[#allocation0]]
  $region49: #{tpu_custom_call.1} parent=0
    _
  %s7 = ssub.s32 1, %s5
  %s8 = scalar_select 0, %s7, %s5
  loop: start=0, step=1, limit=4
  $region2: #{tpu_custom_call.1} parent=0 // loop_pre_header
    _
  $region3: #{tpu_custom_call.1} parent=0 // loop_header
    %s10 = sphi 0, %s14
    %p11 = scmp.ge.s32.totalorder %s10, 4
    %s20 = sphi 0, %s22
    %s23 = sphi 0, %s20
    %s24 = sphi 0, %s23
    %s40 = sphi 0, %s24
    %s44 = sphi 0, %s44
    %s46 = sphi 0, %s44
    %s47 = sphi 0, %s46
    %s61 = sphi 0, %s47
    %s65 = sphi 0, %s65
    %s67 = sphi 0, %s65
    %s68 = sphi 0, %s67
    %s82 = sphi 0, %s68
    %s86 = sphi 0, %s86
    %s88 = sphi 0, %s86
    %s89 = sphi 0, %s88
    %s103 = sphi 0, %s89
    %s109 = sphi 0, %s111
    %s112 = sphi 0, %s109
    %s113 = sphi 0, %s112
    %s129 = sphi 0, %s113
  $region4: #{tpu_custom_call.1} parent=0 // loop_header_branch
    %13 = sbr.rel (%p11) target = $region8
  $region5: #{tpu_custom_call.1} parent=0 // loop_body
    %s15 = ssub.s32 %s10, 1
    %s16 = ssub.s32 %s10, 2
    %s17 = sadd.s32 %s10, 1
    %s18 = ssub.s32 %s10, %s17
    %p19 = scmp.eq.s32.totalorder %s18, 0
    %s21 = sadd.s32 %s20, 1
    %s22 = scalar_select %p19, %s20, %s21
    %p25 = pneg %p19
    %p26 = scmp.eq.s32.totalorder %s10, 1
    %p27 = por %p25, %p26
    %p28 = scmp.ne.s32.totalorder %s20, %s23
    %p29 = scmp.eq.s32.totalorder %s10, 0
    %p30 = por %p28, %p29
    %p31 = scmp.ne.s32.totalorder %s20, %s23
    %p32 = scmp.eq.s32.totalorder %s15, 1
    %p33 = por %p31, %p32
    %p34 = scmp.ne.s32.totalorder %s23, %s24
    %p35 = scmp.eq.s32.totalorder %s15, 0
    %p36 = por %p34, %p35
    %p37 = scmp.ne.s32.totalorder %s23, %s24
    %p38 = scmp.eq.s32.totalorder %s16, 1
    %p39 = por %p37, %p38
    %p41 = scmp.ne.s32.totalorder %s24, %s40
    %p42 = scmp.eq.s32.totalorder %s16, 0
    %p43 = por %p41, %p42
    %s45 = sadd.s32 %s44, 1
    %p48 = scmp.eq.s32.totalorder %s10, 1
    %p49 = scmp.ne.s32.totalorder %s44, %s46
    %p50 = scmp.eq.s32.totalorder %s10, 0
    %p51 = por %p49, %p50
    %p52 = scmp.ne.s32.totalorder %s44, %s46
    %p53 = scmp.eq.s32.totalorder %s15, 1
    %p54 = por %p52, %p53
    %p55 = scmp.ne.s32.totalorder %s46, %s47
    %p56 = scmp.eq.s32.totalorder %s15, 0
    %p57 = por %p55, %p56
    %p58 = scmp.ne.s32.totalorder %s46, %s47
    %p59 = scmp.eq.s32.totalorder %s16, 1
    %p60 = por %p58, %p59
    %p62 = scmp.ne.s32.totalorder %s47, %s61
    %p63 = scmp.eq.s32.totalorder %s16, 0
    %p64 = por %p62, %p63
    %s66 = sadd.s32 %s65, 1
    %p69 = scmp.eq.s32.totalorder %s10, 1
    %p70 = scmp.ne.s32.totalorder %s65, %s67
    %p71 = scmp.eq.s32.totalorder %s10, 0
    %p72 = por %p70, %p71
    %p73 = scmp.ne.s32.totalorder %s65, %s67
    %p74 = scmp.eq.s32.totalorder %s15, 1
    %p75 = por %p73, %p74
    %p76 = scmp.ne.s32.totalorder %s67, %s68
    %p77 = scmp.eq.s32.totalorder %s15, 0
    %p78 = por %p76, %p77
    %p79 = scmp.ne.s32.totalorder %s67, %s68
    %p80 = scmp.eq.s32.totalorder %s16, 1
    %p81 = por %p79, %p80
    %p83 = scmp.ne.s32.totalorder %s68, %s82
    %p84 = scmp.eq.s32.totalorder %s16, 0
    %p85 = por %p83, %p84
    %s87 = sadd.s32 %s86, 1
    %p90 = scmp.eq.s32.totalorder %s10, 1
    %p91 = scmp.ne.s32.totalorder %s86, %s88
    %p92 = scmp.eq.s32.totalorder %s10, 0
    %p93 = por %p91, %p92
    %p94 = scmp.ne.s32.totalorder %s86, %s88
    %p95 = scmp.eq.s32.totalorder %s15, 1
    %p96 = por %p94, %p95
    %p97 = scmp.ne.s32.totalorder %s88, %s89
    %p98 = scmp.eq.s32.totalorder %s15, 0
    %p99 = por %p97, %p98
    %p100 = scmp.ne.s32.totalorder %s88, %s89
    %p101 = scmp.eq.s32.totalorder %s16, 1
    %p102 = por %p100, %p101
    %p104 = scmp.ne.s32.totalorder %s89, %s103
    %p105 = scmp.eq.s32.totalorder %s16, 0
    %p106 = por %p104, %p105
    %s107 = ssub.s32 %s10, %s17
    %p108 = scmp.eq.s32.totalorder %s107, 0
    %s110 = sadd.s32 %s109, 1
    %s111 = scalar_select %p108, %s109, %s110
    %p114 = pneg %p108
    %p115 = scmp.eq.s32.totalorder %s10, 1
    %p116 = por %p114, %p115
    %p117 = scmp.ne.s32.totalorder %s109, %s112
    %p118 = scmp.eq.s32.totalorder %s10, 0
    %p119 = por %p117, %p118
    %p120 = scmp.ne.s32.totalorder %s109, %s112
    %p121 = scmp.eq.s32.totalorder %s15, 1
    %p122 = por %p120, %p121
    %p123 = scmp.ne.s32.totalorder %s112, %s113
    %p124 = scmp.eq.s32.totalorder %s15, 0
    %p125 = por %p123, %p124
    %p126 = scmp.ne.s32.totalorder %s112, %s113
    %p127 = scmp.eq.s32.totalorder %s16, 1
    %p128 = por %p126, %p127
    %p130 = scmp.ne.s32.totalorder %s113, %s129
    %p131 = scmp.eq.s32.totalorder %s16, 0
    %p132 = por %p130, %p131
    %p133 = scmp.le.s32.totalorder 1, %s10
    %p134 = scmp.lt.s32.totalorder %s10, 3
    %p135 = pnand %p133, %p134
    %p136 = pneg %p135
    // Predicated region
    $region9: #{tpu_custom_call.1} parent=5 // pred_check
      _
    $region10: #{tpu_custom_call.1} parent=5 // pred_check_branch
      %138 = sbr.rel (%p135) target = $region12
    $region11: #{tpu_custom_call.1} parent=5 // pred_region
      %s139 = ssub.s32 %s10, 1
      // Predicated region
      $region13: #{tpu_custom_call.1} parent=11 // pred_check
        %p140 = pneg %p57
      $region14: #{tpu_custom_call.1} parent=11 // pred_check_branch
        %142 = sbr.rel (%p140) target = $region16
      $region15: #{tpu_custom_call.1} parent=11 // pred_region
        _
      $region16: #{tpu_custom_call.1} parent=11 // pred_fallthru
        _
      // Predicated region
      $region17: #{tpu_custom_call.1} parent=11 // pred_check
        %p143 = pneg %p78
      $region18: #{tpu_custom_call.1} parent=11 // pred_check_branch
        %145 = sbr.rel (%p143) target = $region20
      $region19: #{tpu_custom_call.1} parent=11 // pred_region
        _
      $region20: #{tpu_custom_call.1} parent=11 // pred_fallthru
        _
      // Predicated region
      $region21: #{tpu_custom_call.1} parent=11 // pred_check
        %p146 = pneg %p99
      $region22: #{tpu_custom_call.1} parent=11 // pred_check_branch
        %148 = sbr.rel (%p146) target = $region24
      $region23: #{tpu_custom_call.1} parent=11 // pred_region
        _
      $region24: #{tpu_custom_call.1} parent=11 // pred_fallthru
        _
    $region12: #{tpu_custom_call.1} parent=5 // pred_fallthru
      _
    %p149 = scmp.lt.s32.totalorder %s10, 2
    // Predicated region
    $region25: #{tpu_custom_call.1} parent=5 // pred_check
      %p150 = pneg %p149
    $region26: #{tpu_custom_call.1} parent=5 // pred_check_branch
      %152 = sbr.rel (%p150) target = $region28
    $region27: #{tpu_custom_call.1} parent=5 // pred_region
      // Predicated region
      $region29: #{tpu_custom_call.1} parent=27 // pred_check
        %p153 = pneg %p30
      $region30: #{tpu_custom_call.1} parent=27 // pred_check_branch
        %155 = sbr.rel (%p153) target = $region32
      $region31: #{tpu_custom_call.1} parent=27 // pred_region
        %p156 = scmp.lt.s32.totalorder %s10, 1
        %s157 = scalar_select %p156, %s10, 1
        %s158 = smul.addr %s157, 32
        %s159 = smul.addr %s158, 4
        %s160 = scalar_lea.vmem %s0, %s159
      $region32: #{tpu_custom_call.1} parent=27 // pred_fallthru
        _
    $region28: #{tpu_custom_call.1} parent=5 // pred_fallthru
      _
    %p161 = scmp.le.s32.totalorder 1, %s10
    %p162 = scmp.lt.s32.totalorder %s10, 3
    %p163 = pnand %p161, %p162
    %p164 = pneg %p163
    // Predicated region
    $region33: #{tpu_custom_call.1} parent=5 // pred_check
      _
    $region34: #{tpu_custom_call.1} parent=5 // pred_check_branch
      %166 = sbr.rel (%p163) target = $region36
    $region35: #{tpu_custom_call.1} parent=5 // pred_region
      %s167 = ssub.s32 %s10, 1
      %p168 = scmp.lt.s32.totalorder %s15, 1
      %s169 = scalar_select %p168, %s15, 1
      %s170 = smul.addr %s169, 32
      %s171 = smul.addr %s170, 4
      %s172 = scalar_lea.vmem %s0, %s171
      %p173 = pneg %p36
      %p174 = pneg %p33
      %p175 = pneg %p57
      %p176 = pneg %p54
      %p177 = pneg %p78
      %p178 = pneg %p75
      %p179 = pneg %p99
      %p180 = pneg %p96
      %p181 = pneg %p125
      %p182 = pneg %p122
      %p183 = scmp.lt.s32.totalorder %s15, 1
      %s184 = scalar_select %p183, %s15, 1
      %s185 = smul.addr %s184, 32
      %s186 = smul.addr %s185, 4
      %s187 = scalar_lea.vmem %s4, %s186
      %p188 = scmp.lt.s32.totalorder %s15, 1
      %s189 = scalar_select %p188, %s15, 1
      %s190 = smul.addr %s189, 32
      %s191 = smul.addr %s190, 4
      %s192 = scalar_lea.vmem %s0, %s191
      %p193 = scmp.lt.s32.totalorder %s15, 1
      %s194 = scalar_select %p193, %s15, 1
      %s195 = smul.addr %s194, 32
      %s196 = smul.addr %s195, 4
      %s197 = scalar_lea.vmem %s4, %s196
      %v199 = vld [vmem:[%s3] sm:$0xff]
      %v200 = vld [vmem:[%s3 + $0x8] sm:$0xff]
      %v201 = vld [vmem:[%s3 + $0x10] sm:$0xff]
      %v202 = vld [vmem:[%s3 + $0x18] sm:$0xff]
      %v203 = vld [vmem:[%s3 + $0x20] sm:$0xff]
      %v204 = vld [vmem:[%s3 + $0x28] sm:$0xff]
      %v205 = vld [vmem:[%s3 + $0x30] sm:$0xff]
      %v206 = vld [vmem:[%s3 + $0x38] sm:$0xff]
      %v207 = vld [vmem:[%s3 + $0x40] sm:$0xff]
      %v208 = vld [vmem:[%s3 + $0x48] sm:$0xff]
      %v209 = vld [vmem:[%s3 + $0x50] sm:$0xff]
      %v210 = vld [vmem:[%s3 + $0x58] sm:$0xff]
      %v211 = vld [vmem:[%s3 + $0x60] sm:$0xff]
      %v212 = vld [vmem:[%s3 + $0x68] sm:$0xff]
      %v213 = vld [vmem:[%s3 + $0x70] sm:$0xff]
      %v214 = vld [vmem:[%s3 + $0x78] sm:$0xff]
      %v215 = vld [vmem:[%s3 + $0x80] sm:$0xff]
      %v216 = vld [vmem:[%s3 + $0x88] sm:$0xff]
      %v217 = vld [vmem:[%s3 + $0x90] sm:$0xff]
      %v218 = vld [vmem:[%s3 + $0x98] sm:$0xff]
      %v219 = vld [vmem:[%s3 + $0xa0] sm:$0xff]
      %v220 = vld [vmem:[%s3 + $0xa8] sm:$0xff]
      %v221 = vld [vmem:[%s3 + $0xb0] sm:$0xff]
      %v222 = vld [vmem:[%s3 + $0xb8] sm:$0xff]
      %v223 = vld [vmem:[%s3 + $0xc0] sm:$0xff]
      %v224 = vld [vmem:[%s3 + $0xc8] sm:$0xff]
      %v225 = vld [vmem:[%s3 + $0xd0] sm:$0xff]
      %v226 = vld [vmem:[%s3 + $0xd8] sm:$0xff]
      %v227 = vld [vmem:[%s3 + $0xe0] sm:$0xff]
      %v228 = vld [vmem:[%s3 + $0xe8] sm:$0xff]
      %v229 = vld [vmem:[%s3 + $0xf0] sm:$0xff]
      %v230 = vld [vmem:[%s3 + $0xf8] sm:$0xff]
      %vm231 = vcmask 19456
      %232 = vst.msk [vmem:[#allocation2] sm:$0xf] %vm231, 0
      %233 = vst.msk [vmem:[#allocation2 + $0x4] sm:$0xf] %vm231, 0
      %234 = vst.msk [vmem:[#allocation2 + $0x88] sm:$0xf] %vm231, 0
      %235 = vst.msk [vmem:[#allocation2 + $0x8c] sm:$0xf] %vm231, 0
      %236 = vst.msk [vmem:[#allocation3] sm:$0xf] %vm231, 0
      %237 = vst.msk [vmem:[#allocation3 + $0x4] sm:$0xf] %vm231, 0
      %238 = vst.msk [vmem:[#allocation3 + $0x88] sm:$0xf] %vm231, 0
      %239 = vst.msk [vmem:[#allocation3 + $0x8c] sm:$0xf] %vm231, 0
      %240 = vst.msk [vmem:[#allocation4] sm:$0xf] %vm231, 0
      %241 = vst.msk [vmem:[#allocation4 + $0x4] sm:$0xf] %vm231, 0
      %242 = vst.msk [vmem:[#allocation4 + $0x88] sm:$0xf] %vm231, 0
      %243 = vst.msk [vmem:[#allocation4 + $0x8c] sm:$0xf] %vm231, 0
      %v244 = vld [vmem:[%s192] sm:$0xf]
      %v245 = vld [vmem:[%s192 + $0x4] sm:$0xf]
      %v246 = vld [vmem:[%s192 + $0x8] sm:$0xf]
      %v247 = vld [vmem:[%s192 + $0xc] sm:$0xf]
      %v248 = vld [vmem:[%s192 + $0x10] sm:$0xf]
      %v249 = vld [vmem:[%s192 + $0x14] sm:$0xf]
      %v250 = vld [vmem:[%s192 + $0x18] sm:$0xf]
      %v251 = vld [vmem:[%s192 + $0x1c] sm:$0xf]
      %v252 = vld [vmem:[%s192 + $0x20] sm:$0xf]
      %v253 = vld [vmem:[%s192 + $0x24] sm:$0xf]
      %v254 = vld [vmem:[%s192 + $0x28] sm:$0xf]
      %v255 = vld [vmem:[%s192 + $0x2c] sm:$0xf]
      %v256 = vld [vmem:[%s192 + $0x30] sm:$0xf]
      %v257 = vld [vmem:[%s192 + $0x34] sm:$0xf]
      %v258 = vld [vmem:[%s192 + $0x38] sm:$0xf]
      %v259 = vld [vmem:[%s192 + $0x3c] sm:$0xf]
      %v260 = vld [vmem:[%s192 + $0x40] sm:$0xf]
      %v261 = vld [vmem:[%s192 + $0x44] sm:$0xf]
      %v262 = vld [vmem:[%s192 + $0x48] sm:$0xf]
      %v263 = vld [vmem:[%s192 + $0x4c] sm:$0xf]
      %v264 = vld [vmem:[%s192 + $0x50] sm:$0xf]
      %v265 = vld [vmem:[%s192 + $0x54] sm:$0xf]
      %v266 = vld [vmem:[%s192 + $0x58] sm:$0xf]
      %v267 = vld [vmem:[%s192 + $0x5c] sm:$0xf]
      %v268 = vld [vmem:[%s192 + $0x60] sm:$0xf]
      %v269 = vld [vmem:[%s192 + $0x64] sm:$0xf]
      %v270 = vld [vmem:[%s192 + $0x68] sm:$0xf]
      %v271 = vld [vmem:[%s192 + $0x6c] sm:$0xf]
      %v272 = vld [vmem:[%s192 + $0x70] sm:$0xf]
      %v273 = vld [vmem:[%s192 + $0x74] sm:$0xf]
      %v274 = vld [vmem:[%s192 + $0x78] sm:$0xf]
      %v275 = vld [vmem:[%s192 + $0x7c] sm:$0xf]
      %v276 = vunpack.c.l.bf16 %v244
      %v277 = vunpack.c.l.bf16 %v245
      %v278 = vunpack.c.l.bf16 %v246
      %v279 = vunpack.c.l.bf16 %v247
      %v280 = vunpack.c.l.bf16 %v248
      %v281 = vunpack.c.l.bf16 %v249
      %v282 = vunpack.c.l.bf16 %v250
      %v283 = vunpack.c.l.bf16 %v251
      %v284 = vunpack.c.l.bf16 %v252
      %v285 = vunpack.c.l.bf16 %v253
      %v286 = vunpack.c.l.bf16 %v254
      %v287 = vunpack.c.l.bf16 %v255
      %v288 = vunpack.c.l.bf16 %v256
      %v289 = vunpack.c.l.bf16 %v257
      %v290 = vunpack.c.l.bf16 %v258
      %v291 = vunpack.c.l.bf16 %v259
      %v292 = vunpack.c.l.bf16 %v260
      %v293 = vunpack.c.l.bf16 %v261
      %v294 = vunpack.c.l.bf16 %v262
      %v295 = vunpack.c.l.bf16 %v263
      %v296 = vunpack.c.l.bf16 %v264
      %v297 = vunpack.c.l.bf16 %v265
      %v298 = vunpack.c.l.bf16 %v266
      %v299 = vunpack.c.l.bf16 %v267
      %v300 = vunpack.c.l.bf16 %v268
      %v301 = vunpack.c.l.bf16 %v269
      %v302 = vunpack.c.l.bf16 %v270
      %v303 = vunpack.c.l.bf16 %v271
      %v304 = vunpack.c.l.bf16 %v272
      %v305 = vunpack.c.l.bf16 %v273
      %v306 = vunpack.c.l.bf16 %v274
      %v307 = vunpack.c.l.bf16 %v275
      %309 = vset.pattern.permute.xlu0 0
      %310 = vperm.xlu0 %309, %v199
      %v311 = vpop.permute.xlu0 %310
      %314 = vset.pattern.permute.xlu0 0
      %315 = vperm.xlu0 %314, %v200
      %v316 = vpop.permute.xlu0 %315
      %319 = vset.pattern.permute.xlu0 0
      %320 = vperm.xlu0 %319, %v201
      %v321 = vpop.permute.xlu0 %320
      %324 = vset.pattern.permute.xlu0 0
      %325 = vperm.xlu0 %324, %v202
      %v326 = vpop.permute.xlu0 %325
      %329 = vset.pattern.permute.xlu0 0
      %330 = vperm.xlu0 %329, %v203
      %v331 = vpop.permute.xlu0 %330
      %334 = vset.pattern.permute.xlu0 0
      %335 = vperm.xlu0 %334, %v204
      %v336 = vpop.permute.xlu0 %335
      %339 = vset.pattern.permute.xlu0 0
      %340 = vperm.xlu0 %339, %v205
      %v341 = vpop.permute.xlu0 %340
      %344 = vset.pattern.permute.xlu0 0
      %345 = vperm.xlu0 %344, %v206
      %v346 = vpop.permute.xlu0 %345
      %349 = vset.pattern.permute.xlu0 0
      %350 = vperm.xlu0 %349, %v207
      %v351 = vpop.permute.xlu0 %350
      %354 = vset.pattern.permute.xlu0 0
      %355 = vperm.xlu0 %354, %v208
      %v356 = vpop.permute.xlu0 %355
      %359 = vset.pattern.permute.xlu0 0
      %360 = vperm.xlu0 %359, %v209
      %v361 = vpop.permute.xlu0 %360
      %364 = vset.pattern.permute.xlu0 0
      %365 = vperm.xlu0 %364, %v210
      %v366 = vpop.permute.xlu0 %365
      %369 = vset.pattern.permute.xlu0 0
      %370 = vperm.xlu0 %369, %v211
      %v371 = vpop.permute.xlu0 %370
      %374 = vset.pattern.permute.xlu0 0
      %375 = vperm.xlu0 %374, %v212
      %v376 = vpop.permute.xlu0 %375
      %379 = vset.pattern.permute.xlu0 0
      %380 = vperm.xlu0 %379, %v213
      %v381 = vpop.permute.xlu0 %380
      %384 = vset.pattern.permute.xlu0 0
      %385 = vperm.xlu0 %384, %v214
      %v386 = vpop.permute.xlu0 %385
      %389 = vset.pattern.permute.xlu0 0
      %390 = vperm.xlu0 %389, %v215
      %v391 = vpop.permute.xlu0 %390
      %394 = vset.pattern.permute.xlu0 0
      %395 = vperm.xlu0 %394, %v216
      %v396 = vpop.permute.xlu0 %395
      %399 = vset.pattern.permute.xlu0 0
      %400 = vperm.xlu0 %399, %v217
      %v401 = vpop.permute.xlu0 %400
      %404 = vset.pattern.permute.xlu0 0
      %405 = vperm.xlu0 %404, %v218
      %v406 = vpop.permute.xlu0 %405
      %409 = vset.pattern.permute.xlu0 0
      %410 = vperm.xlu0 %409, %v219
      %v411 = vpop.permute.xlu0 %410
      %414 = vset.pattern.permute.xlu0 0
      %415 = vperm.xlu0 %414, %v220
      %v416 = vpop.permute.xlu0 %415
      %419 = vset.pattern.permute.xlu0 0
      %420 = vperm.xlu0 %419, %v221
      %v421 = vpop.permute.xlu0 %420
      %424 = vset.pattern.permute.xlu0 0
      %425 = vperm.xlu0 %424, %v222
      %v426 = vpop.permute.xlu0 %425
      %429 = vset.pattern.permute.xlu0 0
      %430 = vperm.xlu0 %429, %v223
      %v431 = vpop.permute.xlu0 %430
      %434 = vset.pattern.permute.xlu0 0
      %435 = vperm.xlu0 %434, %v224
      %v436 = vpop.permute.xlu0 %435
      %439 = vset.pattern.permute.xlu0 0
      %440 = vperm.xlu0 %439, %v225
      %v441 = vpop.permute.xlu0 %440
      %444 = vset.pattern.permute.xlu0 0
      %445 = vperm.xlu0 %444, %v226
      %v446 = vpop.permute.xlu0 %445
      %449 = vset.pattern.permute.xlu0 0
      %450 = vperm.xlu0 %449, %v227
      %v451 = vpop.permute.xlu0 %450
      %454 = vset.pattern.permute.xlu0 0
      %455 = vperm.xlu0 %454, %v228
      %v456 = vpop.permute.xlu0 %455
      %459 = vset.pattern.permute.xlu0 0
      %460 = vperm.xlu0 %459, %v229
      %v461 = vpop.permute.xlu0 %460
      %464 = vset.pattern.permute.xlu0 0
      %465 = vperm.xlu0 %464, %v230
      %v466 = vpop.permute.xlu0 %465
      %v468 = vmul.f32 %v276, %v311
      %v469 = vmul.f32 %v277, %v316
      %v470 = vmul.f32 %v278, %v321
      %v471 = vmul.f32 %v279, %v326
      %v472 = vmul.f32 %v280, %v331
      %v473 = vmul.f32 %v281, %v336
      %v474 = vmul.f32 %v282, %v341
      %v475 = vmul.f32 %v283, %v346
      %v476 = vmul.f32 %v284, %v351
      %v477 = vmul.f32 %v285, %v356
      %v478 = vmul.f32 %v286, %v361
      %v479 = vmul.f32 %v287, %v366
      %v480 = vmul.f32 %v288, %v371
      %v481 = vmul.f32 %v289, %v376
      %v482 = vmul.f32 %v290, %v381
      %v483 = vmul.f32 %v291, %v386
      %v484 = vmul.f32 %v292, %v391
      %v485 = vmul.f32 %v293, %v396
      %v486 = vmul.f32 %v294, %v401
      %v487 = vmul.f32 %v295, %v406
      %v488 = vmul.f32 %v296, %v411
      %v489 = vmul.f32 %v297, %v416
      %v490 = vmul.f32 %v298, %v421
      %v491 = vmul.f32 %v299, %v426
      %v492 = vmul.f32 %v300, %v431
      %v493 = vmul.f32 %v301, %v436
      %v494 = vmul.f32 %v302, %v441
      %v495 = vmul.f32 %v303, %v446
      %v496 = vmul.f32 %v304, %v451
      %v497 = vmul.f32 %v305, %v456
      %v498 = vmul.f32 %v306, %v461
      %v499 = vmul.f32 %v307, %v466
      %vm532 = vcmask 1040384
      %v533 = vrot.slane %v468, 7
      %v534 = vrot.slane %v469, 7
      %v535 = vsel %vm532, %v533, %v534
      %v536 = vrot.slane %v470, 7
      %v537 = vsel %vm532, %v534, %v536
      %v538 = vrot.slane %v471, 7
      %v539 = vsel %vm532, %v536, %v538
      %v540 = vrot.slane %v472, 7
      %v541 = vsel %vm532, %v538, %v540
      %v542 = vrot.slane %v473, 7
      %v543 = vsel %vm532, %v540, %v542
      %v544 = vrot.slane %v474, 7
      %v545 = vsel %vm532, %v542, %v544
      %v546 = vrot.slane %v475, 7
      %v547 = vsel %vm532, %v544, %v546
      %v548 = vrot.slane %v476, 7
      %v549 = vsel %vm532, %v546, %v548
      %v550 = vrot.slane %v477, 7
      %v551 = vsel %vm532, %v548, %v550
      %v552 = vrot.slane %v478, 7
      %v553 = vsel %vm532, %v550, %v552
      %v554 = vrot.slane %v479, 7
      %v555 = vsel %vm532, %v552, %v554
      %v556 = vrot.slane %v480, 7
      %v557 = vsel %vm532, %v554, %v556
      %v558 = vrot.slane %v481, 7
      %v559 = vsel %vm532, %v556, %v558
      %v560 = vrot.slane %v482, 7
      %v561 = vsel %vm532, %v558, %v560
      %v562 = vrot.slane %v483, 7
      %v563 = vsel %vm532, %v560, %v562
      %v564 = vrot.slane %v484, 7
      %v565 = vsel %vm532, %v562, %v564
      %v566 = vrot.slane %v485, 7
      %v567 = vsel %vm532, %v564, %v566
      %v568 = vrot.slane %v486, 7
      %v569 = vsel %vm532, %v566, %v568
      %v570 = vrot.slane %v487, 7
      %v571 = vsel %vm532, %v568, %v570
      %v572 = vrot.slane %v488, 7
      %v573 = vsel %vm532, %v570, %v572
      %v574 = vrot.slane %v489, 7
      %v575 = vsel %vm532, %v572, %v574
      %v576 = vrot.slane %v490, 7
      %v577 = vsel %vm532, %v574, %v576
      %v578 = vrot.slane %v491, 7
      %v579 = vsel %vm532, %v576, %v578
      %v580 = vrot.slane %v492, 7
      %v581 = vsel %vm532, %v578, %v580
      %v582 = vrot.slane %v493, 7
      %v583 = vsel %vm532, %v580, %v582
      %v584 = vrot.slane %v494, 7
      %v585 = vsel %vm532, %v582, %v584
      %v586 = vrot.slane %v495, 7
      %v587 = vsel %vm532, %v584, %v586
      %v588 = vrot.slane %v496, 7
      %v589 = vsel %vm532, %v586, %v588
      %v590 = vrot.slane %v497, 7
      %v591 = vsel %vm532, %v588, %v590
      %v592 = vrot.slane %v498, 7
      %v593 = vsel %vm532, %v590, %v592
      %v594 = vrot.slane %v499, 7
      %v595 = vsel %vm532, %v592, %v594
      %v628 = vsel %vm532, 0.0, %v533
      %629 = vset.pattern.permute.xlu0 1
      %630 = vperm.xlu0 %629, %v199
      %v631 = vpop.permute.xlu0 %630
      %633 = vset.pattern.permute.xlu0 1
      %634 = vperm.xlu0 %633, %v200
      %v635 = vpop.permute.xlu0 %634
      %637 = vset.pattern.permute.xlu0 1
      %638 = vperm.xlu0 %637, %v201
      %v639 = vpop.permute.xlu0 %638
      %641 = vset.pattern.permute.xlu0 1
      %642 = vperm.xlu0 %641, %v202
      %v643 = vpop.permute.xlu0 %642
      %645 = vset.pattern.permute.xlu0 1
      %646 = vperm.xlu0 %645, %v203
      %v647 = vpop.permute.xlu0 %646
      %649 = vset.pattern.permute.xlu0 1
      %650 = vperm.xlu0 %649, %v204
      %v651 = vpop.permute.xlu0 %650
      %653 = vset.pattern.permute.xlu0 1
      %654 = vperm.xlu0 %653, %v205
      %v655 = vpop.permute.xlu0 %654
      %657 = vset.pattern.permute.xlu0 1
      %658 = vperm.xlu0 %657, %v206
      %v659 = vpop.permute.xlu0 %658
      %661 = vset.pattern.permute.xlu0 1
      %662 = vperm.xlu0 %661, %v207
      %v663 = vpop.permute.xlu0 %662
      %665 = vset.pattern.permute.xlu0 1
      %666 = vperm.xlu0 %665, %v208
      %v667 = vpop.permute.xlu0 %666
      %669 = vset.pattern.permute.xlu0 1
      %670 = vperm.xlu0 %669, %v209
      %v671 = vpop.permute.xlu0 %670
      %673 = vset.pattern.permute.xlu0 1
      %674 = vperm.xlu0 %673, %v210
      %v675 = vpop.permute.xlu0 %674
      %677 = vset.pattern.permute.xlu0 1
      %678 = vperm.xlu0 %677, %v211
      %v679 = vpop.permute.xlu0 %678
      %681 = vset.pattern.permute.xlu0 1
      %682 = vperm.xlu0 %681, %v212
      %v683 = vpop.permute.xlu0 %682
      %685 = vset.pattern.permute.xlu0 1
      %686 = vperm.xlu0 %685, %v213
      %v687 = vpop.permute.xlu0 %686
      %689 = vset.pattern.permute.xlu0 1
      %690 = vperm.xlu0 %689, %v214
      %v691 = vpop.permute.xlu0 %690
      %693 = vset.pattern.permute.xlu0 1
      %694 = vperm.xlu0 %693, %v215
      %v695 = vpop.permute.xlu0 %694
      %697 = vset.pattern.permute.xlu0 1
      %698 = vperm.xlu0 %697, %v216
      %v699 = vpop.permute.xlu0 %698
      %701 = vset.pattern.permute.xlu0 1
      %702 = vperm.xlu0 %701, %v217
      %v703 = vpop.permute.xlu0 %702
      %705 = vset.pattern.permute.xlu0 1
      %706 = vperm.xlu0 %705, %v218
      %v707 = vpop.permute.xlu0 %706
      %709 = vset.pattern.permute.xlu0 1
      %710 = vperm.xlu0 %709, %v219
      %v711 = vpop.permute.xlu0 %710
      %713 = vset.pattern.permute.xlu0 1
      %714 = vperm.xlu0 %713, %v220
      %v715 = vpop.permute.xlu0 %714
      %717 = vset.pattern.permute.xlu0 1
      %718 = vperm.xlu0 %717, %v221
      %v719 = vpop.permute.xlu0 %718
      %721 = vset.pattern.permute.xlu0 1
      %722 = vperm.xlu0 %721, %v222
      %v723 = vpop.permute.xlu0 %722
      %725 = vset.pattern.permute.xlu0 1
      %726 = vperm.xlu0 %725, %v223
      %v727 = vpop.permute.xlu0 %726
      %729 = vset.pattern.permute.xlu0 1
      %730 = vperm.xlu0 %729, %v224
      %v731 = vpop.permute.xlu0 %730
      %733 = vset.pattern.permute.xlu0 1
      %734 = vperm.xlu0 %733, %v225
      %v735 = vpop.permute.xlu0 %734
      %737 = vset.pattern.permute.xlu0 1
      %738 = vperm.xlu0 %737, %v226
      %v739 = vpop.permute.xlu0 %738
      %741 = vset.pattern.permute.xlu0 1
      %742 = vperm.xlu0 %741, %v227
      %v743 = vpop.permute.xlu0 %742
      %745 = vset.pattern.permute.xlu0 1
      %746 = vperm.xlu0 %745, %v228
      %v747 = vpop.permute.xlu0 %746
      %749 = vset.pattern.permute.xlu0 1
      %750 = vperm.xlu0 %749, %v229
      %v751 = vpop.permute.xlu0 %750
      %753 = vset.pattern.permute.xlu0 1
      %754 = vperm.xlu0 %753, %v230
      %v755 = vpop.permute.xlu0 %754
      %v757 = vmul.f32 %v276, %v631
      %v758 = vmul.f32 %v277, %v635
      %v759 = vmul.f32 %v278, %v639
      %v760 = vmul.f32 %v279, %v643
      %v761 = vmul.f32 %v280, %v647
      %v762 = vmul.f32 %v281, %v651
      %v763 = vmul.f32 %v282, %v655
      %v764 = vmul.f32 %v283, %v659
      %v765 = vmul.f32 %v284, %v663
      %v766 = vmul.f32 %v285, %v667
      %v767 = vmul.f32 %v286, %v671
      %v768 = vmul.f32 %v287, %v675
      %v769 = vmul.f32 %v288, %v679
      %v770 = vmul.f32 %v289, %v683
      %v771 = vmul.f32 %v290, %v687
      %v772 = vmul.f32 %v291, %v691
      %v773 = vmul.f32 %v292, %v695
      %v774 = vmul.f32 %v293, %v699
      %v775 = vmul.f32 %v294, %v703
      %v776 = vmul.f32 %v295, %v707
      %v777 = vmul.f32 %v296, %v711
      %v778 = vmul.f32 %v297, %v715
      %v779 = vmul.f32 %v298, %v719
      %v780 = vmul.f32 %v299, %v723
      %v781 = vmul.f32 %v300, %v727
      %v782 = vmul.f32 %v301, %v731
      %v783 = vmul.f32 %v302, %v735
      %v784 = vmul.f32 %v303, %v739
      %v785 = vmul.f32 %v304, %v743
      %v786 = vmul.f32 %v305, %v747
      %v787 = vmul.f32 %v306, %v751
      %v788 = vmul.f32 %v307, %v755
      %vm821 = vcmask 1046528
      %v822 = vrot.slane %v757, 1
      %v823 = vrot.slane %v758, 1
      %v824 = vsel %vm821, %v822, %v823
      %v825 = vrot.slane %v759, 1
      %v826 = vsel %vm821, %v823, %v825
      %v827 = vrot.slane %v760, 1
      %v828 = vsel %vm821, %v825, %v827
      %v829 = vrot.slane %v761, 1
      %v830 = vsel %vm821, %v827, %v829
      %v831 = vrot.slane %v762, 1
      %v832 = vsel %vm821, %v829, %v831
      %v833 = vrot.slane %v763, 1
      %v834 = vsel %vm821, %v831, %v833
      %v835 = vrot.slane %v764, 1
      %v836 = vsel %vm821, %v833, %v835
      %v837 = vrot.slane %v765, 1
      %v838 = vsel %vm821, %v835, %v837
      %v839 = vrot.slane %v766, 1
      %v840 = vsel %vm821, %v837, %v839
      %v841 = vrot.slane %v767, 1
      %v842 = vsel %vm821, %v839, %v841
      %v843 = vrot.slane %v768, 1
      %v844 = vsel %vm821, %v841, %v843
      %v845 = vrot.slane %v769, 1
      %v846 = vsel %vm821, %v843, %v845
      %v847 = vrot.slane %v770, 1
      %v848 = vsel %vm821, %v845, %v847
      %v849 = vrot.slane %v771, 1
      %v850 = vsel %vm821, %v847, %v849
      %v851 = vrot.slane %v772, 1
      %v852 = vsel %vm821, %v849, %v851
      %v853 = vrot.slane %v773, 1
      %v854 = vsel %vm821, %v851, %v853
      %v855 = vrot.slane %v774, 1
      %v856 = vsel %vm821, %v853, %v855
      %v857 = vrot.slane %v775, 1
      %v858 = vsel %vm821, %v855, %v857
      %v859 = vrot.slane %v776, 1
      %v860 = vsel %vm821, %v857, %v859
      %v861 = vrot.slane %v777, 1
      %v862 = vsel %vm821, %v859, %v861
      %v863 = vrot.slane %v778, 1
      %v864 = vsel %vm821, %v861, %v863
      %v865 = vrot.slane %v779, 1
      %v866 = vsel %vm821, %v863, %v865
      %v867 = vrot.slane %v780, 1
      %v868 = vsel %vm821, %v865, %v867
      %v869 = vrot.slane %v781, 1
      %v870 = vsel %vm821, %v867, %v869
      %v871 = vrot.slane %v782, 1
      %v872 = vsel %vm821, %v869, %v871
      %v873 = vrot.slane %v783, 1
      %v874 = vsel %vm821, %v871, %v873
      %v875 = vrot.slane %v784, 1
      %v876 = vsel %vm821, %v873, %v875
      %v877 = vrot.slane %v785, 1
      %v878 = vsel %vm821, %v875, %v877
      %v879 = vrot.slane %v786, 1
      %v880 = vsel %vm821, %v877, %v879
      %v881 = vrot.slane %v787, 1
      %v882 = vsel %vm821, %v879, %v881
      %v883 = vrot.slane %v788, 1
      %v884 = vsel %vm821, %v881, %v883
      %v917 = vsel %vm821, %v883, 0.0
      %918 = vst.msk [vmem:[#allocation3 + $0x8] sm:$0xf] %vm231, %v244
      %919 = vst.msk [vmem:[#allocation3 + $0xc] sm:$0xf] %vm231, %v245
      %920 = vst.msk [vmem:[#allocation3 + $0x10] sm:$0xf] %vm231, %v246
      %921 = vst.msk [vmem:[#allocation3 + $0x14] sm:$0xf] %vm231, %v247
      %922 = vst.msk [vmem:[#allocation3 + $0x18] sm:$0xf] %vm231, %v248
      %923 = vst.msk [vmem:[#allocation3 + $0x1c] sm:$0xf] %vm231, %v249
      %924 = vst.msk [vmem:[#allocation3 + $0x20] sm:$0xf] %vm231, %v250
      %925 = vst.msk [vmem:[#allocation3 + $0x24] sm:$0xf] %vm231, %v251
      %926 = vst.msk [vmem:[#allocation3 + $0x28] sm:$0xf] %vm231, %v252
      %927 = vst.msk [vmem:[#allocation3 + $0x2c] sm:$0xf] %vm231, %v253
      %928 = vst.msk [vmem:[#allocation3 + $0x30] sm:$0xf] %vm231, %v254
      %929 = vst.msk [vmem:[#allocation3 + $0x34] sm:$0xf] %vm231, %v255
      %930 = vst.msk [vmem:[#allocation3 + $0x38] sm:$0xf] %vm231, %v256
      %931 = vst.msk [vmem:[#allocation3 + $0x3c] sm:$0xf] %vm231, %v257
      %932 = vst.msk [vmem:[#allocation3 + $0x40] sm:$0xf] %vm231, %v258
      %933 = vst.msk [vmem:[#allocation3 + $0x44] sm:$0xf] %vm231, %v259
      %934 = vst.msk [vmem:[#allocation3 + $0x48] sm:$0xf] %vm231, %v260
      %935 = vst.msk [vmem:[#allocation3 + $0x4c] sm:$0xf] %vm231, %v261
      %936 = vst.msk [vmem:[#allocation3 + $0x50] sm:$0xf] %vm231, %v262
      %937 = vst.msk [vmem:[#allocation3 + $0x54] sm:$0xf] %vm231, %v263
      %938 = vst.msk [vmem:[#allocation3 + $0x58] sm:$0xf] %vm231, %v264
      %939 = vst.msk [vmem:[#allocation3 + $0x5c] sm:$0xf] %vm231, %v265
      %940 = vst.msk [vmem:[#allocation3 + $0x60] sm:$0xf] %vm231, %v266
      %941 = vst.msk [vmem:[#allocation3 + $0x64] sm:$0xf] %vm231, %v267
      %942 = vst.msk [vmem:[#allocation3 + $0x68] sm:$0xf] %vm231, %v268
      %943 = vst.msk [vmem:[#allocation3 + $0x6c] sm:$0xf] %vm231, %v269
      %944 = vst.msk [vmem:[#allocation3 + $0x70] sm:$0xf] %vm231, %v270
      %945 = vst.msk [vmem:[#allocation3 + $0x74] sm:$0xf] %vm231, %v271
      %946 = vst.msk [vmem:[#allocation3 + $0x78] sm:$0xf] %vm231, %v272
      %947 = vst.msk [vmem:[#allocation3 + $0x7c] sm:$0xf] %vm231, %v273
      %948 = vst.msk [vmem:[#allocation3 + $0x80] sm:$0xf] %vm231, %v274
      %949 = vst.msk [vmem:[#allocation3 + $0x84] sm:$0xf] %vm231, %v275
      %v950 = vpack.c.bf16 %v628, %v628
      %v951 = vpack.c.bf16 %v535, %v535
      %v952 = vpack.c.bf16 %v537, %v537
      %v953 = vpack.c.bf16 %v539, %v539
      %v954 = vpack.c.bf16 %v541, %v541
      %v955 = vpack.c.bf16 %v543, %v543
      %v956 = vpack.c.bf16 %v545, %v545
      %v957 = vpack.c.bf16 %v547, %v547
      %v958 = vpack.c.bf16 %v549, %v549
      %v959 = vpack.c.bf16 %v551, %v551
      %v960 = vpack.c.bf16 %v553, %v553
      %v961 = vpack.c.bf16 %v555, %v555
      %v962 = vpack.c.bf16 %v557, %v557
      %v963 = vpack.c.bf16 %v559, %v559
      %v964 = vpack.c.bf16 %v561, %v561
      %v965 = vpack.c.bf16 %v563, %v563
      %v966 = vpack.c.bf16 %v565, %v565
      %v967 = vpack.c.bf16 %v567, %v567
      %v968 = vpack.c.bf16 %v569, %v569
      %v969 = vpack.c.bf16 %v571, %v571
      %v970 = vpack.c.bf16 %v573, %v573
      %v971 = vpack.c.bf16 %v575, %v575
      %v972 = vpack.c.bf16 %v577, %v577
      %v973 = vpack.c.bf16 %v579, %v579
      %v974 = vpack.c.bf16 %v581, %v581
      %v975 = vpack.c.bf16 %v583, %v583
      %v976 = vpack.c.bf16 %v585, %v585
      %v977 = vpack.c.bf16 %v587, %v587
      %v978 = vpack.c.bf16 %v589, %v589
      %v979 = vpack.c.bf16 %v591, %v591
      %v980 = vpack.c.bf16 %v593, %v593
      %v981 = vpack.c.bf16 %v595, %v595
      %982 = vst.msk [vmem:[#allocation2 + $0x8] sm:$0xf] %vm231, %v950
      %983 = vst.msk [vmem:[#allocation2 + $0xc] sm:$0xf] %vm231, %v951
      %984 = vst.msk [vmem:[#allocation2 + $0x10] sm:$0xf] %vm231, %v952
      %985 = vst.msk [vmem:[#allocation2 + $0x14] sm:$0xf] %vm231, %v953
      %986 = vst.msk [vmem:[#allocation2 + $0x18] sm:$0xf] %vm231, %v954
      %987 = vst.msk [vmem:[#allocation2 + $0x1c] sm:$0xf] %vm231, %v955
      %988 = vst.msk [vmem:[#allocation2 + $0x20] sm:$0xf] %vm231, %v956
      %989 = vst.msk [vmem:[#allocation2 + $0x24] sm:$0xf] %vm231, %v957
      %990 = vst.msk [vmem:[#allocation2 + $0x28] sm:$0xf] %vm231, %v958
      %991 = vst.msk [vmem:[#allocation2 + $0x2c] sm:$0xf] %vm231, %v959
      %992 = vst.msk [vmem:[#allocation2 + $0x30] sm:$0xf] %vm231, %v960
      %993 = vst.msk [vmem:[#allocation2 + $0x34] sm:$0xf] %vm231, %v961
      %994 = vst.msk [vmem:[#allocation2 + $0x38] sm:$0xf] %vm231, %v962
      %995 = vst.msk [vmem:[#allocation2 + $0x3c] sm:$0xf] %vm231, %v963
      %996 = vst.msk [vmem:[#allocation2 + $0x40] sm:$0xf] %vm231, %v964
      %997 = vst.msk [vmem:[#allocation2 + $0x44] sm:$0xf] %vm231, %v965
      %998 = vst.msk [vmem:[#allocation2 + $0x48] sm:$0xf] %vm231, %v966
      %999 = vst.msk [vmem:[#allocation2 + $0x4c] sm:$0xf] %vm231, %v967
      %1000 = vst.msk [vmem:[#allocation2 + $0x50] sm:$0xf] %vm231, %v968
      %1001 = vst.msk [vmem:[#allocation2 + $0x54] sm:$0xf] %vm231, %v969
      %1002 = vst.msk [vmem:[#allocation2 + $0x58] sm:$0xf] %vm231, %v970
      %1003 = vst.msk [vmem:[#allocation2 + $0x5c] sm:$0xf] %vm231, %v971
      %1004 = vst.msk [vmem:[#allocation2 + $0x60] sm:$0xf] %vm231, %v972
      %1005 = vst.msk [vmem:[#allocation2 + $0x64] sm:$0xf] %vm231, %v973
      %1006 = vst.msk [vmem:[#allocation2 + $0x68] sm:$0xf] %vm231, %v974
      %1007 = vst.msk [vmem:[#allocation2 + $0x6c] sm:$0xf] %vm231, %v975
      %1008 = vst.msk [vmem:[#allocation2 + $0x70] sm:$0xf] %vm231, %v976
      %1009 = vst.msk [vmem:[#allocation2 + $0x74] sm:$0xf] %vm231, %v977
      %1010 = vst.msk [vmem:[#allocation2 + $0x78] sm:$0xf] %vm231, %v978
      %1011 = vst.msk [vmem:[#allocation2 + $0x7c] sm:$0xf] %vm231, %v979
      %1012 = vst.msk [vmem:[#allocation2 + $0x80] sm:$0xf] %vm231, %v980
      %1013 = vst.msk [vmem:[#allocation2 + $0x84] sm:$0xf] %vm231, %v981
      %v1014 = vpack.c.bf16 %v824, %v824
      %v1015 = vpack.c.bf16 %v826, %v826
      %v1016 = vpack.c.bf16 %v828, %v828
      %v1017 = vpack.c.bf16 %v830, %v830
      %v1018 = vpack.c.bf16 %v832, %v832
      %v1019 = vpack.c.bf16 %v834, %v834
      %v1020 = vpack.c.bf16 %v836, %v836
      %v1021 = vpack.c.bf16 %v838, %v838
      %v1022 = vpack.c.bf16 %v840, %v840
      %v1023 = vpack.c.bf16 %v842, %v842
      %v1024 = vpack.c.bf16 %v844, %v844
      %v1025 = vpack.c.bf16 %v846, %v846
      %v1026 = vpack.c.bf16 %v848, %v848
      %v1027 = vpack.c.bf16 %v850, %v850
      %v1028 = vpack.c.bf16 %v852, %v852
      %v1029 = vpack.c.bf16 %v854, %v854
      %v1030 = vpack.c.bf16 %v856, %v856
      %v1031 = vpack.c.bf16 %v858, %v858
      %v1032 = vpack.c.bf16 %v860, %v860
      %v1033 = vpack.c.bf16 %v862, %v862
      %v1034 = vpack.c.bf16 %v864, %v864
      %v1035 = vpack.c.bf16 %v866, %v866
      %v1036 = vpack.c.bf16 %v868, %v868
      %v1037 = vpack.c.bf16 %v870, %v870
      %v1038 = vpack.c.bf16 %v872, %v872
      %v1039 = vpack.c.bf16 %v874, %v874
      %v1040 = vpack.c.bf16 %v876, %v876
      %v1041 = vpack.c.bf16 %v878, %v878
      %v1042 = vpack.c.bf16 %v880, %v880
      %v1043 = vpack.c.bf16 %v882, %v882
      %v1044 = vpack.c.bf16 %v884, %v884
      %v1045 = vpack.c.bf16 %v917, %v917
      %1046 = vst.msk [vmem:[#allocation4 + $0x8] sm:$0xf] %vm231, %v1014
      %1047 = vst.msk [vmem:[#allocation4 + $0xc] sm:$0xf] %vm231, %v1015
      %1048 = vst.msk [vmem:[#allocation4 + $0x10] sm:$0xf] %vm231, %v1016
      %1049 = vst.msk [vmem:[#allocation4 + $0x14] sm:$0xf] %vm231, %v1017
      %1050 = vst.msk [vmem:[#allocation4 + $0x18] sm:$0xf] %vm231, %v1018
      %1051 = vst.msk [vmem:[#allocation4 + $0x1c] sm:$0xf] %vm231, %v1019
      %1052 = vst.msk [vmem:[#allocation4 + $0x20] sm:$0xf] %vm231, %v1020
      %1053 = vst.msk [vmem:[#allocation4 + $0x24] sm:$0xf] %vm231, %v1021
      %1054 = vst.msk [vmem:[#allocation4 + $0x28] sm:$0xf] %vm231, %v1022
      %1055 = vst.msk [vmem:[#allocation4 + $0x2c] sm:$0xf] %vm231, %v1023
      %1056 = vst.msk [vmem:[#allocation4 + $0x30] sm:$0xf] %vm231, %v1024
      %1057 = vst.msk [vmem:[#allocation4 + $0x34] sm:$0xf] %vm231, %v1025
      %1058 = vst.msk [vmem:[#allocation4 + $0x38] sm:$0xf] %vm231, %v1026
      %1059 = vst.msk [vmem:[#allocation4 + $0x3c] sm:$0xf] %vm231, %v1027
      %1060 = vst.msk [vmem:[#allocation4 + $0x40] sm:$0xf] %vm231, %v1028
      %1061 = vst.msk [vmem:[#allocation4 + $0x44] sm:$0xf] %vm231, %v1029
      %1062 = vst.msk [vmem:[#allocation4 + $0x48] sm:$0xf] %vm231, %v1030
      %1063 = vst.msk [vmem:[#allocation4 + $0x4c] sm:$0xf] %vm231, %v1031
      %1064 = vst.msk [vmem:[#allocation4 + $0x50] sm:$0xf] %vm231, %v1032
      %1065 = vst.msk [vmem:[#allocation4 + $0x54] sm:$0xf] %vm231, %v1033
      %1066 = vst.msk [vmem:[#allocation4 + $0x58] sm:$0xf] %vm231, %v1034
      %1067 = vst.msk [vmem:[#allocation4 + $0x5c] sm:$0xf] %vm231, %v1035
      %1068 = vst.msk [vmem:[#allocation4 + $0x60] sm:$0xf] %vm231, %v1036
      %1069 = vst.msk [vmem:[#allocation4 + $0x64] sm:$0xf] %vm231, %v1037
      %1070 = vst.msk [vmem:[#allocation4 + $0x68] sm:$0xf] %vm231, %v1038
      %1071 = vst.msk [vmem:[#allocation4 + $0x6c] sm:$0xf] %vm231, %v1039
      %1072 = vst.msk [vmem:[#allocation4 + $0x70] sm:$0xf] %vm231, %v1040
      %1073 = vst.msk [vmem:[#allocation4 + $0x74] sm:$0xf] %vm231, %v1041
      %1074 = vst.msk [vmem:[#allocation4 + $0x78] sm:$0xf] %vm231, %v1042
      %1075 = vst.msk [vmem:[#allocation4 + $0x7c] sm:$0xf] %vm231, %v1043
      %1076 = vst.msk [vmem:[#allocation4 + $0x80] sm:$0xf] %vm231, %v1044
      %1077 = vst.msk [vmem:[#allocation4 + $0x84] sm:$0xf] %vm231, %v1045
      %v1078 = vld [vmem:[#allocation2] sm:$0xf]
      %v1079 = vld [vmem:[#allocation2 + $0x4] sm:$0xf]
      %v1080 = vld [vmem:[#allocation2 + $0x8] sm:$0xf]
      %v1081 = vld [vmem:[#allocation2 + $0xc] sm:$0xf]
      %v1082 = vld [vmem:[#allocation2 + $0x10] sm:$0xf]
      %v1083 = vld [vmem:[#allocation2 + $0x14] sm:$0xf]
      %v1084 = vld [vmem:[#allocation2 + $0x18] sm:$0xf]
      %v1085 = vld [vmem:[#allocation2 + $0x1c] sm:$0xf]
      %v1086 = vld [vmem:[#allocation2 + $0x20] sm:$0xf]
      %v1087 = vld [vmem:[#allocation2 + $0x24] sm:$0xf]
      %v1088 = vld [vmem:[#allocation2 + $0x28] sm:$0xf]
      %v1089 = vld [vmem:[#allocation2 + $0x2c] sm:$0xf]
      %v1090 = vld [vmem:[#allocation2 + $0x30] sm:$0xf]
      %v1091 = vld [vmem:[#allocation2 + $0x34] sm:$0xf]
      %v1092 = vld [vmem:[#allocation2 + $0x38] sm:$0xf]
      %v1093 = vld [vmem:[#allocation2 + $0x3c] sm:$0xf]
      %v1094 = vld [vmem:[#allocation2 + $0x40] sm:$0xf]
      %v1095 = vld [vmem:[#allocation2 + $0x44] sm:$0xf]
      %v1096 = vld [vmem:[#allocation2 + $0x48] sm:$0xf]
      %v1097 = vld [vmem:[#allocation2 + $0x4c] sm:$0xf]
      %v1098 = vld [vmem:[#allocation2 + $0x50] sm:$0xf]
      %v1099 = vld [vmem:[#allocation2 + $0x54] sm:$0xf]
      %v1100 = vld [vmem:[#allocation2 + $0x58] sm:$0xf]
      %v1101 = vld [vmem:[#allocation2 + $0x5c] sm:$0xf]
      %v1102 = vld [vmem:[#allocation2 + $0x60] sm:$0xf]
      %v1103 = vld [vmem:[#allocation2 + $0x64] sm:$0xf]
      %v1104 = vld [vmem:[#allocation2 + $0x68] sm:$0xf]
      %v1105 = vld [vmem:[#allocation2 + $0x6c] sm:$0xf]
      %v1106 = vld [vmem:[#allocation2 + $0x70] sm:$0xf]
      %v1107 = vld [vmem:[#allocation2 + $0x74] sm:$0xf]
      %v1108 = vld [vmem:[#allocation2 + $0x78] sm:$0xf]
      %v1109 = vld [vmem:[#allocation2 + $0x7c] sm:$0xf]
      %v1110 = vld [vmem:[%s1] sm:$0x3]
      %v1111 = vld [vmem:[#allocation3] sm:$0xf]
      %v1112 = vld [vmem:[#allocation3 + $0x4] sm:$0xf]
      %v1113 = vld [vmem:[#allocation3 + $0x8] sm:$0xf]
      %v1114 = vld [vmem:[#allocation3 + $0xc] sm:$0xf]
      %v1115 = vld [vmem:[#allocation3 + $0x10] sm:$0xf]
      %v1116 = vld [vmem:[#allocation3 + $0x14] sm:$0xf]
      %v1117 = vld [vmem:[#allocation3 + $0x18] sm:$0xf]
      %v1118 = vld [vmem:[#allocation3 + $0x1c] sm:$0xf]
      %v1119 = vld [vmem:[#allocation3 + $0x20] sm:$0xf]
      %v1120 = vld [vmem:[#allocation3 + $0x24] sm:$0xf]
      %v1121 = vld [vmem:[#allocation3 + $0x28] sm:$0xf]
      %v1122 = vld [vmem:[#allocation3 + $0x2c] sm:$0xf]
      %v1123 = vld [vmem:[#allocation3 + $0x30] sm:$0xf]
      %v1124 = vld [vmem:[#allocation3 + $0x34] sm:$0xf]
      %v1125 = vld [vmem:[#allocation3 + $0x38] sm:$0xf]
      %v1126 = vld [vmem:[#allocation3 + $0x3c] sm:$0xf]
      %v1127 = vld [vmem:[#allocation3 + $0x40] sm:$0xf]
      %v1128 = vld [vmem:[#allocation3 + $0x44] sm:$0xf]
      %v1129 = vld [vmem:[#allocation3 + $0x48] sm:$0xf]
      %v1130 = vld [vmem:[#allocation3 + $0x4c] sm:$0xf]
      %v1131 = vld [vmem:[#allocation3 + $0x50] sm:$0xf]
      %v1132 = vld [vmem:[#allocation3 + $0x54] sm:$0xf]
      %v1133 = vld [vmem:[#allocation3 + $0x58] sm:$0xf]
      %v1134 = vld [vmem:[#allocation3 + $0x5c] sm:$0xf]
      %v1135 = vld [vmem:[#allocation3 + $0x60] sm:$0xf]
      %v1136 = vld [vmem:[#allocation3 + $0x64] sm:$0xf]
      %v1137 = vld [vmem:[#allocation3 + $0x68] sm:$0xf]
      %v1138 = vld [vmem:[#allocation3 + $0x6c] sm:$0xf]
      %v1139 = vld [vmem:[#allocation3 + $0x70] sm:$0xf]
      %v1140 = vld [vmem:[#allocation3 + $0x74] sm:$0xf]
      %v1141 = vld [vmem:[#allocation3 + $0x78] sm:$0xf]
      %v1142 = vld [vmem:[#allocation3 + $0x7c] sm:$0xf]
      %s1143 = scalar_lea.vmem %s1, 2
      %v1144 = vld [vmem:[%s1143] sm:$0x3]
      %v1177 = vunpack.c.l.b16 %v1111
      %v1178 = vunpack.c.l.b16 %v1112
      %v1179 = vunpack.c.l.b16 %v1113
      %v1180 = vunpack.c.l.b16 %v1114
      %v1181 = vunpack.c.l.b16 %v1115
      %v1182 = vunpack.c.l.b16 %v1116
      %v1183 = vunpack.c.l.b16 %v1117
      %v1184 = vunpack.c.l.b16 %v1118
      %v1185 = vunpack.c.l.b16 %v1119
      %v1186 = vunpack.c.l.b16 %v1120
      %v1187 = vunpack.c.l.b16 %v1121
      %v1188 = vunpack.c.l.b16 %v1122
      %v1189 = vunpack.c.l.b16 %v1123
      %v1190 = vunpack.c.l.b16 %v1124
      %v1191 = vunpack.c.l.b16 %v1125
      %v1192 = vunpack.c.l.b16 %v1126
      %v1193 = vunpack.c.l.b16 %v1127
      %v1194 = vunpack.c.l.b16 %v1128
      %v1195 = vunpack.c.l.b16 %v1129
      %v1196 = vunpack.c.l.b16 %v1130
      %v1197 = vunpack.c.l.b16 %v1131
      %v1198 = vunpack.c.l.b16 %v1132
      %v1199 = vunpack.c.l.b16 %v1133
      %v1200 = vunpack.c.l.b16 %v1134
      %v1201 = vunpack.c.l.b16 %v1135
      %v1202 = vunpack.c.l.b16 %v1136
      %v1203 = vunpack.c.l.b16 %v1137
      %v1204 = vunpack.c.l.b16 %v1138
      %v1205 = vunpack.c.l.b16 %v1139
      %v1206 = vunpack.c.l.b16 %v1140
      %v1207 = vunpack.c.l.b16 %v1141
      %v1208 = vunpack.c.l.b16 %v1142
      %v1209 = vpack.c.b16 %v1178, %v1177
      %v1210 = vpack.c.b16 %v1180, %v1179
      %v1211 = vpack.c.b16 %v1182, %v1181
      %v1212 = vpack.c.b16 %v1184, %v1183
      %v1213 = vpack.c.b16 %v1186, %v1185
      %v1214 = vpack.c.b16 %v1188, %v1187
      %v1215 = vpack.c.b16 %v1190, %v1189
      %v1216 = vpack.c.b16 %v1192, %v1191
      %v1217 = vpack.c.b16 %v1194, %v1193
      %v1218 = vpack.c.b16 %v1196, %v1195
      %v1219 = vpack.c.b16 %v1198, %v1197
      %v1220 = vpack.c.b16 %v1200, %v1199
      %v1221 = vpack.c.b16 %v1202, %v1201
      %v1222 = vpack.c.b16 %v1204, %v1203
      %v1223 = vpack.c.b16 %v1206, %v1205
      %v1224 = vpack.c.b16 %v1208, %v1207
      %vm1225 = vcmask 23552
      %v1227 = vsel %vm1225, %v1209, 0
      %v1230 = vsel %vm1225, %v1210, 0
      %v1233 = vsel %vm1225, %v1211, 0
      %v1236 = vsel %vm1225, %v1212, 0
      %v1239 = vsel %vm1225, %v1213, 0
      %v1242 = vsel %vm1225, %v1214, 0
      %v1245 = vsel %vm1225, %v1215, 0
      %v1248 = vsel %vm1225, %v1216, 0
      %v1251 = vsel %vm1225, %v1217, 0
      %v1254 = vsel %vm1225, %v1218, 0
      %v1257 = vsel %vm1225, %v1219, 0
      %v1260 = vsel %vm1225, %v1220, 0
      %v1263 = vsel %vm1225, %v1221, 0
      %v1266 = vsel %vm1225, %v1222, 0
      %v1269 = vsel %vm1225, %v1223, 0
      %v1272 = vsel %vm1225, %v1224, 0
      %vm1274 = vcmask 1041408
      %v1275 = vsel %vm532, 4294967295, 65535
      %v1276 = vsel %vm1274, %v1275, 0
      %v1278 = vand.u32 %v1144, %v1276
      %1280 = vmatpush.bf16.msra.mxu0 0
      %1281 = vmatpush.bf16.msra.mxu0 0
      %1282 = vmatpush.bf16.msra.mxu0 0
      %1283 = vmatpush.bf16.msra.mxu0 0
      %1284 = vmatpush.bf16.msra.mxu0 0
      %1285 = vmatpush.bf16.msra.mxu0 0
      %1286 = vmatpush.bf16.msra.mxu0 0
      %1287 = vmatpush.bf16.msra.mxu0 %v1278
      %1288 = vmatmul.bf16.gmra.mxu0 %v1227
      %v1289 = vpop.f32.mrf.mxu0
      %v1290 = vadd.f32 0.0, %v1289
      %v1291 = vpop.f32.mrf.mxu0
      %v1292 = vadd.f32 0.0, %v1291
      %1293 = vmatmul.bf16.gmra.mxu0 %v1230
      %v1294 = vpop.f32.mrf.mxu0
      %v1295 = vadd.f32 0.0, %v1294
      %v1296 = vpop.f32.mrf.mxu0
      %v1297 = vadd.f32 0.0, %v1296
      %1298 = vmatmul.bf16.gmra.mxu0 %v1233
      %v1299 = vpop.f32.mrf.mxu0
      %v1300 = vadd.f32 0.0, %v1299
      %v1301 = vpop.f32.mrf.mxu0
      %v1302 = vadd.f32 0.0, %v1301
      %1303 = vmatmul.bf16.gmra.mxu0 %v1236
      %v1304 = vpop.f32.mrf.mxu0
      %v1305 = vadd.f32 0.0, %v1304
      %v1306 = vpop.f32.mrf.mxu0
      %v1307 = vadd.f32 0.0, %v1306
      %1308 = vmatmul.bf16.gmra.mxu0 %v1239
      %v1309 = vpop.f32.mrf.mxu0
      %v1310 = vadd.f32 0.0, %v1309
      %v1311 = vpop.f32.mrf.mxu0
      %v1312 = vadd.f32 0.0, %v1311
      %1313 = vmatmul.bf16.gmra.mxu0 %v1242
      %v1314 = vpop.f32.mrf.mxu0
      %v1315 = vadd.f32 0.0, %v1314
      %v1316 = vpop.f32.mrf.mxu0
      %v1317 = vadd.f32 0.0, %v1316
      %1318 = vmatmul.bf16.gmra.mxu0 %v1245
      %v1319 = vpop.f32.mrf.mxu0
      %v1320 = vadd.f32 0.0, %v1319
      %v1321 = vpop.f32.mrf.mxu0
      %v1322 = vadd.f32 0.0, %v1321
      %1323 = vmatmul.bf16.gmra.mxu0 %v1248
      %v1324 = vpop.f32.mrf.mxu0
      %v1325 = vadd.f32 0.0, %v1324
      %v1326 = vpop.f32.mrf.mxu0
      %v1327 = vadd.f32 0.0, %v1326
      %1328 = vmatmul.bf16.gmra.mxu0 %v1251
      %v1329 = vpop.f32.mrf.mxu0
      %v1330 = vadd.f32 0.0, %v1329
      %v1331 = vpop.f32.mrf.mxu0
      %v1332 = vadd.f32 0.0, %v1331
      %1333 = vmatmul.bf16.gmra.mxu0 %v1254
      %v1334 = vpop.f32.mrf.mxu0
      %v1335 = vadd.f32 0.0, %v1334
      %v1336 = vpop.f32.mrf.mxu0
      %v1337 = vadd.f32 0.0, %v1336
      %1338 = vmatmul.bf16.gmra.mxu0 %v1257
      %v1339 = vpop.f32.mrf.mxu0
      %v1340 = vadd.f32 0.0, %v1339
      %v1341 = vpop.f32.mrf.mxu0
      %v1342 = vadd.f32 0.0, %v1341
      %1343 = vmatmul.bf16.gmra.mxu0 %v1260
      %v1344 = vpop.f32.mrf.mxu0
      %v1345 = vadd.f32 0.0, %v1344
      %v1346 = vpop.f32.mrf.mxu0
      %v1347 = vadd.f32 0.0, %v1346
      %1348 = vmatmul.bf16.gmra.mxu0 %v1263
      %v1349 = vpop.f32.mrf.mxu0
      %v1350 = vadd.f32 0.0, %v1349
      %v1351 = vpop.f32.mrf.mxu0
      %v1352 = vadd.f32 0.0, %v1351
      %1353 = vmatmul.bf16.gmra.mxu0 %v1266
      %v1354 = vpop.f32.mrf.mxu0
      %v1355 = vadd.f32 0.0, %v1354
      %v1356 = vpop.f32.mrf.mxu0
      %v1357 = vadd.f32 0.0, %v1356
      %1358 = vmatmul.bf16.gmra.mxu0 %v1269
      %v1359 = vpop.f32.mrf.mxu0
      %v1360 = vadd.f32 0.0, %v1359
      %v1361 = vpop.f32.mrf.mxu0
      %v1362 = vadd.f32 0.0, %v1361
      %1363 = vmatmul.bf16.gmra.mxu0 %v1272
      %v1364 = vpop.f32.mrf.mxu0
      %v1365 = vadd.f32 0.0, %v1364
      %v1366 = vpop.f32.mrf.mxu0
      %v1367 = vadd.f32 0.0, %v1366
      %1368 = vdwg.mxu0
      %v1401 = vunpack.c.l.b16 %v1078
      %v1402 = vunpack.c.l.b16 %v1079
      %v1403 = vunpack.c.l.b16 %v1080
      %v1404 = vunpack.c.l.b16 %v1081
      %v1405 = vunpack.c.l.b16 %v1082
      %v1406 = vunpack.c.l.b16 %v1083
      %v1407 = vunpack.c.l.b16 %v1084
      %v1408 = vunpack.c.l.b16 %v1085
      %v1409 = vunpack.c.l.b16 %v1086
      %v1410 = vunpack.c.l.b16 %v1087
      %v1411 = vunpack.c.l.b16 %v1088
      %v1412 = vunpack.c.l.b16 %v1089
      %v1413 = vunpack.c.l.b16 %v1090
      %v1414 = vunpack.c.l.b16 %v1091
      %v1415 = vunpack.c.l.b16 %v1092
      %v1416 = vunpack.c.l.b16 %v1093
      %v1417 = vunpack.c.l.b16 %v1094
      %v1418 = vunpack.c.l.b16 %v1095
      %v1419 = vunpack.c.l.b16 %v1096
      %v1420 = vunpack.c.l.b16 %v1097
      %v1421 = vunpack.c.l.b16 %v1098
      %v1422 = vunpack.c.l.b16 %v1099
      %v1423 = vunpack.c.l.b16 %v1100
      %v1424 = vunpack.c.l.b16 %v1101
      %v1425 = vunpack.c.l.b16 %v1102
      %v1426 = vunpack.c.l.b16 %v1103
      %v1427 = vunpack.c.l.b16 %v1104
      %v1428 = vunpack.c.l.b16 %v1105
      %v1429 = vunpack.c.l.b16 %v1106
      %v1430 = vunpack.c.l.b16 %v1107
      %v1431 = vunpack.c.l.b16 %v1108
      %v1432 = vunpack.c.l.b16 %v1109
      %v1433 = vpack.c.b16 %v1402, %v1401
      %v1434 = vpack.c.b16 %v1404, %v1403
      %v1435 = vpack.c.b16 %v1406, %v1405
      %v1436 = vpack.c.b16 %v1408, %v1407
      %v1437 = vpack.c.b16 %v1410, %v1409
      %v1438 = vpack.c.b16 %v1412, %v1411
      %v1439 = vpack.c.b16 %v1414, %v1413
      %v1440 = vpack.c.b16 %v1416, %v1415
      %v1441 = vpack.c.b16 %v1418, %v1417
      %v1442 = vpack.c.b16 %v1420, %v1419
      %v1443 = vpack.c.b16 %v1422, %v1421
      %v1444 = vpack.c.b16 %v1424, %v1423
      %v1445 = vpack.c.b16 %v1426, %v1425
      %v1446 = vpack.c.b16 %v1428, %v1427
      %v1447 = vpack.c.b16 %v1430, %v1429
      %v1448 = vpack.c.b16 %v1432, %v1431
      %v1450 = vsel %vm1225, %v1433, 0
      %v1453 = vsel %vm1225, %v1434, 0
      %v1456 = vsel %vm1225, %v1435, 0
      %v1459 = vsel %vm1225, %v1436, 0
      %v1462 = vsel %vm1225, %v1437, 0
      %v1465 = vsel %vm1225, %v1438, 0
      %v1468 = vsel %vm1225, %v1439, 0
      %v1471 = vsel %vm1225, %v1440, 0
      %v1474 = vsel %vm1225, %v1441, 0
      %v1477 = vsel %vm1225, %v1442, 0
      %v1480 = vsel %vm1225, %v1443, 0
      %v1483 = vsel %vm1225, %v1444, 0
      %v1486 = vsel %vm1225, %v1445, 0
      %v1489 = vsel %vm1225, %v1446, 0
      %v1492 = vsel %vm1225, %v1447, 0
      %v1495 = vsel %vm1225, %v1448, 0
      %v1498 = vand.u32 %v1110, %v1276
      %1500 = vmatpush.bf16.msra.mxu0 0
      %1501 = vmatpush.bf16.msra.mxu0 0
      %1502 = vmatpush.bf16.msra.mxu0 0
      %1503 = vmatpush.bf16.msra.mxu0 0
      %1504 = vmatpush.bf16.msra.mxu0 0
      %1505 = vmatpush.bf16.msra.mxu0 0
      %1506 = vmatpush.bf16.msra.mxu0 0
      %1507 = vmatpush.bf16.msra.mxu0 %v1498
      %1508 = vmatmul.bf16.gmra.mxu0 %v1450
      %v1509 = vpop.f32.mrf.mxu0
      %v1510 = vadd.f32 %v1290, %v1509
      %v1511 = vpop.f32.mrf.mxu0
      %v1512 = vadd.f32 %v1292, %v1511
      %1513 = vmatmul.bf16.gmra.mxu0 %v1453
      %v1514 = vpop.f32.mrf.mxu0
      %v1515 = vadd.f32 %v1295, %v1514
      %v1516 = vpop.f32.mrf.mxu0
      %v1517 = vadd.f32 %v1297, %v1516
      %1518 = vmatmul.bf16.gmra.mxu0 %v1456
      %v1519 = vpop.f32.mrf.mxu0
      %v1520 = vadd.f32 %v1300, %v1519
      %v1521 = vpop.f32.mrf.mxu0
      %v1522 = vadd.f32 %v1302, %v1521
      %1523 = vmatmul.bf16.gmra.mxu0 %v1459
      %v1524 = vpop.f32.mrf.mxu0
      %v1525 = vadd.f32 %v1305, %v1524
      %v1526 = vpop.f32.mrf.mxu0
      %v1527 = vadd.f32 %v1307, %v1526
      %1528 = vmatmul.bf16.gmra.mxu0 %v1462
      %v1529 = vpop.f32.mrf.mxu0
      %v1530 = vadd.f32 %v1310, %v1529
      %v1531 = vpop.f32.mrf.mxu0
      %v1532 = vadd.f32 %v1312, %v1531
      %1533 = vmatmul.bf16.gmra.mxu0 %v1465
      %v1534 = vpop.f32.mrf.mxu0
      %v1535 = vadd.f32 %v1315, %v1534
      %v1536 = vpop.f32.mrf.mxu0
      %v1537 = vadd.f32 %v1317, %v1536
      %1538 = vmatmul.bf16.gmra.mxu0 %v1468
      %v1539 = vpop.f32.mrf.mxu0
      %v1540 = vadd.f32 %v1320, %v1539
      %v1541 = vpop.f32.mrf.mxu0
      %v1542 = vadd.f32 %v1322, %v1541
      %1543 = vmatmul.bf16.gmra.mxu0 %v1471
      %v1544 = vpop.f32.mrf.mxu0
      %v1545 = vadd.f32 %v1325, %v1544
      %v1546 = vpop.f32.mrf.mxu0
      %v1547 = vadd.f32 %v1327, %v1546
      %1548 = vmatmul.bf16.gmra.mxu0 %v1474
      %v1549 = vpop.f32.mrf.mxu0
      %v1550 = vadd.f32 %v1330, %v1549
      %v1551 = vpop.f32.mrf.mxu0
      %v1552 = vadd.f32 %v1332, %v1551
      %1553 = vmatmul.bf16.gmra.mxu0 %v1477
      %v1554 = vpop.f32.mrf.mxu0
      %v1555 = vadd.f32 %v1335, %v1554
      %v1556 = vpop.f32.mrf.mxu0
      %v1557 = vadd.f32 %v1337, %v1556
      %1558 = vmatmul.bf16.gmra.mxu0 %v1480
      %v1559 = vpop.f32.mrf.mxu0
      %v1560 = vadd.f32 %v1340, %v1559
      %v1561 = vpop.f32.mrf.mxu0
      %v1562 = vadd.f32 %v1342, %v1561
      %1563 = vmatmul.bf16.gmra.mxu0 %v1483
      %v1564 = vpop.f32.mrf.mxu0
      %v1565 = vadd.f32 %v1345, %v1564
      %v1566 = vpop.f32.mrf.mxu0
      %v1567 = vadd.f32 %v1347, %v1566
      %1568 = vmatmul.bf16.gmra.mxu0 %v1486
      %v1569 = vpop.f32.mrf.mxu0
      %v1570 = vadd.f32 %v1350, %v1569
      %v1571 = vpop.f32.mrf.mxu0
      %v1572 = vadd.f32 %v1352, %v1571
      %1573 = vmatmul.bf16.gmra.mxu0 %v1489
      %v1574 = vpop.f32.mrf.mxu0
      %v1575 = vadd.f32 %v1355, %v1574
      %v1576 = vpop.f32.mrf.mxu0
      %v1577 = vadd.f32 %v1357, %v1576
      %1578 = vmatmul.bf16.gmra.mxu0 %v1492
      %v1579 = vpop.f32.mrf.mxu0
      %v1580 = vadd.f32 %v1360, %v1579
      %v1581 = vpop.f32.mrf.mxu0
      %v1582 = vadd.f32 %v1362, %v1581
      %1583 = vmatmul.bf16.gmra.mxu0 %v1495
      %v1584 = vpop.f32.mrf.mxu0
      %v1585 = vadd.f32 %v1365, %v1584
      %v1586 = vpop.f32.mrf.mxu0
      %v1587 = vadd.f32 %v1367, %v1586
      %1588 = vdwg.mxu0
      %v1589 = vld [vmem:[#allocation4] sm:$0xf]
      %v1590 = vld [vmem:[#allocation4 + $0x4] sm:$0xf]
      %v1591 = vld [vmem:[#allocation4 + $0x8] sm:$0xf]
      %v1592 = vld [vmem:[#allocation4 + $0xc] sm:$0xf]
      %v1593 = vld [vmem:[#allocation4 + $0x10] sm:$0xf]
      %v1594 = vld [vmem:[#allocation4 + $0x14] sm:$0xf]
      %v1595 = vld [vmem:[#allocation4 + $0x18] sm:$0xf]
      %v1596 = vld [vmem:[#allocation4 + $0x1c] sm:$0xf]
      %v1597 = vld [vmem:[#allocation4 + $0x20] sm:$0xf]
      %v1598 = vld [vmem:[#allocation4 + $0x24] sm:$0xf]
      %v1599 = vld [vmem:[#allocation4 + $0x28] sm:$0xf]
      %v1600 = vld [vmem:[#allocation4 + $0x2c] sm:$0xf]
      %v1601 = vld [vmem:[#allocation4 + $0x30] sm:$0xf]
      %v1602 = vld [vmem:[#allocation4 + $0x34] sm:$0xf]
      %v1603 = vld [vmem:[#allocation4 + $0x38] sm:$0xf]
      %v1604 = vld [vmem:[#allocation4 + $0x3c] sm:$0xf]
      %v1605 = vld [vmem:[#allocation4 + $0x40] sm:$0xf]
      %v1606 = vld [vmem:[#allocation4 + $0x44] sm:$0xf]
      %v1607 = vld [vmem:[#allocation4 + $0x48] sm:$0xf]
      %v1608 = vld [vmem:[#allocation4 + $0x4c] sm:$0xf]
      %v1609 = vld [vmem:[#allocation4 + $0x50] sm:$0xf]
      %v1610 = vld [vmem:[#allocation4 + $0x54] sm:$0xf]
      %v1611 = vld [vmem:[#allocation4 + $0x58] sm:$0xf]
      %v1612 = vld [vmem:[#allocation4 + $0x5c] sm:$0xf]
      %v1613 = vld [vmem:[#allocation4 + $0x60] sm:$0xf]
      %v1614 = vld [vmem:[#allocation4 + $0x64] sm:$0xf]
      %v1615 = vld [vmem:[#allocation4 + $0x68] sm:$0xf]
      %v1616 = vld [vmem:[#allocation4 + $0x6c] sm:$0xf]
      %v1617 = vld [vmem:[#allocation4 + $0x70] sm:$0xf]
      %v1618 = vld [vmem:[#allocation4 + $0x74] sm:$0xf]
      %v1619 = vld [vmem:[#allocation4 + $0x78] sm:$0xf]
      %v1620 = vld [vmem:[#allocation4 + $0x7c] sm:$0xf]
      %s1621 = scalar_lea.vmem %s1, 4
      %v1622 = vld [vmem:[%s1621] sm:$0x3]
      %v1655 = vunpack.c.l.b16 %v1589
      %v1656 = vunpack.c.l.b16 %v1590
      %v1657 = vunpack.c.l.b16 %v1591
      %v1658 = vunpack.c.l.b16 %v1592
      %v1659 = vunpack.c.l.b16 %v1593
      %v1660 = vunpack.c.l.b16 %v1594
      %v1661 = vunpack.c.l.b16 %v1595
      %v1662 = vunpack.c.l.b16 %v1596
      %v1663 = vunpack.c.l.b16 %v1597
      %v1664 = vunpack.c.l.b16 %v1598
      %v1665 = vunpack.c.l.b16 %v1599
      %v1666 = vunpack.c.l.b16 %v1600
      %v1667 = vunpack.c.l.b16 %v1601
      %v1668 = vunpack.c.l.b16 %v1602
      %v1669 = vunpack.c.l.b16 %v1603
      %v1670 = vunpack.c.l.b16 %v1604
      %v1671 = vunpack.c.l.b16 %v1605
      %v1672 = vunpack.c.l.b16 %v1606
      %v1673 = vunpack.c.l.b16 %v1607
      %v1674 = vunpack.c.l.b16 %v1608
      %v1675 = vunpack.c.l.b16 %v1609
      %v1676 = vunpack.c.l.b16 %v1610
      %v1677 = vunpack.c.l.b16 %v1611
      %v1678 = vunpack.c.l.b16 %v1612
      %v1679 = vunpack.c.l.b16 %v1613
      %v1680 = vunpack.c.l.b16 %v1614
      %v1681 = vunpack.c.l.b16 %v1615
      %v1682 = vunpack.c.l.b16 %v1616
      %v1683 = vunpack.c.l.b16 %v1617
      %v1684 = vunpack.c.l.b16 %v1618
      %v1685 = vunpack.c.l.b16 %v1619
      %v1686 = vunpack.c.l.b16 %v1620
      %v1687 = vpack.c.b16 %v1656, %v1655
      %v1688 = vpack.c.b16 %v1658, %v1657
      %v1689 = vpack.c.b16 %v1660, %v1659
      %v1690 = vpack.c.b16 %v1662, %v1661
      %v1691 = vpack.c.b16 %v1664, %v1663
      %v1692 = vpack.c.b16 %v1666, %v1665
      %v1693 = vpack.c.b16 %v1668, %v1667
      %v1694 = vpack.c.b16 %v1670, %v1669
      %v1695 = vpack.c.b16 %v1672, %v1671
      %v1696 = vpack.c.b16 %v1674, %v1673
      %v1697 = vpack.c.b16 %v1676, %v1675
      %v1698 = vpack.c.b16 %v1678, %v1677
      %v1699 = vpack.c.b16 %v1680, %v1679
      %v1700 = vpack.c.b16 %v1682, %v1681
      %v1701 = vpack.c.b16 %v1684, %v1683
      %v1702 = vpack.c.b16 %v1686, %v1685
      %v1704 = vsel %vm1225, %v1687, 0
      %v1707 = vsel %vm1225, %v1688, 0
      %v1710 = vsel %vm1225, %v1689, 0
      %v1713 = vsel %vm1225, %v1690, 0
      %v1716 = vsel %vm1225, %v1691, 0
      %v1719 = vsel %vm1225, %v1692, 0
      %v1722 = vsel %vm1225, %v1693, 0
      %v1725 = vsel %vm1225, %v1694, 0
      %v1728 = vsel %vm1225, %v1695, 0
      %v1731 = vsel %vm1225, %v1696, 0
      %v1734 = vsel %vm1225, %v1697, 0
      %v1737 = vsel %vm1225, %v1698, 0
      %v1740 = vsel %vm1225, %v1699, 0
      %v1743 = vsel %vm1225, %v1700, 0
      %v1746 = vsel %vm1225, %v1701, 0
      %v1749 = vsel %vm1225, %v1702, 0
      %v1752 = vand.u32 %v1622, %v1276
      %1754 = vmatpush.bf16.msra.mxu0 0
      %1755 = vmatpush.bf16.msra.mxu0 0
      %1756 = vmatpush.bf16.msra.mxu0 0
      %1757 = vmatpush.bf16.msra.mxu0 0
      %1758 = vmatpush.bf16.msra.mxu0 0
      %1759 = vmatpush.bf16.msra.mxu0 0
      %1760 = vmatpush.bf16.msra.mxu0 0
      %1761 = vmatpush.bf16.msra.mxu0 %v1752
      %1762 = vmatmul.bf16.gmra.mxu0 %v1704
      %v1763 = vpop.f32.mrf.mxu0
      %v1764 = vadd.f32 0.0, %v1763
      %v1765 = vpop.f32.mrf.mxu0
      %v1766 = vadd.f32 0.0, %v1765
      %1767 = vmatmul.bf16.gmra.mxu0 %v1707
      %v1768 = vpop.f32.mrf.mxu0
      %v1769 = vadd.f32 0.0, %v1768
      %v1770 = vpop.f32.mrf.mxu0
      %v1771 = vadd.f32 0.0, %v1770
      %1772 = vmatmul.bf16.gmra.mxu0 %v1710
      %v1773 = vpop.f32.mrf.mxu0
      %v1774 = vadd.f32 0.0, %v1773
      %v1775 = vpop.f32.mrf.mxu0
      %v1776 = vadd.f32 0.0, %v1775
      %1777 = vmatmul.bf16.gmra.mxu0 %v1713
      %v1778 = vpop.f32.mrf.mxu0
      %v1779 = vadd.f32 0.0, %v1778
      %v1780 = vpop.f32.mrf.mxu0
      %v1781 = vadd.f32 0.0, %v1780
      %1782 = vmatmul.bf16.gmra.mxu0 %v1716
      %v1783 = vpop.f32.mrf.mxu0
      %v1784 = vadd.f32 0.0, %v1783
      %v1785 = vpop.f32.mrf.mxu0
      %v1786 = vadd.f32 0.0, %v1785
      %1787 = vmatmul.bf16.gmra.mxu0 %v1719
      %v1788 = vpop.f32.mrf.mxu0
      %v1789 = vadd.f32 0.0, %v1788
      %v1790 = vpop.f32.mrf.mxu0
      %v1791 = vadd.f32 0.0, %v1790
      %1792 = vmatmul.bf16.gmra.mxu0 %v1722
      %v1793 = vpop.f32.mrf.mxu0
      %v1794 = vadd.f32 0.0, %v1793
      %v1795 = vpop.f32.mrf.mxu0
      %v1796 = vadd.f32 0.0, %v1795
      %1797 = vmatmul.bf16.gmra.mxu0 %v1725
      %v1798 = vpop.f32.mrf.mxu0
      %v1799 = vadd.f32 0.0, %v1798
      %v1800 = vpop.f32.mrf.mxu0
      %v1801 = vadd.f32 0.0, %v1800
      %1802 = vmatmul.bf16.gmra.mxu0 %v1728
      %v1803 = vpop.f32.mrf.mxu0
      %v1804 = vadd.f32 0.0, %v1803
      %v1805 = vpop.f32.mrf.mxu0
      %v1806 = vadd.f32 0.0, %v1805
      %1807 = vmatmul.bf16.gmra.mxu0 %v1731
      %v1808 = vpop.f32.mrf.mxu0
      %v1809 = vadd.f32 0.0, %v1808
      %v1810 = vpop.f32.mrf.mxu0
      %v1811 = vadd.f32 0.0, %v1810
      %1812 = vmatmul.bf16.gmra.mxu0 %v1734
      %v1813 = vpop.f32.mrf.mxu0
      %v1814 = vadd.f32 0.0, %v1813
      %v1815 = vpop.f32.mrf.mxu0
      %v1816 = vadd.f32 0.0, %v1815
      %1817 = vmatmul.bf16.gmra.mxu0 %v1737
      %v1818 = vpop.f32.mrf.mxu0
      %v1819 = vadd.f32 0.0, %v1818
      %v1820 = vpop.f32.mrf.mxu0
      %v1821 = vadd.f32 0.0, %v1820
      %1822 = vmatmul.bf16.gmra.mxu0 %v1740
      %v1823 = vpop.f32.mrf.mxu0
      %v1824 = vadd.f32 0.0, %v1823
      %v1825 = vpop.f32.mrf.mxu0
      %v1826 = vadd.f32 0.0, %v1825
      %1827 = vmatmul.bf16.gmra.mxu0 %v1743
      %v1828 = vpop.f32.mrf.mxu0
      %v1829 = vadd.f32 0.0, %v1828
      %v1830 = vpop.f32.mrf.mxu0
      %v1831 = vadd.f32 0.0, %v1830
      %1832 = vmatmul.bf16.gmra.mxu0 %v1746
      %v1833 = vpop.f32.mrf.mxu0
      %v1834 = vadd.f32 0.0, %v1833
      %v1835 = vpop.f32.mrf.mxu0
      %v1836 = vadd.f32 0.0, %v1835
      %1837 = vmatmul.bf16.gmra.mxu0 %v1749
      %v1838 = vpop.f32.mrf.mxu0
      %v1839 = vadd.f32 0.0, %v1838
      %v1840 = vpop.f32.mrf.mxu0
      %v1841 = vadd.f32 0.0, %v1840
      %1842 = vdwg.mxu0
      %v1843 = vadd.f32 %v1510, %v1764
      %v1844 = vadd.f32 %v1512, %v1766
      %v1845 = vadd.f32 %v1515, %v1769
      %v1846 = vadd.f32 %v1517, %v1771
      %v1847 = vadd.f32 %v1520, %v1774
      %v1848 = vadd.f32 %v1522, %v1776
      %v1849 = vadd.f32 %v1525, %v1779
      %v1850 = vadd.f32 %v1527, %v1781
      %v1851 = vadd.f32 %v1530, %v1784
      %v1852 = vadd.f32 %v1532, %v1786
      %v1853 = vadd.f32 %v1535, %v1789
      %v1854 = vadd.f32 %v1537, %v1791
      %v1855 = vadd.f32 %v1540, %v1794
      %v1856 = vadd.f32 %v1542, %v1796
      %v1857 = vadd.f32 %v1545, %v1799
      %v1858 = vadd.f32 %v1547, %v1801
      %v1859 = vadd.f32 %v1550, %v1804
      %v1860 = vadd.f32 %v1552, %v1806
      %v1861 = vadd.f32 %v1555, %v1809
      %v1862 = vadd.f32 %v1557, %v1811
      %v1863 = vadd.f32 %v1560, %v1814
      %v1864 = vadd.f32 %v1562, %v1816
      %v1865 = vadd.f32 %v1565, %v1819
      %v1866 = vadd.f32 %v1567, %v1821
      %v1867 = vadd.f32 %v1570, %v1824
      %v1868 = vadd.f32 %v1572, %v1826
      %v1869 = vadd.f32 %v1575, %v1829
      %v1870 = vadd.f32 %v1577, %v1831
      %v1871 = vadd.f32 %v1580, %v1834
      %v1872 = vadd.f32 %v1582, %v1836
      %v1873 = vadd.f32 %v1585, %v1839
      %v1874 = vadd.f32 %v1587, %v1841
      %v1875 = vld [vmem:[#allocation2 + $0x8] sm:$0xf]
      %v1876 = vld [vmem:[#allocation2 + $0xc] sm:$0xf]
      %v1877 = vld [vmem:[#allocation2 + $0x10] sm:$0xf]
      %v1878 = vld [vmem:[#allocation2 + $0x14] sm:$0xf]
      %v1879 = vld [vmem:[#allocation2 + $0x18] sm:$0xf]
      %v1880 = vld [vmem:[#allocation2 + $0x1c] sm:$0xf]
      %v1881 = vld [vmem:[#allocation2 + $0x20] sm:$0xf]
      %v1882 = vld [vmem:[#allocation2 + $0x24] sm:$0xf]
      %v1883 = vld [vmem:[#allocation2 + $0x28] sm:$0xf]
      %v1884 = vld [vmem:[#allocation2 + $0x2c] sm:$0xf]
      %v1885 = vld [vmem:[#allocation2 + $0x30] sm:$0xf]
      %v1886 = vld [vmem:[#allocation2 + $0x34] sm:$0xf]
      %v1887 = vld [vmem:[#allocation2 + $0x38] sm:$0xf]
      %v1888 = vld [vmem:[#allocation2 + $0x3c] sm:$0xf]
      %v1889 = vld [vmem:[#allocation2 + $0x40] sm:$0xf]
      %v1890 = vld [vmem:[#allocation2 + $0x44] sm:$0xf]
      %v1891 = vld [vmem:[#allocation2 + $0x48] sm:$0xf]
      %v1892 = vld [vmem:[#allocation2 + $0x4c] sm:$0xf]
      %v1893 = vld [vmem:[#allocation2 + $0x50] sm:$0xf]
      %v1894 = vld [vmem:[#allocation2 + $0x54] sm:$0xf]
      %v1895 = vld [vmem:[#allocation2 + $0x58] sm:$0xf]
      %v1896 = vld [vmem:[#allocation2 + $0x5c] sm:$0xf]
      %v1897 = vld [vmem:[#allocation2 + $0x60] sm:$0xf]
      %v1898 = vld [vmem:[#allocation2 + $0x64] sm:$0xf]
      %v1899 = vld [vmem:[#allocation2 + $0x68] sm:$0xf]
      %v1900 = vld [vmem:[#allocation2 + $0x6c] sm:$0xf]
      %v1901 = vld [vmem:[#allocation2 + $0x70] sm:$0xf]
      %v1902 = vld [vmem:[#allocation2 + $0x74] sm:$0xf]
      %v1903 = vld [vmem:[#allocation2 + $0x78] sm:$0xf]
      %v1904 = vld [vmem:[#allocation2 + $0x7c] sm:$0xf]
      %v1905 = vld [vmem:[#allocation2 + $0x80] sm:$0xf]
      %v1906 = vld [vmem:[#allocation2 + $0x84] sm:$0xf]
      %s1907 = scalar_lea.vmem %s1, 6
      %v1908 = vld [vmem:[%s1907] sm:$0x3]
      %v1941 = vunpack.c.l.b16 %v1875
      %v1942 = vunpack.c.l.b16 %v1876
      %v1943 = vunpack.c.l.b16 %v1877
      %v1944 = vunpack.c.l.b16 %v1878
      %v1945 = vunpack.c.l.b16 %v1879
      %v1946 = vunpack.c.l.b16 %v1880
      %v1947 = vunpack.c.l.b16 %v1881
      %v1948 = vunpack.c.l.b16 %v1882
      %v1949 = vunpack.c.l.b16 %v1883
      %v1950 = vunpack.c.l.b16 %v1884
      %v1951 = vunpack.c.l.b16 %v1885
      %v1952 = vunpack.c.l.b16 %v1886
      %v1953 = vunpack.c.l.b16 %v1887
      %v1954 = vunpack.c.l.b16 %v1888
      %v1955 = vunpack.c.l.b16 %v1889
      %v1956 = vunpack.c.l.b16 %v1890
      %v1957 = vunpack.c.l.b16 %v1891
      %v1958 = vunpack.c.l.b16 %v1892
      %v1959 = vunpack.c.l.b16 %v1893
      %v1960 = vunpack.c.l.b16 %v1894
      %v1961 = vunpack.c.l.b16 %v1895
      %v1962 = vunpack.c.l.b16 %v1896
      %v1963 = vunpack.c.l.b16 %v1897
      %v1964 = vunpack.c.l.b16 %v1898
      %v1965 = vunpack.c.l.b16 %v1899
      %v1966 = vunpack.c.l.b16 %v1900
      %v1967 = vunpack.c.l.b16 %v1901
      %v1968 = vunpack.c.l.b16 %v1902
      %v1969 = vunpack.c.l.b16 %v1903
      %v1970 = vunpack.c.l.b16 %v1904
      %v1971 = vunpack.c.l.b16 %v1905
      %v1972 = vunpack.c.l.b16 %v1906
      %v1973 = vpack.c.b16 %v1942, %v1941
      %v1974 = vpack.c.b16 %v1944, %v1943
      %v1975 = vpack.c.b16 %v1946, %v1945
      %v1976 = vpack.c.b16 %v1948, %v1947
      %v1977 = vpack.c.b16 %v1950, %v1949
      %v1978 = vpack.c.b16 %v1952, %v1951
      %v1979 = vpack.c.b16 %v1954, %v1953
      %v1980 = vpack.c.b16 %v1956, %v1955
      %v1981 = vpack.c.b16 %v1958, %v1957
      %v1982 = vpack.c.b16 %v1960, %v1959
      %v1983 = vpack.c.b16 %v1962, %v1961
      %v1984 = vpack.c.b16 %v1964, %v1963
      %v1985 = vpack.c.b16 %v1966, %v1965
      %v1986 = vpack.c.b16 %v1968, %v1967
      %v1987 = vpack.c.b16 %v1970, %v1969
      %v1988 = vpack.c.b16 %v1972, %v1971
      %v1990 = vsel %vm1225, %v1973, 0
      %v1993 = vsel %vm1225, %v1974, 0
      %v1996 = vsel %vm1225, %v1975, 0
      %v1999 = vsel %vm1225, %v1976, 0
      %v2002 = vsel %vm1225, %v1977, 0
      %v2005 = vsel %vm1225, %v1978, 0
      %v2008 = vsel %vm1225, %v1979, 0
      %v2011 = vsel %vm1225, %v1980, 0
      %v2014 = vsel %vm1225, %v1981, 0
      %v2017 = vsel %vm1225, %v1982, 0
      %v2020 = vsel %vm1225, %v1983, 0
      %v2023 = vsel %vm1225, %v1984, 0
      %v2026 = vsel %vm1225, %v1985, 0
      %v2029 = vsel %vm1225, %v1986, 0
      %v2032 = vsel %vm1225, %v1987, 0
      %v2035 = vsel %vm1225, %v1988, 0
      %v2038 = vand.u32 %v1908, %v1276
      %2040 = vmatpush.bf16.msra.mxu0 0
      %2041 = vmatpush.bf16.msra.mxu0 0
      %2042 = vmatpush.bf16.msra.mxu0 0
      %2043 = vmatpush.bf16.msra.mxu0 0
      %2044 = vmatpush.bf16.msra.mxu0 0
      %2045 = vmatpush.bf16.msra.mxu0 0
      %2046 = vmatpush.bf16.msra.mxu0 0
      %2047 = vmatpush.bf16.msra.mxu0 %v2038
      %2048 = vmatmul.bf16.gmra.mxu0 %v1990
      %v2049 = vpop.f32.mrf.mxu0
      %v2050 = vadd.f32 0.0, %v2049
      %v2051 = vpop.f32.mrf.mxu0
      %v2052 = vadd.f32 0.0, %v2051
      %2053 = vmatmul.bf16.gmra.mxu0 %v1993
      %v2054 = vpop.f32.mrf.mxu0
      %v2055 = vadd.f32 0.0, %v2054
      %v2056 = vpop.f32.mrf.mxu0
      %v2057 = vadd.f32 0.0, %v2056
      %2058 = vmatmul.bf16.gmra.mxu0 %v1996
      %v2059 = vpop.f32.mrf.mxu0
      %v2060 = vadd.f32 0.0, %v2059
      %v2061 = vpop.f32.mrf.mxu0
      %v2062 = vadd.f32 0.0, %v2061
      %2063 = vmatmul.bf16.gmra.mxu0 %v1999
      %v2064 = vpop.f32.mrf.mxu0
      %v2065 = vadd.f32 0.0, %v2064
      %v2066 = vpop.f32.mrf.mxu0
      %v2067 = vadd.f32 0.0, %v2066
      %2068 = vmatmul.bf16.gmra.mxu0 %v2002
      %v2069 = vpop.f32.mrf.mxu0
      %v2070 = vadd.f32 0.0, %v2069
      %v2071 = vpop.f32.mrf.mxu0
      %v2072 = vadd.f32 0.0, %v2071
      %2073 = vmatmul.bf16.gmra.mxu0 %v2005
      %v2074 = vpop.f32.mrf.mxu0
      %v2075 = vadd.f32 0.0, %v2074
      %v2076 = vpop.f32.mrf.mxu0
      %v2077 = vadd.f32 0.0, %v2076
      %2078 = vmatmul.bf16.gmra.mxu0 %v2008
      %v2079 = vpop.f32.mrf.mxu0
      %v2080 = vadd.f32 0.0, %v2079
      %v2081 = vpop.f32.mrf.mxu0
      %v2082 = vadd.f32 0.0, %v2081
      %2083 = vmatmul.bf16.gmra.mxu0 %v2011
      %v2084 = vpop.f32.mrf.mxu0
      %v2085 = vadd.f32 0.0, %v2084
      %v2086 = vpop.f32.mrf.mxu0
      %v2087 = vadd.f32 0.0, %v2086
      %2088 = vmatmul.bf16.gmra.mxu0 %v2014
      %v2089 = vpop.f32.mrf.mxu0
      %v2090 = vadd.f32 0.0, %v2089
      %v2091 = vpop.f32.mrf.mxu0
      %v2092 = vadd.f32 0.0, %v2091
      %2093 = vmatmul.bf16.gmra.mxu0 %v2017
      %v2094 = vpop.f32.mrf.mxu0
      %v2095 = vadd.f32 0.0, %v2094
      %v2096 = vpop.f32.mrf.mxu0
      %v2097 = vadd.f32 0.0, %v2096
      %2098 = vmatmul.bf16.gmra.mxu0 %v2020
      %v2099 = vpop.f32.mrf.mxu0
      %v2100 = vadd.f32 0.0, %v2099
      %v2101 = vpop.f32.mrf.mxu0
      %v2102 = vadd.f32 0.0, %v2101
      %2103 = vmatmul.bf16.gmra.mxu0 %v2023
      %v2104 = vpop.f32.mrf.mxu0
      %v2105 = vadd.f32 0.0, %v2104
      %v2106 = vpop.f32.mrf.mxu0
      %v2107 = vadd.f32 0.0, %v2106
      %2108 = vmatmul.bf16.gmra.mxu0 %v2026
      %v2109 = vpop.f32.mrf.mxu0
      %v2110 = vadd.f32 0.0, %v2109
      %v2111 = vpop.f32.mrf.mxu0
      %v2112 = vadd.f32 0.0, %v2111
      %2113 = vmatmul.bf16.gmra.mxu0 %v2029
      %v2114 = vpop.f32.mrf.mxu0
      %v2115 = vadd.f32 0.0, %v2114
      %v2116 = vpop.f32.mrf.mxu0
      %v2117 = vadd.f32 0.0, %v2116
      %2118 = vmatmul.bf16.gmra.mxu0 %v2032
      %v2119 = vpop.f32.mrf.mxu0
      %v2120 = vadd.f32 0.0, %v2119
      %v2121 = vpop.f32.mrf.mxu0
      %v2122 = vadd.f32 0.0, %v2121
      %2123 = vmatmul.bf16.gmra.mxu0 %v2035
      %v2124 = vpop.f32.mrf.mxu0
      %v2125 = vadd.f32 0.0, %v2124
      %v2126 = vpop.f32.mrf.mxu0
      %v2127 = vadd.f32 0.0, %v2126
      %2128 = vdwg.mxu0
      %v2129 = vadd.f32 %v1843, %v2050
      %v2130 = vadd.f32 %v1844, %v2052
      %v2131 = vadd.f32 %v1845, %v2055
      %v2132 = vadd.f32 %v1846, %v2057
      %v2133 = vadd.f32 %v1847, %v2060
      %v2134 = vadd.f32 %v1848, %v2062
      %v2135 = vadd.f32 %v1849, %v2065
      %v2136 = vadd.f32 %v1850, %v2067
      %v2137 = vadd.f32 %v1851, %v2070
      %v2138 = vadd.f32 %v1852, %v2072
      %v2139 = vadd.f32 %v1853, %v2075
      %v2140 = vadd.f32 %v1854, %v2077
      %v2141 = vadd.f32 %v1855, %v2080
      %v2142 = vadd.f32 %v1856, %v2082
      %v2143 = vadd.f32 %v1857, %v2085
      %v2144 = vadd.f32 %v1858, %v2087
      %v2145 = vadd.f32 %v1859, %v2090
      %v2146 = vadd.f32 %v1860, %v2092
      %v2147 = vadd.f32 %v1861, %v2095
      %v2148 = vadd.f32 %v1862, %v2097
      %v2149 = vadd.f32 %v1863, %v2100
      %v2150 = vadd.f32 %v1864, %v2102
      %v2151 = vadd.f32 %v1865, %v2105
      %v2152 = vadd.f32 %v1866, %v2107
      %v2153 = vadd.f32 %v1867, %v2110
      %v2154 = vadd.f32 %v1868, %v2112
      %v2155 = vadd.f32 %v1869, %v2115
      %v2156 = vadd.f32 %v1870, %v2117
      %v2157 = vadd.f32 %v1871, %v2120
      %v2158 = vadd.f32 %v1872, %v2122
      %v2159 = vadd.f32 %v1873, %v2125
      %v2160 = vadd.f32 %v1874, %v2127
      %v2161 = vld [vmem:[#allocation3 + $0x8] sm:$0xf]
      %v2162 = vld [vmem:[#allocation3 + $0xc] sm:$0xf]
      %v2163 = vld [vmem:[#allocation3 + $0x10] sm:$0xf]
      %v2164 = vld [vmem:[#allocation3 + $0x14] sm:$0xf]
      %v2165 = vld [vmem:[#allocation3 + $0x18] sm:$0xf]
      %v2166 = vld [vmem:[#allocation3 + $0x1c] sm:$0xf]
      %v2167 = vld [vmem:[#allocation3 + $0x20] sm:$0xf]
      %v2168 = vld [vmem:[#allocation3 + $0x24] sm:$0xf]
      %v2169 = vld [vmem:[#allocation3 + $0x28] sm:$0xf]
      %v2170 = vld [vmem:[#allocation3 + $0x2c] sm:$0xf]
      %v2171 = vld [vmem:[#allocation3 + $0x30] sm:$0xf]
      %v2172 = vld [vmem:[#allocation3 + $0x34] sm:$0xf]
      %v2173 = vld [vmem:[#allocation3 + $0x38] sm:$0xf]
      %v2174 = vld [vmem:[#allocation3 + $0x3c] sm:$0xf]
      %v2175 = vld [vmem:[#allocation3 + $0x40] sm:$0xf]
      %v2176 = vld [vmem:[#allocation3 + $0x44] sm:$0xf]
      %v2177 = vld [vmem:[#allocation3 + $0x48] sm:$0xf]
      %v2178 = vld [vmem:[#allocation3 + $0x4c] sm:$0xf]
      %v2179 = vld [vmem:[#allocation3 + $0x50] sm:$0xf]
      %v2180 = vld [vmem:[#allocation3 + $0x54] sm:$0xf]
      %v2181 = vld [vmem:[#allocation3 + $0x58] sm:$0xf]
      %v2182 = vld [vmem:[#allocation3 + $0x5c] sm:$0xf]
      %v2183 = vld [vmem:[#allocation3 + $0x60] sm:$0xf]
      %v2184 = vld [vmem:[#allocation3 + $0x64] sm:$0xf]
      %v2185 = vld [vmem:[#allocation3 + $0x68] sm:$0xf]
      %v2186 = vld [vmem:[#allocation3 + $0x6c] sm:$0xf]
      %v2187 = vld [vmem:[#allocation3 + $0x70] sm:$0xf]
      %v2188 = vld [vmem:[#allocation3 + $0x74] sm:$0xf]
      %v2189 = vld [vmem:[#allocation3 + $0x78] sm:$0xf]
      %v2190 = vld [vmem:[#allocation3 + $0x7c] sm:$0xf]
      %v2191 = vld [vmem:[#allocation3 + $0x80] sm:$0xf]
      %v2192 = vld [vmem:[#allocation3 + $0x84] sm:$0xf]
      %s2193 = scalar_lea.vmem %s1, 8
      %v2194 = vld [vmem:[%s2193] sm:$0x3]
      %v2227 = vunpack.c.l.b16 %v2161
      %v2228 = vunpack.c.l.b16 %v2162
      %v2229 = vunpack.c.l.b16 %v2163
      %v2230 = vunpack.c.l.b16 %v2164
      %v2231 = vunpack.c.l.b16 %v2165
      %v2232 = vunpack.c.l.b16 %v2166
      %v2233 = vunpack.c.l.b16 %v2167
      %v2234 = vunpack.c.l.b16 %v2168
      %v2235 = vunpack.c.l.b16 %v2169
      %v2236 = vunpack.c.l.b16 %v2170
      %v2237 = vunpack.c.l.b16 %v2171
      %v2238 = vunpack.c.l.b16 %v2172
      %v2239 = vunpack.c.l.b16 %v2173
      %v2240 = vunpack.c.l.b16 %v2174
      %v2241 = vunpack.c.l.b16 %v2175
      %v2242 = vunpack.c.l.b16 %v2176
      %v2243 = vunpack.c.l.b16 %v2177
      %v2244 = vunpack.c.l.b16 %v2178
      %v2245 = vunpack.c.l.b16 %v2179
      %v2246 = vunpack.c.l.b16 %v2180
      %v2247 = vunpack.c.l.b16 %v2181
      %v2248 = vunpack.c.l.b16 %v2182
      %v2249 = vunpack.c.l.b16 %v2183
      %v2250 = vunpack.c.l.b16 %v2184
      %v2251 = vunpack.c.l.b16 %v2185
      %v2252 = vunpack.c.l.b16 %v2186
      %v2253 = vunpack.c.l.b16 %v2187
      %v2254 = vunpack.c.l.b16 %v2188
      %v2255 = vunpack.c.l.b16 %v2189
      %v2256 = vunpack.c.l.b16 %v2190
      %v2257 = vunpack.c.l.b16 %v2191
      %v2258 = vunpack.c.l.b16 %v2192
      %v2259 = vpack.c.b16 %v2228, %v2227
      %v2260 = vpack.c.b16 %v2230, %v2229
      %v2261 = vpack.c.b16 %v2232, %v2231
      %v2262 = vpack.c.b16 %v2234, %v2233
      %v2263 = vpack.c.b16 %v2236, %v2235
      %v2264 = vpack.c.b16 %v2238, %v2237
      %v2265 = vpack.c.b16 %v2240, %v2239
      %v2266 = vpack.c.b16 %v2242, %v2241
      %v2267 = vpack.c.b16 %v2244, %v2243
      %v2268 = vpack.c.b16 %v2246, %v2245
      %v2269 = vpack.c.b16 %v2248, %v2247
      %v2270 = vpack.c.b16 %v2250, %v2249
      %v2271 = vpack.c.b16 %v2252, %v2251
      %v2272 = vpack.c.b16 %v2254, %v2253
      %v2273 = vpack.c.b16 %v2256, %v2255
      %v2274 = vpack.c.b16 %v2258, %v2257
      %v2276 = vsel %vm1225, %v2259, 0
      %v2279 = vsel %vm1225, %v2260, 0
      %v2282 = vsel %vm1225, %v2261, 0
      %v2285 = vsel %vm1225, %v2262, 0
      %v2288 = vsel %vm1225, %v2263, 0
      %v2291 = vsel %vm1225, %v2264, 0
      %v2294 = vsel %vm1225, %v2265, 0
      %v2297 = vsel %vm1225, %v2266, 0
      %v2300 = vsel %vm1225, %v2267, 0
      %v2303 = vsel %vm1225, %v2268, 0
      %v2306 = vsel %vm1225, %v2269, 0
      %v2309 = vsel %vm1225, %v2270, 0
      %v2312 = vsel %vm1225, %v2271, 0
      %v2315 = vsel %vm1225, %v2272, 0
      %v2318 = vsel %vm1225, %v2273, 0
      %v2321 = vsel %vm1225, %v2274, 0
      %v2324 = vand.u32 %v2194, %v1276
      %2326 = vmatpush.bf16.msra.mxu0 0
      %2327 = vmatpush.bf16.msra.mxu0 0
      %2328 = vmatpush.bf16.msra.mxu0 0
      %2329 = vmatpush.bf16.msra.mxu0 0
      %2330 = vmatpush.bf16.msra.mxu0 0
      %2331 = vmatpush.bf16.msra.mxu0 0
      %2332 = vmatpush.bf16.msra.mxu0 0
      %2333 = vmatpush.bf16.msra.mxu0 %v2324
      %2334 = vmatmul.bf16.gmra.mxu0 %v2276
      %v2335 = vpop.f32.mrf.mxu0
      %v2336 = vadd.f32 0.0, %v2335
      %v2337 = vpop.f32.mrf.mxu0
      %v2338 = vadd.f32 0.0, %v2337
      %2339 = vmatmul.bf16.gmra.mxu0 %v2279
      %v2340 = vpop.f32.mrf.mxu0
      %v2341 = vadd.f32 0.0, %v2340
      %v2342 = vpop.f32.mrf.mxu0
      %v2343 = vadd.f32 0.0, %v2342
      %2344 = vmatmul.bf16.gmra.mxu0 %v2282
      %v2345 = vpop.f32.mrf.mxu0
      %v2346 = vadd.f32 0.0, %v2345
      %v2347 = vpop.f32.mrf.mxu0
      %v2348 = vadd.f32 0.0, %v2347
      %2349 = vmatmul.bf16.gmra.mxu0 %v2285
      %v2350 = vpop.f32.mrf.mxu0
      %v2351 = vadd.f32 0.0, %v2350
      %v2352 = vpop.f32.mrf.mxu0
      %v2353 = vadd.f32 0.0, %v2352
      %2354 = vmatmul.bf16.gmra.mxu0 %v2288
      %v2355 = vpop.f32.mrf.mxu0
      %v2356 = vadd.f32 0.0, %v2355
      %v2357 = vpop.f32.mrf.mxu0
      %v2358 = vadd.f32 0.0, %v2357
      %2359 = vmatmul.bf16.gmra.mxu0 %v2291
      %v2360 = vpop.f32.mrf.mxu0
      %v2361 = vadd.f32 0.0, %v2360
      %v2362 = vpop.f32.mrf.mxu0
      %v2363 = vadd.f32 0.0, %v2362
      %2364 = vmatmul.bf16.gmra.mxu0 %v2294
      %v2365 = vpop.f32.mrf.mxu0
      %v2366 = vadd.f32 0.0, %v2365
      %v2367 = vpop.f32.mrf.mxu0
      %v2368 = vadd.f32 0.0, %v2367
      %2369 = vmatmul.bf16.gmra.mxu0 %v2297
      %v2370 = vpop.f32.mrf.mxu0
      %v2371 = vadd.f32 0.0, %v2370
      %v2372 = vpop.f32.mrf.mxu0
      %v2373 = vadd.f32 0.0, %v2372
      %2374 = vmatmul.bf16.gmra.mxu0 %v2300
      %v2375 = vpop.f32.mrf.mxu0
      %v2376 = vadd.f32 0.0, %v2375
      %v2377 = vpop.f32.mrf.mxu0
      %v2378 = vadd.f32 0.0, %v2377
      %2379 = vmatmul.bf16.gmra.mxu0 %v2303
      %v2380 = vpop.f32.mrf.mxu0
      %v2381 = vadd.f32 0.0, %v2380
      %v2382 = vpop.f32.mrf.mxu0
      %v2383 = vadd.f32 0.0, %v2382
      %2384 = vmatmul.bf16.gmra.mxu0 %v2306
      %v2385 = vpop.f32.mrf.mxu0
      %v2386 = vadd.f32 0.0, %v2385
      %v2387 = vpop.f32.mrf.mxu0
      %v2388 = vadd.f32 0.0, %v2387
      %2389 = vmatmul.bf16.gmra.mxu0 %v2309
      %v2390 = vpop.f32.mrf.mxu0
      %v2391 = vadd.f32 0.0, %v2390
      %v2392 = vpop.f32.mrf.mxu0
      %v2393 = vadd.f32 0.0, %v2392
      %2394 = vmatmul.bf16.gmra.mxu0 %v2312
      %v2395 = vpop.f32.mrf.mxu0
      %v2396 = vadd.f32 0.0, %v2395
      %v2397 = vpop.f32.mrf.mxu0
      %v2398 = vadd.f32 0.0, %v2397
      %2399 = vmatmul.bf16.gmra.mxu0 %v2315
      %v2400 = vpop.f32.mrf.mxu0
      %v2401 = vadd.f32 0.0, %v2400
      %v2402 = vpop.f32.mrf.mxu0
      %v2403 = vadd.f32 0.0, %v2402
      %2404 = vmatmul.bf16.gmra.mxu0 %v2318
      %v2405 = vpop.f32.mrf.mxu0
      %v2406 = vadd.f32 0.0, %v2405
      %v2407 = vpop.f32.mrf.mxu0
      %v2408 = vadd.f32 0.0, %v2407
      %2409 = vmatmul.bf16.gmra.mxu0 %v2321
      %v2410 = vpop.f32.mrf.mxu0
      %v2411 = vadd.f32 0.0, %v2410
      %v2412 = vpop.f32.mrf.mxu0
      %v2413 = vadd.f32 0.0, %v2412
      %2414 = vdwg.mxu0
      %v2415 = vadd.f32 %v2129, %v2336
      %v2416 = vadd.f32 %v2130, %v2338
      %v2417 = vadd.f32 %v2131, %v2341
      %v2418 = vadd.f32 %v2132, %v2343
      %v2419 = vadd.f32 %v2133, %v2346
      %v2420 = vadd.f32 %v2134, %v2348
      %v2421 = vadd.f32 %v2135, %v2351
      %v2422 = vadd.f32 %v2136, %v2353
      %v2423 = vadd.f32 %v2137, %v2356
      %v2424 = vadd.f32 %v2138, %v2358
      %v2425 = vadd.f32 %v2139, %v2361
      %v2426 = vadd.f32 %v2140, %v2363
      %v2427 = vadd.f32 %v2141, %v2366
      %v2428 = vadd.f32 %v2142, %v2368
      %v2429 = vadd.f32 %v2143, %v2371
      %v2430 = vadd.f32 %v2144, %v2373
      %v2431 = vadd.f32 %v2145, %v2376
      %v2432 = vadd.f32 %v2146, %v2378
      %v2433 = vadd.f32 %v2147, %v2381
      %v2434 = vadd.f32 %v2148, %v2383
      %v2435 = vadd.f32 %v2149, %v2386
      %v2436 = vadd.f32 %v2150, %v2388
      %v2437 = vadd.f32 %v2151, %v2391
      %v2438 = vadd.f32 %v2152, %v2393
      %v2439 = vadd.f32 %v2153, %v2396
      %v2440 = vadd.f32 %v2154, %v2398
      %v2441 = vadd.f32 %v2155, %v2401
      %v2442 = vadd.f32 %v2156, %v2403
      %v2443 = vadd.f32 %v2157, %v2406
      %v2444 = vadd.f32 %v2158, %v2408
      %v2445 = vadd.f32 %v2159, %v2411
      %v2446 = vadd.f32 %v2160, %v2413
      %v2447 = vld [vmem:[#allocation4 + $0x8] sm:$0xf]
      %v2448 = vld [vmem:[#allocation4 + $0xc] sm:$0xf]
      %v2449 = vld [vmem:[#allocation4 + $0x10] sm:$0xf]
      %v2450 = vld [vmem:[#allocation4 + $0x14] sm:$0xf]
      %v2451 = vld [vmem:[#allocation4 + $0x18] sm:$0xf]
      %v2452 = vld [vmem:[#allocation4 + $0x1c] sm:$0xf]
      %v2453 = vld [vmem:[#allocation4 + $0x20] sm:$0xf]
      %v2454 = vld [vmem:[#allocation4 + $0x24] sm:$0xf]
      %v2455 = vld [vmem:[#allocation4 + $0x28] sm:$0xf]
      %v2456 = vld [vmem:[#allocation4 + $0x2c] sm:$0xf]
      %v2457 = vld [vmem:[#allocation4 + $0x30] sm:$0xf]
      %v2458 = vld [vmem:[#allocation4 + $0x34] sm:$0xf]
      %v2459 = vld [vmem:[#allocation4 + $0x38] sm:$0xf]
      %v2460 = vld [vmem:[#allocation4 + $0x3c] sm:$0xf]
      %v2461 = vld [vmem:[#allocation4 + $0x40] sm:$0xf]
      %v2462 = vld [vmem:[#allocation4 + $0x44] sm:$0xf]
      %v2463 = vld [vmem:[#allocation4 + $0x48] sm:$0xf]
      %v2464 = vld [vmem:[#allocation4 + $0x4c] sm:$0xf]
      %v2465 = vld [vmem:[#allocation4 + $0x50] sm:$0xf]
      %v2466 = vld [vmem:[#allocation4 + $0x54] sm:$0xf]
      %v2467 = vld [vmem:[#allocation4 + $0x58] sm:$0xf]
      %v2468 = vld [vmem:[#allocation4 + $0x5c] sm:$0xf]
      %v2469 = vld [vmem:[#allocation4 + $0x60] sm:$0xf]
      %v2470 = vld [vmem:[#allocation4 + $0x64] sm:$0xf]
      %v2471 = vld [vmem:[#allocation4 + $0x68] sm:$0xf]
      %v2472 = vld [vmem:[#allocation4 + $0x6c] sm:$0xf]
      %v2473 = vld [vmem:[#allocation4 + $0x70] sm:$0xf]
      %v2474 = vld [vmem:[#allocation4 + $0x74] sm:$0xf]
      %v2475 = vld [vmem:[#allocation4 + $0x78] sm:$0xf]
      %v2476 = vld [vmem:[#allocation4 + $0x7c] sm:$0xf]
      %v2477 = vld [vmem:[#allocation4 + $0x80] sm:$0xf]
      %v2478 = vld [vmem:[#allocation4 + $0x84] sm:$0xf]
      %s2479 = scalar_lea.vmem %s1, 10
      %v2480 = vld [vmem:[%s2479] sm:$0x3]
      %v2513 = vunpack.c.l.b16 %v2447
      %v2514 = vunpack.c.l.b16 %v2448
      %v2515 = vunpack.c.l.b16 %v2449
      %v2516 = vunpack.c.l.b16 %v2450
      %v2517 = vunpack.c.l.b16 %v2451
      %v2518 = vunpack.c.l.b16 %v2452
      %v2519 = vunpack.c.l.b16 %v2453
      %v2520 = vunpack.c.l.b16 %v2454
      %v2521 = vunpack.c.l.b16 %v2455
      %v2522 = vunpack.c.l.b16 %v2456
      %v2523 = vunpack.c.l.b16 %v2457
      %v2524 = vunpack.c.l.b16 %v2458
      %v2525 = vunpack.c.l.b16 %v2459
      %v2526 = vunpack.c.l.b16 %v2460
      %v2527 = vunpack.c.l.b16 %v2461
      %v2528 = vunpack.c.l.b16 %v2462
      %v2529 = vunpack.c.l.b16 %v2463
      %v2530 = vunpack.c.l.b16 %v2464
      %v2531 = vunpack.c.l.b16 %v2465
      %v2532 = vunpack.c.l.b16 %v2466
      %v2533 = vunpack.c.l.b16 %v2467
      %v2534 = vunpack.c.l.b16 %v2468
      %v2535 = vunpack.c.l.b16 %v2469
      %v2536 = vunpack.c.l.b16 %v2470
      %v2537 = vunpack.c.l.b16 %v2471
      %v2538 = vunpack.c.l.b16 %v2472
      %v2539 = vunpack.c.l.b16 %v2473
      %v2540 = vunpack.c.l.b16 %v2474
      %v2541 = vunpack.c.l.b16 %v2475
      %v2542 = vunpack.c.l.b16 %v2476
      %v2543 = vunpack.c.l.b16 %v2477
      %v2544 = vunpack.c.l.b16 %v2478
      %v2545 = vpack.c.b16 %v2514, %v2513
      %v2546 = vpack.c.b16 %v2516, %v2515
      %v2547 = vpack.c.b16 %v2518, %v2517
      %v2548 = vpack.c.b16 %v2520, %v2519
      %v2549 = vpack.c.b16 %v2522, %v2521
      %v2550 = vpack.c.b16 %v2524, %v2523
      %v2551 = vpack.c.b16 %v2526, %v2525
      %v2552 = vpack.c.b16 %v2528, %v2527
      %v2553 = vpack.c.b16 %v2530, %v2529
      %v2554 = vpack.c.b16 %v2532, %v2531
      %v2555 = vpack.c.b16 %v2534, %v2533
      %v2556 = vpack.c.b16 %v2536, %v2535
      %v2557 = vpack.c.b16 %v2538, %v2537
      %v2558 = vpack.c.b16 %v2540, %v2539
      %v2559 = vpack.c.b16 %v2542, %v2541
      %v2560 = vpack.c.b16 %v2544, %v2543
      %v2562 = vsel %vm1225, %v2545, 0
      %v2565 = vsel %vm1225, %v2546, 0
      %v2568 = vsel %vm1225, %v2547, 0
      %v2571 = vsel %vm1225, %v2548, 0
      %v2574 = vsel %vm1225, %v2549, 0
      %v2577 = vsel %vm1225, %v2550, 0
      %v2580 = vsel %vm1225, %v2551, 0
      %v2583 = vsel %vm1225, %v2552, 0
      %v2586 = vsel %vm1225, %v2553, 0
      %v2589 = vsel %vm1225, %v2554, 0
      %v2592 = vsel %vm1225, %v2555, 0
      %v2595 = vsel %vm1225, %v2556, 0
      %v2598 = vsel %vm1225, %v2557, 0
      %v2601 = vsel %vm1225, %v2558, 0
      %v2604 = vsel %vm1225, %v2559, 0
      %v2607 = vsel %vm1225, %v2560, 0
      %v2610 = vand.u32 %v2480, %v1276
      %2612 = vmatpush.bf16.msra.mxu0 0
      %2613 = vmatpush.bf16.msra.mxu0 0
      %2614 = vmatpush.bf16.msra.mxu0 0
      %2615 = vmatpush.bf16.msra.mxu0 0
      %2616 = vmatpush.bf16.msra.mxu0 0
      %2617 = vmatpush.bf16.msra.mxu0 0
      %2618 = vmatpush.bf16.msra.mxu0 0
      %2619 = vmatpush.bf16.msra.mxu0 %v2610
      %2620 = vmatmul.bf16.gmra.mxu0 %v2562
      %v2621 = vpop.f32.mrf.mxu0
      %v2622 = vadd.f32 0.0, %v2621
      %v2623 = vpop.f32.mrf.mxu0
      %v2624 = vadd.f32 0.0, %v2623
      %2625 = vmatmul.bf16.gmra.mxu0 %v2565
      %v2626 = vpop.f32.mrf.mxu0
      %v2627 = vadd.f32 0.0, %v2626
      %v2628 = vpop.f32.mrf.mxu0
      %v2629 = vadd.f32 0.0, %v2628
      %2630 = vmatmul.bf16.gmra.mxu0 %v2568
      %v2631 = vpop.f32.mrf.mxu0
      %v2632 = vadd.f32 0.0, %v2631
      %v2633 = vpop.f32.mrf.mxu0
      %v2634 = vadd.f32 0.0, %v2633
      %2635 = vmatmul.bf16.gmra.mxu0 %v2571
      %v2636 = vpop.f32.mrf.mxu0
      %v2637 = vadd.f32 0.0, %v2636
      %v2638 = vpop.f32.mrf.mxu0
      %v2639 = vadd.f32 0.0, %v2638
      %2640 = vmatmul.bf16.gmra.mxu0 %v2574
      %v2641 = vpop.f32.mrf.mxu0
      %v2642 = vadd.f32 0.0, %v2641
      %v2643 = vpop.f32.mrf.mxu0
      %v2644 = vadd.f32 0.0, %v2643
      %2645 = vmatmul.bf16.gmra.mxu0 %v2577
      %v2646 = vpop.f32.mrf.mxu0
      %v2647 = vadd.f32 0.0, %v2646
      %v2648 = vpop.f32.mrf.mxu0
      %v2649 = vadd.f32 0.0, %v2648
      %2650 = vmatmul.bf16.gmra.mxu0 %v2580
      %v2651 = vpop.f32.mrf.mxu0
      %v2652 = vadd.f32 0.0, %v2651
      %v2653 = vpop.f32.mrf.mxu0
      %v2654 = vadd.f32 0.0, %v2653
      %2655 = vmatmul.bf16.gmra.mxu0 %v2583
      %v2656 = vpop.f32.mrf.mxu0
      %v2657 = vadd.f32 0.0, %v2656
      %v2658 = vpop.f32.mrf.mxu0
      %v2659 = vadd.f32 0.0, %v2658
      %2660 = vmatmul.bf16.gmra.mxu0 %v2586
      %v2661 = vpop.f32.mrf.mxu0
      %v2662 = vadd.f32 0.0, %v2661
      %v2663 = vpop.f32.mrf.mxu0
      %v2664 = vadd.f32 0.0, %v2663
      %2665 = vmatmul.bf16.gmra.mxu0 %v2589
      %v2666 = vpop.f32.mrf.mxu0
      %v2667 = vadd.f32 0.0, %v2666
      %v2668 = vpop.f32.mrf.mxu0
      %v2669 = vadd.f32 0.0, %v2668
      %2670 = vmatmul.bf16.gmra.mxu0 %v2592
      %v2671 = vpop.f32.mrf.mxu0
      %v2672 = vadd.f32 0.0, %v2671
      %v2673 = vpop.f32.mrf.mxu0
      %v2674 = vadd.f32 0.0, %v2673
      %2675 = vmatmul.bf16.gmra.mxu0 %v2595
      %v2676 = vpop.f32.mrf.mxu0
      %v2677 = vadd.f32 0.0, %v2676
      %v2678 = vpop.f32.mrf.mxu0
      %v2679 = vadd.f32 0.0, %v2678
      %2680 = vmatmul.bf16.gmra.mxu0 %v2598
      %v2681 = vpop.f32.mrf.mxu0
      %v2682 = vadd.f32 0.0, %v2681
      %v2683 = vpop.f32.mrf.mxu0
      %v2684 = vadd.f32 0.0, %v2683
      %2685 = vmatmul.bf16.gmra.mxu0 %v2601
      %v2686 = vpop.f32.mrf.mxu0
      %v2687 = vadd.f32 0.0, %v2686
      %v2688 = vpop.f32.mrf.mxu0
      %v2689 = vadd.f32 0.0, %v2688
      %2690 = vmatmul.bf16.gmra.mxu0 %v2604
      %v2691 = vpop.f32.mrf.mxu0
      %v2692 = vadd.f32 0.0, %v2691
      %v2693 = vpop.f32.mrf.mxu0
      %v2694 = vadd.f32 0.0, %v2693
      %2695 = vmatmul.bf16.gmra.mxu0 %v2607
      %v2696 = vpop.f32.mrf.mxu0
      %v2697 = vadd.f32 0.0, %v2696
      %v2698 = vpop.f32.mrf.mxu0
      %v2699 = vadd.f32 0.0, %v2698
      %2700 = vdwg.mxu0
      %v2701 = vadd.f32 %v2415, %v2622
      %v2702 = vadd.f32 %v2416, %v2624
      %v2703 = vadd.f32 %v2417, %v2627
      %v2704 = vadd.f32 %v2418, %v2629
      %v2705 = vadd.f32 %v2419, %v2632
      %v2706 = vadd.f32 %v2420, %v2634
      %v2707 = vadd.f32 %v2421, %v2637
      %v2708 = vadd.f32 %v2422, %v2639
      %v2709 = vadd.f32 %v2423, %v2642
      %v2710 = vadd.f32 %v2424, %v2644
      %v2711 = vadd.f32 %v2425, %v2647
      %v2712 = vadd.f32 %v2426, %v2649
      %v2713 = vadd.f32 %v2427, %v2652
      %v2714 = vadd.f32 %v2428, %v2654
      %v2715 = vadd.f32 %v2429, %v2657
      %v2716 = vadd.f32 %v2430, %v2659
      %v2717 = vadd.f32 %v2431, %v2662
      %v2718 = vadd.f32 %v2432, %v2664
      %v2719 = vadd.f32 %v2433, %v2667
      %v2720 = vadd.f32 %v2434, %v2669
      %v2721 = vadd.f32 %v2435, %v2672
      %v2722 = vadd.f32 %v2436, %v2674
      %v2723 = vadd.f32 %v2437, %v2677
      %v2724 = vadd.f32 %v2438, %v2679
      %v2725 = vadd.f32 %v2439, %v2682
      %v2726 = vadd.f32 %v2440, %v2684
      %v2727 = vadd.f32 %v2441, %v2687
      %v2728 = vadd.f32 %v2442, %v2689
      %v2729 = vadd.f32 %v2443, %v2692
      %v2730 = vadd.f32 %v2444, %v2694
      %v2731 = vadd.f32 %v2445, %v2697
      %v2732 = vadd.f32 %v2446, %v2699
      %v2733 = vld [vmem:[#allocation2 + $0x10] sm:$0xf]
      %v2734 = vld [vmem:[#allocation2 + $0x14] sm:$0xf]
      %v2735 = vld [vmem:[#allocation2 + $0x18] sm:$0xf]
      %v2736 = vld [vmem:[#allocation2 + $0x1c] sm:$0xf]
      %v2737 = vld [vmem:[#allocation2 + $0x20] sm:$0xf]
      %v2738 = vld [vmem:[#allocation2 + $0x24] sm:$0xf]
      %v2739 = vld [vmem:[#allocation2 + $0x28] sm:$0xf]
      %v2740 = vld [vmem:[#allocation2 + $0x2c] sm:$0xf]
      %v2741 = vld [vmem:[#allocation2 + $0x30] sm:$0xf]
      %v2742 = vld [vmem:[#allocation2 + $0x34] sm:$0xf]
      %v2743 = vld [vmem:[#allocation2 + $0x38] sm:$0xf]
      %v2744 = vld [vmem:[#allocation2 + $0x3c] sm:$0xf]
      %v2745 = vld [vmem:[#allocation2 + $0x40] sm:$0xf]
      %v2746 = vld [vmem:[#allocation2 + $0x44] sm:$0xf]
      %v2747 = vld [vmem:[#allocation2 + $0x48] sm:$0xf]
      %v2748 = vld [vmem:[#allocation2 + $0x4c] sm:$0xf]
      %v2749 = vld [vmem:[#allocation2 + $0x50] sm:$0xf]
      %v2750 = vld [vmem:[#allocation2 + $0x54] sm:$0xf]
      %v2751 = vld [vmem:[#allocation2 + $0x58] sm:$0xf]
      %v2752 = vld [vmem:[#allocation2 + $0x5c] sm:$0xf]
      %v2753 = vld [vmem:[#allocation2 + $0x60] sm:$0xf]
      %v2754 = vld [vmem:[#allocation2 + $0x64] sm:$0xf]
      %v2755 = vld [vmem:[#allocation2 + $0x68] sm:$0xf]
      %v2756 = vld [vmem:[#allocation2 + $0x6c] sm:$0xf]
      %v2757 = vld [vmem:[#allocation2 + $0x70] sm:$0xf]
      %v2758 = vld [vmem:[#allocation2 + $0x74] sm:$0xf]
      %v2759 = vld [vmem:[#allocation2 + $0x78] sm:$0xf]
      %v2760 = vld [vmem:[#allocation2 + $0x7c] sm:$0xf]
      %v2761 = vld [vmem:[#allocation2 + $0x80] sm:$0xf]
      %v2762 = vld [vmem:[#allocation2 + $0x84] sm:$0xf]
      %v2763 = vld [vmem:[#allocation2 + $0x88] sm:$0xf]
      %v2764 = vld [vmem:[#allocation2 + $0x8c] sm:$0xf]
      %s2765 = scalar_lea.vmem %s1, 12
      %v2766 = vld [vmem:[%s2765] sm:$0x3]
      %v2799 = vunpack.c.l.b16 %v2733
      %v2800 = vunpack.c.l.b16 %v2734
      %v2801 = vunpack.c.l.b16 %v2735
      %v2802 = vunpack.c.l.b16 %v2736
      %v2803 = vunpack.c.l.b16 %v2737
      %v2804 = vunpack.c.l.b16 %v2738
      %v2805 = vunpack.c.l.b16 %v2739
      %v2806 = vunpack.c.l.b16 %v2740
      %v2807 = vunpack.c.l.b16 %v2741
      %v2808 = vunpack.c.l.b16 %v2742
      %v2809 = vunpack.c.l.b16 %v2743
      %v2810 = vunpack.c.l.b16 %v2744
      %v2811 = vunpack.c.l.b16 %v2745
      %v2812 = vunpack.c.l.b16 %v2746
      %v2813 = vunpack.c.l.b16 %v2747
      %v2814 = vunpack.c.l.b16 %v2748
      %v2815 = vunpack.c.l.b16 %v2749
      %v2816 = vunpack.c.l.b16 %v2750
      %v2817 = vunpack.c.l.b16 %v2751
      %v2818 = vunpack.c.l.b16 %v2752
      %v2819 = vunpack.c.l.b16 %v2753
      %v2820 = vunpack.c.l.b16 %v2754
      %v2821 = vunpack.c.l.b16 %v2755
      %v2822 = vunpack.c.l.b16 %v2756
      %v2823 = vunpack.c.l.b16 %v2757
      %v2824 = vunpack.c.l.b16 %v2758
      %v2825 = vunpack.c.l.b16 %v2759
      %v2826 = vunpack.c.l.b16 %v2760
      %v2827 = vunpack.c.l.b16 %v2761
      %v2828 = vunpack.c.l.b16 %v2762
      %v2829 = vunpack.c.l.b16 %v2763
      %v2830 = vunpack.c.l.b16 %v2764
      %v2831 = vpack.c.b16 %v2800, %v2799
      %v2832 = vpack.c.b16 %v2802, %v2801
      %v2833 = vpack.c.b16 %v2804, %v2803
      %v2834 = vpack.c.b16 %v2806, %v2805
      %v2835 = vpack.c.b16 %v2808, %v2807
      %v2836 = vpack.c.b16 %v2810, %v2809
      %v2837 = vpack.c.b16 %v2812, %v2811
      %v2838 = vpack.c.b16 %v2814, %v2813
      %v2839 = vpack.c.b16 %v2816, %v2815
      %v2840 = vpack.c.b16 %v2818, %v2817
      %v2841 = vpack.c.b16 %v2820, %v2819
      %v2842 = vpack.c.b16 %v2822, %v2821
      %v2843 = vpack.c.b16 %v2824, %v2823
      %v2844 = vpack.c.b16 %v2826, %v2825
      %v2845 = vpack.c.b16 %v2828, %v2827
      %v2846 = vpack.c.b16 %v2830, %v2829
      %v2848 = vsel %vm1225, %v2831, 0
      %v2851 = vsel %vm1225, %v2832, 0
      %v2854 = vsel %vm1225, %v2833, 0
      %v2857 = vsel %vm1225, %v2834, 0
      %v2860 = vsel %vm1225, %v2835, 0
      %v2863 = vsel %vm1225, %v2836, 0
      %v2866 = vsel %vm1225, %v2837, 0
      %v2869 = vsel %vm1225, %v2838, 0
      %v2872 = vsel %vm1225, %v2839, 0
      %v2875 = vsel %vm1225, %v2840, 0
      %v2878 = vsel %vm1225, %v2841, 0
      %v2881 = vsel %vm1225, %v2842, 0
      %v2884 = vsel %vm1225, %v2843, 0
      %v2887 = vsel %vm1225, %v2844, 0
      %v2890 = vsel %vm1225, %v2845, 0
      %v2893 = vsel %vm1225, %v2846, 0
      %v2896 = vand.u32 %v2766, %v1276
      %2898 = vmatpush.bf16.msra.mxu0 0
      %2899 = vmatpush.bf16.msra.mxu0 0
      %2900 = vmatpush.bf16.msra.mxu0 0
      %2901 = vmatpush.bf16.msra.mxu0 0
      %2902 = vmatpush.bf16.msra.mxu0 0
      %2903 = vmatpush.bf16.msra.mxu0 0
      %2904 = vmatpush.bf16.msra.mxu0 0
      %2905 = vmatpush.bf16.msra.mxu0 %v2896
      %2906 = vmatmul.bf16.gmra.mxu0 %v2848
      %v2907 = vpop.f32.mrf.mxu0
      %v2908 = vadd.f32 0.0, %v2907
      %v2909 = vpop.f32.mrf.mxu0
      %v2910 = vadd.f32 0.0, %v2909
      %2911 = vmatmul.bf16.gmra.mxu0 %v2851
      %v2912 = vpop.f32.mrf.mxu0
      %v2913 = vadd.f32 0.0, %v2912
      %v2914 = vpop.f32.mrf.mxu0
      %v2915 = vadd.f32 0.0, %v2914
      %2916 = vmatmul.bf16.gmra.mxu0 %v2854
      %v2917 = vpop.f32.mrf.mxu0
      %v2918 = vadd.f32 0.0, %v2917
      %v2919 = vpop.f32.mrf.mxu0
      %v2920 = vadd.f32 0.0, %v2919
      %2921 = vmatmul.bf16.gmra.mxu0 %v2857
      %v2922 = vpop.f32.mrf.mxu0
      %v2923 = vadd.f32 0.0, %v2922
      %v2924 = vpop.f32.mrf.mxu0
      %v2925 = vadd.f32 0.0, %v2924
      %2926 = vmatmul.bf16.gmra.mxu0 %v2860
      %v2927 = vpop.f32.mrf.mxu0
      %v2928 = vadd.f32 0.0, %v2927
      %v2929 = vpop.f32.mrf.mxu0
      %v2930 = vadd.f32 0.0, %v2929
      %2931 = vmatmul.bf16.gmra.mxu0 %v2863
      %v2932 = vpop.f32.mrf.mxu0
      %v2933 = vadd.f32 0.0, %v2932
      %v2934 = vpop.f32.mrf.mxu0
      %v2935 = vadd.f32 0.0, %v2934
      %2936 = vmatmul.bf16.gmra.mxu0 %v2866
      %v2937 = vpop.f32.mrf.mxu0
      %v2938 = vadd.f32 0.0, %v2937
      %v2939 = vpop.f32.mrf.mxu0
      %v2940 = vadd.f32 0.0, %v2939
      %2941 = vmatmul.bf16.gmra.mxu0 %v2869
      %v2942 = vpop.f32.mrf.mxu0
      %v2943 = vadd.f32 0.0, %v2942
      %v2944 = vpop.f32.mrf.mxu0
      %v2945 = vadd.f32 0.0, %v2944
      %2946 = vmatmul.bf16.gmra.mxu0 %v2872
      %v2947 = vpop.f32.mrf.mxu0
      %v2948 = vadd.f32 0.0, %v2947
      %v2949 = vpop.f32.mrf.mxu0
      %v2950 = vadd.f32 0.0, %v2949
      %2951 = vmatmul.bf16.gmra.mxu0 %v2875
      %v2952 = vpop.f32.mrf.mxu0
      %v2953 = vadd.f32 0.0, %v2952
      %v2954 = vpop.f32.mrf.mxu0
      %v2955 = vadd.f32 0.0, %v2954
      %2956 = vmatmul.bf16.gmra.mxu0 %v2878
      %v2957 = vpop.f32.mrf.mxu0
      %v2958 = vadd.f32 0.0, %v2957
      %v2959 = vpop.f32.mrf.mxu0
      %v2960 = vadd.f32 0.0, %v2959
      %2961 = vmatmul.bf16.gmra.mxu0 %v2881
      %v2962 = vpop.f32.mrf.mxu0
      %v2963 = vadd.f32 0.0, %v2962
      %v2964 = vpop.f32.mrf.mxu0
      %v2965 = vadd.f32 0.0, %v2964
      %2966 = vmatmul.bf16.gmra.mxu0 %v2884
      %v2967 = vpop.f32.mrf.mxu0
      %v2968 = vadd.f32 0.0, %v2967
      %v2969 = vpop.f32.mrf.mxu0
      %v2970 = vadd.f32 0.0, %v2969
      %2971 = vmatmul.bf16.gmra.mxu0 %v2887
      %v2972 = vpop.f32.mrf.mxu0
      %v2973 = vadd.f32 0.0, %v2972
      %v2974 = vpop.f32.mrf.mxu0
      %v2975 = vadd.f32 0.0, %v2974
      %2976 = vmatmul.bf16.gmra.mxu0 %v2890
      %v2977 = vpop.f32.mrf.mxu0
      %v2978 = vadd.f32 0.0, %v2977
      %v2979 = vpop.f32.mrf.mxu0
      %v2980 = vadd.f32 0.0, %v2979
      %2981 = vmatmul.bf16.gmra.mxu0 %v2893
      %v2982 = vpop.f32.mrf.mxu0
      %v2983 = vadd.f32 0.0, %v2982
      %v2984 = vpop.f32.mrf.mxu0
      %v2985 = vadd.f32 0.0, %v2984
      %2986 = vdwg.mxu0
      %v2987 = vadd.f32 %v2701, %v2908
      %v2988 = vadd.f32 %v2702, %v2910
      %v2989 = vadd.f32 %v2703, %v2913
      %v2990 = vadd.f32 %v2704, %v2915
      %v2991 = vadd.f32 %v2705, %v2918
      %v2992 = vadd.f32 %v2706, %v2920
      %v2993 = vadd.f32 %v2707, %v2923
      %v2994 = vadd.f32 %v2708, %v2925
      %v2995 = vadd.f32 %v2709, %v2928
      %v2996 = vadd.f32 %v2710, %v2930
      %v2997 = vadd.f32 %v2711, %v2933
      %v2998 = vadd.f32 %v2712, %v2935
      %v2999 = vadd.f32 %v2713, %v2938
      %v3000 = vadd.f32 %v2714, %v2940
      %v3001 = vadd.f32 %v2715, %v2943
      %v3002 = vadd.f32 %v2716, %v2945
      %v3003 = vadd.f32 %v2717, %v2948
      %v3004 = vadd.f32 %v2718, %v2950
      %v3005 = vadd.f32 %v2719, %v2953
      %v3006 = vadd.f32 %v2720, %v2955
      %v3007 = vadd.f32 %v2721, %v2958
      %v3008 = vadd.f32 %v2722, %v2960
      %v3009 = vadd.f32 %v2723, %v2963
      %v3010 = vadd.f32 %v2724, %v2965
      %v3011 = vadd.f32 %v2725, %v2968
      %v3012 = vadd.f32 %v2726, %v2970
      %v3013 = vadd.f32 %v2727, %v2973
      %v3014 = vadd.f32 %v2728, %v2975
      %v3015 = vadd.f32 %v2729, %v2978
      %v3016 = vadd.f32 %v2730, %v2980
      %v3017 = vadd.f32 %v2731, %v2983
      %v3018 = vadd.f32 %v2732, %v2985
      %v3019 = vld [vmem:[#allocation3 + $0x10] sm:$0xf]
      %v3020 = vld [vmem:[#allocation3 + $0x14] sm:$0xf]
      %v3021 = vld [vmem:[#allocation3 + $0x18] sm:$0xf]
      %v3022 = vld [vmem:[#allocation3 + $0x1c] sm:$0xf]
      %v3023 = vld [vmem:[#allocation3 + $0x20] sm:$0xf]
      %v3024 = vld [vmem:[#allocation3 + $0x24] sm:$0xf]
      %v3025 = vld [vmem:[#allocation3 + $0x28] sm:$0xf]
      %v3026 = vld [vmem:[#allocation3 + $0x2c] sm:$0xf]
      %v3027 = vld [vmem:[#allocation3 + $0x30] sm:$0xf]
      %v3028 = vld [vmem:[#allocation3 + $0x34] sm:$0xf]
      %v3029 = vld [vmem:[#allocation3 + $0x38] sm:$0xf]
      %v3030 = vld [vmem:[#allocation3 + $0x3c] sm:$0xf]
      %v3031 = vld [vmem:[#allocation3 + $0x40] sm:$0xf]
      %v3032 = vld [vmem:[#allocation3 + $0x44] sm:$0xf]
      %v3033 = vld [vmem:[#allocation3 + $0x48] sm:$0xf]
      %v3034 = vld [vmem:[#allocation3 + $0x4c] sm:$0xf]
      %v3035 = vld [vmem:[#allocation3 + $0x50] sm:$0xf]
      %v3036 = vld [vmem:[#allocation3 + $0x54] sm:$0xf]
      %v3037 = vld [vmem:[#allocation3 + $0x58] sm:$0xf]
      %v3038 = vld [vmem:[#allocation3 + $0x5c] sm:$0xf]
      %v3039 = vld [vmem:[#allocation3 + $0x60] sm:$0xf]
      %v3040 = vld [vmem:[#allocation3 + $0x64] sm:$0xf]
      %v3041 = vld [vmem:[#allocation3 + $0x68] sm:$0xf]
      %v3042 = vld [vmem:[#allocation3 + $0x6c] sm:$0xf]
      %v3043 = vld [vmem:[#allocation3 + $0x70] sm:$0xf]
      %v3044 = vld [vmem:[#allocation3 + $0x74] sm:$0xf]
      %v3045 = vld [vmem:[#allocation3 + $0x78] sm:$0xf]
      %v3046 = vld [vmem:[#allocation3 + $0x7c] sm:$0xf]
      %v3047 = vld [vmem:[#allocation3 + $0x80] sm:$0xf]
      %v3048 = vld [vmem:[#allocation3 + $0x84] sm:$0xf]
      %v3049 = vld [vmem:[#allocation3 + $0x88] sm:$0xf]
      %v3050 = vld [vmem:[#allocation3 + $0x8c] sm:$0xf]
      %s3051 = scalar_lea.vmem %s1, 14
      %v3052 = vld [vmem:[%s3051] sm:$0x3]
      %v3085 = vunpack.c.l.b16 %v3019
      %v3086 = vunpack.c.l.b16 %v3020
      %v3087 = vunpack.c.l.b16 %v3021
      %v3088 = vunpack.c.l.b16 %v3022
      %v3089 = vunpack.c.l.b16 %v3023
      %v3090 = vunpack.c.l.b16 %v3024
      %v3091 = vunpack.c.l.b16 %v3025
      %v3092 = vunpack.c.l.b16 %v3026
      %v3093 = vunpack.c.l.b16 %v3027
      %v3094 = vunpack.c.l.b16 %v3028
      %v3095 = vunpack.c.l.b16 %v3029
      %v3096 = vunpack.c.l.b16 %v3030
      %v3097 = vunpack.c.l.b16 %v3031
      %v3098 = vunpack.c.l.b16 %v3032
      %v3099 = vunpack.c.l.b16 %v3033
      %v3100 = vunpack.c.l.b16 %v3034
      %v3101 = vunpack.c.l.b16 %v3035
      %v3102 = vunpack.c.l.b16 %v3036
      %v3103 = vunpack.c.l.b16 %v3037
      %v3104 = vunpack.c.l.b16 %v3038
      %v3105 = vunpack.c.l.b16 %v3039
      %v3106 = vunpack.c.l.b16 %v3040
      %v3107 = vunpack.c.l.b16 %v3041
      %v3108 = vunpack.c.l.b16 %v3042
      %v3109 = vunpack.c.l.b16 %v3043
      %v3110 = vunpack.c.l.b16 %v3044
      %v3111 = vunpack.c.l.b16 %v3045
      %v3112 = vunpack.c.l.b16 %v3046
      %v3113 = vunpack.c.l.b16 %v3047
      %v3114 = vunpack.c.l.b16 %v3048
      %v3115 = vunpack.c.l.b16 %v3049
      %v3116 = vunpack.c.l.b16 %v3050
      %v3117 = vpack.c.b16 %v3086, %v3085
      %v3118 = vpack.c.b16 %v3088, %v3087
      %v3119 = vpack.c.b16 %v3090, %v3089
      %v3120 = vpack.c.b16 %v3092, %v3091
      %v3121 = vpack.c.b16 %v3094, %v3093
      %v3122 = vpack.c.b16 %v3096, %v3095
      %v3123 = vpack.c.b16 %v3098, %v3097
      %v3124 = vpack.c.b16 %v3100, %v3099
      %v3125 = vpack.c.b16 %v3102, %v3101
      %v3126 = vpack.c.b16 %v3104, %v3103
      %v3127 = vpack.c.b16 %v3106, %v3105
      %v3128 = vpack.c.b16 %v3108, %v3107
      %v3129 = vpack.c.b16 %v3110, %v3109
      %v3130 = vpack.c.b16 %v3112, %v3111
      %v3131 = vpack.c.b16 %v3114, %v3113
      %v3132 = vpack.c.b16 %v3116, %v3115
      %v3134 = vsel %vm1225, %v3117, 0
      %v3137 = vsel %vm1225, %v3118, 0
      %v3140 = vsel %vm1225, %v3119, 0
      %v3143 = vsel %vm1225, %v3120, 0
      %v3146 = vsel %vm1225, %v3121, 0
      %v3149 = vsel %vm1225, %v3122, 0
      %v3152 = vsel %vm1225, %v3123, 0
      %v3155 = vsel %vm1225, %v3124, 0
      %v3158 = vsel %vm1225, %v3125, 0
      %v3161 = vsel %vm1225, %v3126, 0
      %v3164 = vsel %vm1225, %v3127, 0
      %v3167 = vsel %vm1225, %v3128, 0
      %v3170 = vsel %vm1225, %v3129, 0
      %v3173 = vsel %vm1225, %v3130, 0
      %v3176 = vsel %vm1225, %v3131, 0
      %v3179 = vsel %vm1225, %v3132, 0
      %v3182 = vand.u32 %v3052, %v1276
      %3184 = vmatpush.bf16.msra.mxu0 0
      %3185 = vmatpush.bf16.msra.mxu0 0
      %3186 = vmatpush.bf16.msra.mxu0 0
      %3187 = vmatpush.bf16.msra.mxu0 0
      %3188 = vmatpush.bf16.msra.mxu0 0
      %3189 = vmatpush.bf16.msra.mxu0 0
      %3190 = vmatpush.bf16.msra.mxu0 0
      %3191 = vmatpush.bf16.msra.mxu0 %v3182
      %3192 = vmatmul.bf16.gmra.mxu0 %v3134
      %v3193 = vpop.f32.mrf.mxu0
      %v3194 = vadd.f32 0.0, %v3193
      %v3195 = vpop.f32.mrf.mxu0
      %v3196 = vadd.f32 0.0, %v3195
      %3197 = vmatmul.bf16.gmra.mxu0 %v3137
      %v3198 = vpop.f32.mrf.mxu0
      %v3199 = vadd.f32 0.0, %v3198
      %v3200 = vpop.f32.mrf.mxu0
      %v3201 = vadd.f32 0.0, %v3200
      %3202 = vmatmul.bf16.gmra.mxu0 %v3140
      %v3203 = vpop.f32.mrf.mxu0
      %v3204 = vadd.f32 0.0, %v3203
      %v3205 = vpop.f32.mrf.mxu0
      %v3206 = vadd.f32 0.0, %v3205
      %3207 = vmatmul.bf16.gmra.mxu0 %v3143
      %v3208 = vpop.f32.mrf.mxu0
      %v3209 = vadd.f32 0.0, %v3208
      %v3210 = vpop.f32.mrf.mxu0
      %v3211 = vadd.f32 0.0, %v3210
      %3212 = vmatmul.bf16.gmra.mxu0 %v3146
      %v3213 = vpop.f32.mrf.mxu0
      %v3214 = vadd.f32 0.0, %v3213
      %v3215 = vpop.f32.mrf.mxu0
      %v3216 = vadd.f32 0.0, %v3215
      %3217 = vmatmul.bf16.gmra.mxu0 %v3149
      %v3218 = vpop.f32.mrf.mxu0
      %v3219 = vadd.f32 0.0, %v3218
      %v3220 = vpop.f32.mrf.mxu0
      %v3221 = vadd.f32 0.0, %v3220
      %3222 = vmatmul.bf16.gmra.mxu0 %v3152
      %v3223 = vpop.f32.mrf.mxu0
      %v3224 = vadd.f32 0.0, %v3223
      %v3225 = vpop.f32.mrf.mxu0
      %v3226 = vadd.f32 0.0, %v3225
      %3227 = vmatmul.bf16.gmra.mxu0 %v3155
      %v3228 = vpop.f32.mrf.mxu0
      %v3229 = vadd.f32 0.0, %v3228
      %v3230 = vpop.f32.mrf.mxu0
      %v3231 = vadd.f32 0.0, %v3230
      %3232 = vmatmul.bf16.gmra.mxu0 %v3158
      %v3233 = vpop.f32.mrf.mxu0
      %v3234 = vadd.f32 0.0, %v3233
      %v3235 = vpop.f32.mrf.mxu0
      %v3236 = vadd.f32 0.0, %v3235
      %3237 = vmatmul.bf16.gmra.mxu0 %v3161
      %v3238 = vpop.f32.mrf.mxu0
      %v3239 = vadd.f32 0.0, %v3238
      %v3240 = vpop.f32.mrf.mxu0
      %v3241 = vadd.f32 0.0, %v3240
      %3242 = vmatmul.bf16.gmra.mxu0 %v3164
      %v3243 = vpop.f32.mrf.mxu0
      %v3244 = vadd.f32 0.0, %v3243
      %v3245 = vpop.f32.mrf.mxu0
      %v3246 = vadd.f32 0.0, %v3245
      %3247 = vmatmul.bf16.gmra.mxu0 %v3167
      %v3248 = vpop.f32.mrf.mxu0
      %v3249 = vadd.f32 0.0, %v3248
      %v3250 = vpop.f32.mrf.mxu0
      %v3251 = vadd.f32 0.0, %v3250
      %3252 = vmatmul.bf16.gmra.mxu0 %v3170
      %v3253 = vpop.f32.mrf.mxu0
      %v3254 = vadd.f32 0.0, %v3253
      %v3255 = vpop.f32.mrf.mxu0
      %v3256 = vadd.f32 0.0, %v3255
      %3257 = vmatmul.bf16.gmra.mxu0 %v3173
      %v3258 = vpop.f32.mrf.mxu0
      %v3259 = vadd.f32 0.0, %v3258
      %v3260 = vpop.f32.mrf.mxu0
      %v3261 = vadd.f32 0.0, %v3260
      %3262 = vmatmul.bf16.gmra.mxu0 %v3176
      %v3263 = vpop.f32.mrf.mxu0
      %v3264 = vadd.f32 0.0, %v3263
      %v3265 = vpop.f32.mrf.mxu0
      %v3266 = vadd.f32 0.0, %v3265
      %3267 = vmatmul.bf16.gmra.mxu0 %v3179
      %v3268 = vpop.f32.mrf.mxu0
      %v3269 = vadd.f32 0.0, %v3268
      %v3270 = vpop.f32.mrf.mxu0
      %v3271 = vadd.f32 0.0, %v3270
      %3272 = vdwg.mxu0
      %v3273 = vadd.f32 %v2987, %v3194
      %v3274 = vadd.f32 %v2988, %v3196
      %v3275 = vadd.f32 %v2989, %v3199
      %v3276 = vadd.f32 %v2990, %v3201
      %v3277 = vadd.f32 %v2991, %v3204
      %v3278 = vadd.f32 %v2992, %v3206
      %v3279 = vadd.f32 %v2993, %v3209
      %v3280 = vadd.f32 %v2994, %v3211
      %v3281 = vadd.f32 %v2995, %v3214
      %v3282 = vadd.f32 %v2996, %v3216
      %v3283 = vadd.f32 %v2997, %v3219
      %v3284 = vadd.f32 %v2998, %v3221
      %v3285 = vadd.f32 %v2999, %v3224
      %v3286 = vadd.f32 %v3000, %v3226
      %v3287 = vadd.f32 %v3001, %v3229
      %v3288 = vadd.f32 %v3002, %v3231
      %v3289 = vadd.f32 %v3003, %v3234
      %v3290 = vadd.f32 %v3004, %v3236
      %v3291 = vadd.f32 %v3005, %v3239
      %v3292 = vadd.f32 %v3006, %v3241
      %v3293 = vadd.f32 %v3007, %v3244
      %v3294 = vadd.f32 %v3008, %v3246
      %v3295 = vadd.f32 %v3009, %v3249
      %v3296 = vadd.f32 %v3010, %v3251
      %v3297 = vadd.f32 %v3011, %v3254
      %v3298 = vadd.f32 %v3012, %v3256
      %v3299 = vadd.f32 %v3013, %v3259
      %v3300 = vadd.f32 %v3014, %v3261
      %v3301 = vadd.f32 %v3015, %v3264
      %v3302 = vadd.f32 %v3016, %v3266
      %v3303 = vadd.f32 %v3017, %v3269
      %v3304 = vadd.f32 %v3018, %v3271
      %v3305 = vld [vmem:[#allocation4 + $0x10] sm:$0xf]
      %v3306 = vld [vmem:[#allocation4 + $0x14] sm:$0xf]
      %v3307 = vld [vmem:[#allocation4 + $0x18] sm:$0xf]
      %v3308 = vld [vmem:[#allocation4 + $0x1c] sm:$0xf]
      %v3309 = vld [vmem:[#allocation4 + $0x20] sm:$0xf]
      %v3310 = vld [vmem:[#allocation4 + $0x24] sm:$0xf]
      %v3311 = vld [vmem:[#allocation4 + $0x28] sm:$0xf]
      %v3312 = vld [vmem:[#allocation4 + $0x2c] sm:$0xf]
      %v3313 = vld [vmem:[#allocation4 + $0x30] sm:$0xf]
      %v3314 = vld [vmem:[#allocation4 + $0x34] sm:$0xf]
      %v3315 = vld [vmem:[#allocation4 + $0x38] sm:$0xf]
      %v3316 = vld [vmem:[#allocation4 + $0x3c] sm:$0xf]
      %v3317 = vld [vmem:[#allocation4 + $0x40] sm:$0xf]
      %v3318 = vld [vmem:[#allocation4 + $0x44] sm:$0xf]
      %v3319 = vld [vmem:[#allocation4 + $0x48] sm:$0xf]
      %v3320 = vld [vmem:[#allocation4 + $0x4c] sm:$0xf]
      %v3321 = vld [vmem:[#allocation4 + $0x50] sm:$0xf]
      %v3322 = vld [vmem:[#allocation4 + $0x54] sm:$0xf]
      %v3323 = vld [vmem:[#allocation4 + $0x58] sm:$0xf]
      %v3324 = vld [vmem:[#allocation4 + $0x5c] sm:$0xf]
      %v3325 = vld [vmem:[#allocation4 + $0x60] sm:$0xf]
      %v3326 = vld [vmem:[#allocation4 + $0x64] sm:$0xf]
      %v3327 = vld [vmem:[#allocation4 + $0x68] sm:$0xf]
      %v3328 = vld [vmem:[#allocation4 + $0x6c] sm:$0xf]
      %v3329 = vld [vmem:[#allocation4 + $0x70] sm:$0xf]
      %v3330 = vld [vmem:[#allocation4 + $0x74] sm:$0xf]
      %v3331 = vld [vmem:[#allocation4 + $0x78] sm:$0xf]
      %v3332 = vld [vmem:[#allocation4 + $0x7c] sm:$0xf]
      %v3333 = vld [vmem:[#allocation4 + $0x80] sm:$0xf]
      %v3334 = vld [vmem:[#allocation4 + $0x84] sm:$0xf]
      %v3335 = vld [vmem:[#allocation4 + $0x88] sm:$0xf]
      %v3336 = vld [vmem:[#allocation4 + $0x8c] sm:$0xf]
      %s3337 = scalar_lea.vmem %s1, 16
      %v3338 = vld [vmem:[%s3337] sm:$0x3]
      %v3371 = vunpack.c.l.b16 %v3305
      %v3372 = vunpack.c.l.b16 %v3306
      %v3373 = vunpack.c.l.b16 %v3307
      %v3374 = vunpack.c.l.b16 %v3308
      %v3375 = vunpack.c.l.b16 %v3309
      %v3376 = vunpack.c.l.b16 %v3310
      %v3377 = vunpack.c.l.b16 %v3311
      %v3378 = vunpack.c.l.b16 %v3312
      %v3379 = vunpack.c.l.b16 %v3313
      %v3380 = vunpack.c.l.b16 %v3314
      %v3381 = vunpack.c.l.b16 %v3315
      %v3382 = vunpack.c.l.b16 %v3316
      %v3383 = vunpack.c.l.b16 %v3317
      %v3384 = vunpack.c.l.b16 %v3318
      %v3385 = vunpack.c.l.b16 %v3319
      %v3386 = vunpack.c.l.b16 %v3320
      %v3387 = vunpack.c.l.b16 %v3321
      %v3388 = vunpack.c.l.b16 %v3322
      %v3389 = vunpack.c.l.b16 %v3323
      %v3390 = vunpack.c.l.b16 %v3324
      %v3391 = vunpack.c.l.b16 %v3325
      %v3392 = vunpack.c.l.b16 %v3326
      %v3393 = vunpack.c.l.b16 %v3327
      %v3394 = vunpack.c.l.b16 %v3328
      %v3395 = vunpack.c.l.b16 %v3329
      %v3396 = vunpack.c.l.b16 %v3330
      %v3397 = vunpack.c.l.b16 %v3331
      %v3398 = vunpack.c.l.b16 %v3332
      %v3399 = vunpack.c.l.b16 %v3333
      %v3400 = vunpack.c.l.b16 %v3334
      %v3401 = vunpack.c.l.b16 %v3335
      %v3402 = vunpack.c.l.b16 %v3336
      %v3403 = vpack.c.b16 %v3372, %v3371
      %v3404 = vpack.c.b16 %v3374, %v3373
      %v3405 = vpack.c.b16 %v3376, %v3375
      %v3406 = vpack.c.b16 %v3378, %v3377
      %v3407 = vpack.c.b16 %v3380, %v3379
      %v3408 = vpack.c.b16 %v3382, %v3381
      %v3409 = vpack.c.b16 %v3384, %v3383
      %v3410 = vpack.c.b16 %v3386, %v3385
      %v3411 = vpack.c.b16 %v3388, %v3387
      %v3412 = vpack.c.b16 %v3390, %v3389
      %v3413 = vpack.c.b16 %v3392, %v3391
      %v3414 = vpack.c.b16 %v3394, %v3393
      %v3415 = vpack.c.b16 %v3396, %v3395
      %v3416 = vpack.c.b16 %v3398, %v3397
      %v3417 = vpack.c.b16 %v3400, %v3399
      %v3418 = vpack.c.b16 %v3402, %v3401
      %v3420 = vsel %vm1225, %v3403, 0
      %v3423 = vsel %vm1225, %v3404, 0
      %v3426 = vsel %vm1225, %v3405, 0
      %v3429 = vsel %vm1225, %v3406, 0
      %v3432 = vsel %vm1225, %v3407, 0
      %v3435 = vsel %vm1225, %v3408, 0
      %v3438 = vsel %vm1225, %v3409, 0
      %v3441 = vsel %vm1225, %v3410, 0
      %v3444 = vsel %vm1225, %v3411, 0
      %v3447 = vsel %vm1225, %v3412, 0
      %v3450 = vsel %vm1225, %v3413, 0
      %v3453 = vsel %vm1225, %v3414, 0
      %v3456 = vsel %vm1225, %v3415, 0
      %v3459 = vsel %vm1225, %v3416, 0
      %v3462 = vsel %vm1225, %v3417, 0
      %v3465 = vsel %vm1225, %v3418, 0
      %v3468 = vand.u32 %v3338, %v1276
      %3470 = vmatpush.bf16.msra.mxu0 0
      %3471 = vmatpush.bf16.msra.mxu0 0
      %3472 = vmatpush.bf16.msra.mxu0 0
      %3473 = vmatpush.bf16.msra.mxu0 0
      %3474 = vmatpush.bf16.msra.mxu0 0
      %3475 = vmatpush.bf16.msra.mxu0 0
      %3476 = vmatpush.bf16.msra.mxu0 0
      %3477 = vmatpush.bf16.msra.mxu0 %v3468
      %3478 = vmatmul.bf16.gmra.mxu0 %v3420
      %v3479 = vpop.f32.mrf.mxu0
      %v3480 = vadd.f32 0.0, %v3479
      %v3481 = vpop.f32.mrf.mxu0
      %v3482 = vadd.f32 0.0, %v3481
      %3483 = vmatmul.bf16.gmra.mxu0 %v3423
      %v3484 = vpop.f32.mrf.mxu0
      %v3485 = vadd.f32 0.0, %v3484
      %v3486 = vpop.f32.mrf.mxu0
      %v3487 = vadd.f32 0.0, %v3486
      %3488 = vmatmul.bf16.gmra.mxu0 %v3426
      %v3489 = vpop.f32.mrf.mxu0
      %v3490 = vadd.f32 0.0, %v3489
      %v3491 = vpop.f32.mrf.mxu0
      %v3492 = vadd.f32 0.0, %v3491
      %3493 = vmatmul.bf16.gmra.mxu0 %v3429
      %v3494 = vpop.f32.mrf.mxu0
      %v3495 = vadd.f32 0.0, %v3494
      %v3496 = vpop.f32.mrf.mxu0
      %v3497 = vadd.f32 0.0, %v3496
      %3498 = vmatmul.bf16.gmra.mxu0 %v3432
      %v3499 = vpop.f32.mrf.mxu0
      %v3500 = vadd.f32 0.0, %v3499
      %v3501 = vpop.f32.mrf.mxu0
      %v3502 = vadd.f32 0.0, %v3501
      %3503 = vmatmul.bf16.gmra.mxu0 %v3435
      %v3504 = vpop.f32.mrf.mxu0
      %v3505 = vadd.f32 0.0, %v3504
      %v3506 = vpop.f32.mrf.mxu0
      %v3507 = vadd.f32 0.0, %v3506
      %3508 = vmatmul.bf16.gmra.mxu0 %v3438
      %v3509 = vpop.f32.mrf.mxu0
      %v3510 = vadd.f32 0.0, %v3509
      %v3511 = vpop.f32.mrf.mxu0
      %v3512 = vadd.f32 0.0, %v3511
      %3513 = vmatmul.bf16.gmra.mxu0 %v3441
      %v3514 = vpop.f32.mrf.mxu0
      %v3515 = vadd.f32 0.0, %v3514
      %v3516 = vpop.f32.mrf.mxu0
      %v3517 = vadd.f32 0.0, %v3516
      %3518 = vmatmul.bf16.gmra.mxu0 %v3444
      %v3519 = vpop.f32.mrf.mxu0
      %v3520 = vadd.f32 0.0, %v3519
      %v3521 = vpop.f32.mrf.mxu0
      %v3522 = vadd.f32 0.0, %v3521
      %3523 = vmatmul.bf16.gmra.mxu0 %v3447
      %v3524 = vpop.f32.mrf.mxu0
      %v3525 = vadd.f32 0.0, %v3524
      %v3526 = vpop.f32.mrf.mxu0
      %v3527 = vadd.f32 0.0, %v3526
      %3528 = vmatmul.bf16.gmra.mxu0 %v3450
      %v3529 = vpop.f32.mrf.mxu0
      %v3530 = vadd.f32 0.0, %v3529
      %v3531 = vpop.f32.mrf.mxu0
      %v3532 = vadd.f32 0.0, %v3531
      %3533 = vmatmul.bf16.gmra.mxu0 %v3453
      %v3534 = vpop.f32.mrf.mxu0
      %v3535 = vadd.f32 0.0, %v3534
      %v3536 = vpop.f32.mrf.mxu0
      %v3537 = vadd.f32 0.0, %v3536
      %3538 = vmatmul.bf16.gmra.mxu0 %v3456
      %v3539 = vpop.f32.mrf.mxu0
      %v3540 = vadd.f32 0.0, %v3539
      %v3541 = vpop.f32.mrf.mxu0
      %v3542 = vadd.f32 0.0, %v3541
      %3543 = vmatmul.bf16.gmra.mxu0 %v3459
      %v3544 = vpop.f32.mrf.mxu0
      %v3545 = vadd.f32 0.0, %v3544
      %v3546 = vpop.f32.mrf.mxu0
      %v3547 = vadd.f32 0.0, %v3546
      %3548 = vmatmul.bf16.gmra.mxu0 %v3462
      %v3549 = vpop.f32.mrf.mxu0
      %v3550 = vadd.f32 0.0, %v3549
      %v3551 = vpop.f32.mrf.mxu0
      %v3552 = vadd.f32 0.0, %v3551
      %3553 = vmatmul.bf16.gmra.mxu0 %v3465
      %v3554 = vpop.f32.mrf.mxu0
      %v3555 = vadd.f32 0.0, %v3554
      %v3556 = vpop.f32.mrf.mxu0
      %v3557 = vadd.f32 0.0, %v3556
      %3558 = vdwg.mxu0
      %v3559 = vadd.f32 %v3273, %v3480
      %v3560 = vadd.f32 %v3274, %v3482
      %v3561 = vadd.f32 %v3275, %v3485
      %v3562 = vadd.f32 %v3276, %v3487
      %v3563 = vadd.f32 %v3277, %v3490
      %v3564 = vadd.f32 %v3278, %v3492
      %v3565 = vadd.f32 %v3279, %v3495
      %v3566 = vadd.f32 %v3280, %v3497
      %v3567 = vadd.f32 %v3281, %v3500
      %v3568 = vadd.f32 %v3282, %v3502
      %v3569 = vadd.f32 %v3283, %v3505
      %v3570 = vadd.f32 %v3284, %v3507
      %v3571 = vadd.f32 %v3285, %v3510
      %v3572 = vadd.f32 %v3286, %v3512
      %v3573 = vadd.f32 %v3287, %v3515
      %v3574 = vadd.f32 %v3288, %v3517
      %v3575 = vadd.f32 %v3289, %v3520
      %v3576 = vadd.f32 %v3290, %v3522
      %v3577 = vadd.f32 %v3291, %v3525
      %v3578 = vadd.f32 %v3292, %v3527
      %v3579 = vadd.f32 %v3293, %v3530
      %v3580 = vadd.f32 %v3294, %v3532
      %v3581 = vadd.f32 %v3295, %v3535
      %v3582 = vadd.f32 %v3296, %v3537
      %v3583 = vadd.f32 %v3297, %v3540
      %v3584 = vadd.f32 %v3298, %v3542
      %v3585 = vadd.f32 %v3299, %v3545
      %v3586 = vadd.f32 %v3300, %v3547
      %v3587 = vadd.f32 %v3301, %v3550
      %v3588 = vadd.f32 %v3302, %v3552
      %v3589 = vadd.f32 %v3303, %v3555
      %v3590 = vadd.f32 %v3304, %v3557
      %v3591 = vld [vmem:[%s2] sm:$0x1]
      %v3593 = vperm.slane %v3591, 0
      %v3595 = vadd.f32 %v3559, %v3593
      %v3596 = vadd.f32 %v3560, %v3593
      %v3597 = vadd.f32 %v3561, %v3593
      %v3598 = vadd.f32 %v3562, %v3593
      %v3599 = vadd.f32 %v3563, %v3593
      %v3600 = vadd.f32 %v3564, %v3593
      %v3601 = vadd.f32 %v3565, %v3593
      %v3602 = vadd.f32 %v3566, %v3593
      %v3603 = vadd.f32 %v3567, %v3593
      %v3604 = vadd.f32 %v3568, %v3593
      %v3605 = vadd.f32 %v3569, %v3593
      %v3606 = vadd.f32 %v3570, %v3593
      %v3607 = vadd.f32 %v3571, %v3593
      %v3608 = vadd.f32 %v3572, %v3593
      %v3609 = vadd.f32 %v3573, %v3593
      %v3610 = vadd.f32 %v3574, %v3593
      %v3611 = vadd.f32 %v3575, %v3593
      %v3612 = vadd.f32 %v3576, %v3593
      %v3613 = vadd.f32 %v3577, %v3593
      %v3614 = vadd.f32 %v3578, %v3593
      %v3615 = vadd.f32 %v3579, %v3593
      %v3616 = vadd.f32 %v3580, %v3593
      %v3617 = vadd.f32 %v3581, %v3593
      %v3618 = vadd.f32 %v3582, %v3593
      %v3619 = vadd.f32 %v3583, %v3593
      %v3620 = vadd.f32 %v3584, %v3593
      %v3621 = vadd.f32 %v3585, %v3593
      %v3622 = vadd.f32 %v3586, %v3593
      %v3623 = vadd.f32 %v3587, %v3593
      %v3624 = vadd.f32 %v3588, %v3593
      %v3625 = vadd.f32 %v3589, %v3593
      %v3626 = vadd.f32 %v3590, %v3593
      %v3627 = vpack.c.bf16 %v3595, %v3595
      %v3628 = vpack.c.bf16 %v3596, %v3596
      %v3629 = vpack.c.bf16 %v3597, %v3597
      %v3630 = vpack.c.bf16 %v3598, %v3598
      %v3631 = vpack.c.bf16 %v3599, %v3599
      %v3632 = vpack.c.bf16 %v3600, %v3600
      %v3633 = vpack.c.bf16 %v3601, %v3601
      %v3634 = vpack.c.bf16 %v3602, %v3602
      %v3635 = vpack.c.bf16 %v3603, %v3603
      %v3636 = vpack.c.bf16 %v3604, %v3604
      %v3637 = vpack.c.bf16 %v3605, %v3605
      %v3638 = vpack.c.bf16 %v3606, %v3606
      %v3639 = vpack.c.bf16 %v3607, %v3607
      %v3640 = vpack.c.bf16 %v3608, %v3608
      %v3641 = vpack.c.bf16 %v3609, %v3609
      %v3642 = vpack.c.bf16 %v3610, %v3610
      %v3643 = vpack.c.bf16 %v3611, %v3611
      %v3644 = vpack.c.bf16 %v3612, %v3612
      %v3645 = vpack.c.bf16 %v3613, %v3613
      %v3646 = vpack.c.bf16 %v3614, %v3614
      %v3647 = vpack.c.bf16 %v3615, %v3615
      %v3648 = vpack.c.bf16 %v3616, %v3616
      %v3649 = vpack.c.bf16 %v3617, %v3617
      %v3650 = vpack.c.bf16 %v3618, %v3618
      %v3651 = vpack.c.bf16 %v3619, %v3619
      %v3652 = vpack.c.bf16 %v3620, %v3620
      %v3653 = vpack.c.bf16 %v3621, %v3621
      %v3654 = vpack.c.bf16 %v3622, %v3622
      %v3655 = vpack.c.bf16 %v3623, %v3623
      %v3656 = vpack.c.bf16 %v3624, %v3624
      %v3657 = vpack.c.bf16 %v3625, %v3625
      %v3658 = vpack.c.bf16 %v3626, %v3626
      %vm3659 = vcmask 125952
      %3660 = vst.msk [vmem:[%s197] sm:$0xf] %vm3659, %v3627
      %3661 = vst.msk [vmem:[%s197 + $0x4] sm:$0xf] %vm3659, %v3628
      %3662 = vst.msk [vmem:[%s197 + $0x8] sm:$0xf] %vm3659, %v3629
      %3663 = vst.msk [vmem:[%s197 + $0xc] sm:$0xf] %vm3659, %v3630
      %3664 = vst.msk [vmem:[%s197 + $0x10] sm:$0xf] %vm3659, %v3631
      %3665 = vst.msk [vmem:[%s197 + $0x14] sm:$0xf] %vm3659, %v3632
      %3666 = vst.msk [vmem:[%s197 + $0x18] sm:$0xf] %vm3659, %v3633
      %3667 = vst.msk [vmem:[%s197 + $0x1c] sm:$0xf] %vm3659, %v3634
      %3668 = vst.msk [vmem:[%s197 + $0x20] sm:$0xf] %vm3659, %v3635
      %3669 = vst.msk [vmem:[%s197 + $0x24] sm:$0xf] %vm3659, %v3636
      %3670 = vst.msk [vmem:[%s197 + $0x28] sm:$0xf] %vm3659, %v3637
      %3671 = vst.msk [vmem:[%s197 + $0x2c] sm:$0xf] %vm3659, %v3638
      %3672 = vst.msk [vmem:[%s197 + $0x30] sm:$0xf] %vm3659, %v3639
      %3673 = vst.msk [vmem:[%s197 + $0x34] sm:$0xf] %vm3659, %v3640
      %3674 = vst.msk [vmem:[%s197 + $0x38] sm:$0xf] %vm3659, %v3641
      %3675 = vst.msk [vmem:[%s197 + $0x3c] sm:$0xf] %vm3659, %v3642
      %3676 = vst.msk [vmem:[%s197 + $0x40] sm:$0xf] %vm3659, %v3643
      %3677 = vst.msk [vmem:[%s197 + $0x44] sm:$0xf] %vm3659, %v3644
      %3678 = vst.msk [vmem:[%s197 + $0x48] sm:$0xf] %vm3659, %v3645
      %3679 = vst.msk [vmem:[%s197 + $0x4c] sm:$0xf] %vm3659, %v3646
      %3680 = vst.msk [vmem:[%s197 + $0x50] sm:$0xf] %vm3659, %v3647
      %3681 = vst.msk [vmem:[%s197 + $0x54] sm:$0xf] %vm3659, %v3648
      %3682 = vst.msk [vmem:[%s197 + $0x58] sm:$0xf] %vm3659, %v3649
      %3683 = vst.msk [vmem:[%s197 + $0x5c] sm:$0xf] %vm3659, %v3650
      %3684 = vst.msk [vmem:[%s197 + $0x60] sm:$0xf] %vm3659, %v3651
      %3685 = vst.msk [vmem:[%s197 + $0x64] sm:$0xf] %vm3659, %v3652
      %3686 = vst.msk [vmem:[%s197 + $0x68] sm:$0xf] %vm3659, %v3653
      %3687 = vst.msk [vmem:[%s197 + $0x6c] sm:$0xf] %vm3659, %v3654
      %3688 = vst.msk [vmem:[%s197 + $0x70] sm:$0xf] %vm3659, %v3655
      %3689 = vst.msk [vmem:[%s197 + $0x74] sm:$0xf] %vm3659, %v3656
      %3690 = vst.msk [vmem:[%s197 + $0x78] sm:$0xf] %vm3659, %v3657
      %3691 = vst.msk [vmem:[%s197 + $0x7c] sm:$0xf] %vm3659, %v3658
      %p3692 = scmp.lt.s32.totalorder %s15, 1
      %s3693 = scalar_select %p3692, %s15, 1
      %s3694 = smul.addr %s3693, 32
      %s3695 = smul.addr %s3694, 4
      %s3696 = scalar_lea.vmem %s4, %s3695
      // Predicated region
      $region37: #{tpu_custom_call.1} parent=35 // pred_check
        %p3697 = pneg %p122
      $region38: #{tpu_custom_call.1} parent=35 // pred_check_branch
        %3699 = sbr.rel (%p3697) target = $region40
      $region39: #{tpu_custom_call.1} parent=35 // pred_region
        _
      $region40: #{tpu_custom_call.1} parent=35 // pred_fallthru
        _
    $region36: #{tpu_custom_call.1} parent=5 // pred_fallthru
      _
    %p3700 = scmp.le.s32.totalorder 2, %s10
    // Predicated region
    $region41: #{tpu_custom_call.1} parent=5 // pred_check
      %p3701 = pneg %p3700
    $region42: #{tpu_custom_call.1} parent=5 // pred_check_branch
      %3703 = sbr.rel (%p3701) target = $region44
    $region43: #{tpu_custom_call.1} parent=5 // pred_region
      %s3704 = ssub.s32 %s10, 2
      // Predicated region
      $region45: #{tpu_custom_call.1} parent=43 // pred_check
        %p3705 = pneg %p128
      $region46: #{tpu_custom_call.1} parent=43 // pred_check_branch
        %3707 = sbr.rel (%p3705) target = $region48
      $region47: #{tpu_custom_call.1} parent=43 // pred_region
        %p3708 = scmp.lt.s32.totalorder %s16, 1
        %s3709 = scalar_select %p3708, %s16, 1
        %s3710 = smul.addr %s3709, 32
        %s3711 = smul.addr %s3710, 4
        %s3712 = scalar_lea.vmem %s4, %s3711
      $region48: #{tpu_custom_call.1} parent=43 // pred_fallthru
        _
    $region44: #{tpu_custom_call.1} parent=5 // pred_fallthru
      _
  $region6: #{tpu_custom_call.1} parent=0 // loop_footer
    %s14 = sadd.s32 1, %s10
  $region7: #{tpu_custom_call.1} parent=0 // loop_footer_branch
    %9 = sbr.rel target = $region3
  $region8: #{tpu_custom_call.1} parent=0 // loop_exit
    _

</llo_original>
